<compile_context>
chip_gen: v5e
topology: v5e:2x2
jax: 0.10.0
libtpu: 0.0.40
codegen_flags: <defaults>
</compile_context>

<pallas_src>
import jax
import jax.numpy as jnp
from jax.experimental import pallas as pl
from jax.experimental.pallas import tpu as pltpu

LN_EPS = 1e-5
OUT_PAD = 128          # lane-dense output width; result lives in lanes [:out_channels]

# MXU operand dtype for the first Linear.  bf16 is native on the MXU (2-4x
# fewer passes than f32 on v5e/v6e/v7x) and becomes worthwhile once the batch
# is blocked large; kept f32 here so the 1e-3 reference tolerance holds at toy
# scale.  Flip to jnp.bfloat16 for production batch sizes.
MXU_DTYPE = jnp.float32


# ------------------------------- fused kernel --------------------------------

def _make_router_kernel(TB, C, P, N, num_dw, out_ch, out_pad):
    CP = C * P
    TBN = TB * N
    inv_cp = 1.0 / CP

    def kernel(x_ref, pre_g_ref, pre_b_ref,
               c1w_ref, c1b_ref, l1g_ref, l1b_ref,
               c2w_ref, c2b_ref, l2g_ref, l2b_ref,
               w1_ref, b1_ref, w2_ref, b2_ref, o_ref):
        # (TB, N, CP) -> (TB*N, CP): layout-preserving (last dim stays 128,
        # N == 8 sublanes), flattening batch x priors onto sublanes.
        x = x_ref[...].astype(jnp.float32).reshape(TBN, CP)

        def layernorm(v, g, b):
            # nn.LayerNorm([C, P]) == one lane-axis reduction per (batch,prior)
            # row.  One-pass statistics: the two lane reductions are
            # independent and can overlap on the XLU; var = E[x^2] - E[x]^2.
            s = jnp.sum(v, axis=-1, keepdims=True)
            s2 = jnp.sum(v * v, axis=-1, keepdims=True)
            m = s * inv_cp
            var = s2 * inv_cp - m * m
            return (v - m) * jax.lax.rsqrt(var + LN_EPS) * g + b

        def dwconv(v, w_ref, b_ref, blk):
            # Depthwise 3x3, padding=1, groups=num_priors.  One lane roll of
            # dy*P+dx per tap on the 2-D (TB*N, CP) view; tap-validity masks
            # are folded into the pre-broadcast (N, CP) weights at prep time,
            # so wrapped lanes land on zeroed weights and each tap is a single
            # mul+add.  Three partial accumulators shorten the serial chain.
            accs = [None, None, None]
            tap = 0
            for dy in (-1, 0, 1):
                for dx in (-1, 0, 1):
                    s = dy * P + dx
                    sh = v if s == 0 else pltpu.roll(v, (-s) % CP, axis=1)
                    # (TB, N, CP) view (free reshape) * per-prior masked weight
                    term = sh.reshape(TB, N, CP) * w_ref[blk, tap]
                    grp = tap % 3
                    accs[grp] = term if accs[grp] is None else accs[grp] + term
                    tap += 1
            y = (accs[0] + accs[1]) + accs[2] + b_ref[blk]
            return y.reshape(TBN, CP)

        score = layernorm(x, pre_g_ref[...], pre_b_ref[...])
        for blk in range(num_dw):
            y = dwconv(score, c1w_ref, c1b_ref, blk)
            y = layernorm(y, l1g_ref[blk:blk + 1], l1b_ref[blk:blk + 1])
            y = jnp.maximum(y, 0.0)
            y = dwconv(y, c2w_ref, c2b_ref, blk)
            y = layernorm(y, l2g_ref[blk:blk + 1], l2b_ref[blk:blk + 1])
            score = jnp.maximum(y + score, 0.0)

        # Fused MLP head: the DW result never leaves VMEM.  First layer
        # (K = C*P = 128, lane-contiguous, M = TB*N rows) on the MXU; when
        # out_channels == 1 the second layer is a VPU multiply + lane reduce
        # instead of a 1-lane-wide MXU matmul.
        h = jnp.dot(score.astype(MXU_DTYPE), w1_ref[...],
                    preferred_element_type=jnp.float32) + b1_ref[...]
        h = jnp.maximum(h, 0.0)
        if out_ch == 1:
            y2 = jnp.sum(h * w2_ref[...], axis=-1, keepdims=True) + b2_ref[...]
        else:
            y2 = jnp.dot(h, w2_ref[...], preferred_element_type=jnp.float32) + b2_ref[...]
        y2 = jnp.maximum(y2, 0.0)
        # Exact reciprocal (approx=False): the routing probability may feed a
        # hard threshold downstream, and the EUP op is off the critical slot.
        sig = pl.reciprocal(1.0 + jnp.exp(-y2), approx=False)
        if out_ch == 1:
            sig = jnp.broadcast_to(sig, (TBN, out_pad))       # lane-dense store
        o_ref[...] = sig.reshape(TB, N, out_pad).astype(o_ref.dtype)

    return kernel


# ------------------------------- wrappers -------------------------------------

def _full_spec(shape):
    nd = len(shape)
    return pl.BlockSpec(shape, lambda b, _nd=nd: (0,) * _nd)


def _prep_stage_params(p):
    """One-time re-layout of PyTorch-style parameters into kernel layouts.
    Hoisted out of the per-forward path (call prepare_router_params at init)."""
    C, P = p["pre_g"].shape
    CP = C * P
    num_dw, _, N, _ = p["c1w"].shape
    O = p["w2t"].shape[1]
    assert O <= OUT_PAD, "out_channels > 128 not supported by this kernel"

    # Data-independent 3x3 tap-validity masks for the flattened C*P lane axis,
    # folded into the pre-broadcast conv weights: where(mask, sh, 0)*w ==
    # sh*(mask*w), and any roll wrap-around lands on a zeroed weight.  This
    # removes all in-kernel mask construction and 9 VALU selects per conv.
    lane = jnp.arange(CP)
    row, col = lane // P, lane % P
    taps = []
    for dy in (-1, 0, 1):
        for dx in (-1, 0, 1):
            ok = (row + dy >= 0) & (row + dy < C) & (col + dx >= 0) & (col + dx < P)
            taps.append(ok)
    tap_mask = jnp.stack(taps).astype(jnp.float32)            # (9, CP)

    # TODO(synk): at production-scale C*P keep conv weights compact
    # ((num_dw, 9, N, 1)) and apply the mask in-kernel to bound VMEM/DMA.
    def conv_w(w):   # (num_dw, 9, N, 1) -> (num_dw, 9, N, CP), masks folded in
        return w * tap_mask[None, :, None, :]

    def conv_b(b):   # (num_dw, N, 1, 1) -> (num_dw, N, CP)
        return jnp.broadcast_to(b[:, :, 0], (num_dw, N, CP))

    kp = dict(
        pre_g=p["pre_g"].reshape(1, CP), pre_b=p["pre_b"].reshape(1, CP),
        c1w=conv_w(p["c1w"]), c1b=conv_b(p["c1b"]),
        l1g=p["l1g"].reshape(num_dw, CP), l1b=p["l1b"].reshape(num_dw, CP),
        c2w=conv_w(p["c2w"]), c2b=conv_b(p["c2b"]),
        l2g=p["l2g"].reshape(num_dw, CP), l2b=p["l2b"].reshape(num_dw, CP),
        w1=p["w1t"].astype(MXU_DTYPE), b1=p["b1"],
    )
    if O == 1:
        kp["w2"] = p["w2t"].T                     # (1, hidden): VPU mul+reduce path
        kp["b2"] = p["b2"]                        # (1, 1)
    else:
        kp["w2"] = jnp.pad(p["w2t"], ((0, 0), (0, OUT_PAD - O)))
        kp["b2"] = jnp.pad(p["b2"], ((0, 0), (0, OUT_PAD - O)))
    meta = (C, P, N, num_dw, O)
    return kp, meta


def prepare_router_params(params):
    """Re-layout all stages once (at init).  Returns a list of (kp, meta)."""
    return [_prep_stage_params(p) for p in params["stages"]]


def _choose_batch_tile(B):
    # Per block: TB*(4 KiB in + 4 KiB padded out), double-buffered, plus
    # ~0.4 MiB of (constant-index, fetched-once) parameters.  TB=256 -> ~4.4
    # MiB live VMEM: comfortably inside v7x's 64 MiB physical / 32 MiB scoped
    # VMEM while amortizing the ~0.35 us/step grid overhead and giving the VPU
    # hundreds of independent vregs per step.  Larger B keeps >=2 grid steps so
    # both v7x TensorCores get work under ("parallel",).
    return min(B, 256)


def _router_forward(kp, x, meta):
    C, P, N, num_dw, O = meta
    CP = C * P
    B = x.shape[0]
    TB = _choose_batch_tile(B)
    nb = pl.cdiv(B, TB)
    Bp = nb * TB

    xf = x.reshape(B, N, CP)              # == flatten(2) layout, lane-dense (C*P)
    if Bp != B:
        xf = jnp.pad(xf, ((0, Bp - B), (0, 0), (0, 0)))

    args = (xf, kp["pre_g"], kp["pre_b"], kp["c1w"], kp["c1b"], kp["l1g"], kp["l1b"],
            kp["c2w"], kp["c2b"], kp["l2g"], kp["l2b"],
            kp["w1"], kp["b1"], kp["w2"], kp["b2"])
    in_specs = [pl.BlockSpec((TB, N, CP), lambda b: (b, 0, 0))]
    in_specs += [_full_spec(a.shape) for a in args[1:]]

    out = pl.pallas_call(
        _make_router_kernel(TB, C, P, N, num_dw, O, OUT_PAD),
        out_shape=jax.ShapeDtypeStruct((Bp, N, OUT_PAD), jnp.float32),
        grid=(nb,),
        in_specs=in_specs,
        out_specs=pl.BlockSpec((TB, N, OUT_PAD), lambda b: (b, 0, 0)),
        compiler_params=pltpu.CompilerParams(
            dimension_semantics=("parallel",),
            # TB<=256 keeps live VMEM ~5 MiB; 32 MiB is an explicit safe scoped
            # limit on v5e (16 MiB default) / v6e / v7x (64 MiB physical).
            vmem_limit_bytes=32 * 1024 * 1024),
    )(*args)
    # Lane-dense (128-wide) store in the kernel; the out_channels slice and the
    # batch un-pad fuse with the consumer under jit (no eager HBM round trip).
    return out[:B, :, :O]                 # (B, N, out_channels)


_router_forward_jit = jax.jit(_router_forward, static_argnums=(2,))


def adaptive_router_forward(prepped, x, stage):
    """AdaptiveRouter4Lane.forward(xs, stage).  The training soft path
    (hard=False) and the eval path are both a plain sigmoid, so one code path."""
    kp, meta = prepped[stage]
    return _router_forward_jit(kp, x, meta)


# ------------------------- deterministic parameters --------------------------

def make_params(key, *, num_priors, features_channels, num_points,
                out_channels=1, reduction=4, stages=3, num_dw=4):
    N, C, P = num_priors, features_channels, num_points
    D = C * P
    hidden = D // reduction
    gain = 5.0 / 3.0                       # nn.init.calculate_gain('tanh')
    stage_params = []
    for _ in range(stages):
        key, *ks = jax.random.split(key, 16)

        def u(k, shape, bound):
            return jax.random.uniform(k, shape, jnp.float32, -bound, bound)

        b1lin = gain * (6.0 / (D + hidden)) ** 0.5     # xavier_uniform bounds
        b2lin = gain * (6.0 / (hidden + out_channels)) ** 0.5
        cb = 1.0 / 3.0                                 # ~ 1/sqrt(3*3*1)
        sp = dict(
            pre_g=1.0 + 0.05 * jax.random.normal(ks[0], (C, P), jnp.float32),
            pre_b=0.05 * jax.random.normal(ks[1], (C, P), jnp.float32),
            c1w=u(ks[2], (num_dw, 9, N, 1), cb),       # [ky*3+kx, prior]
            c1b=u(ks[3], (num_dw, N, 1, 1), cb),
            l1g=1.0 + 0.05 * jax.random.normal(ks[4], (num_dw, C, P), jnp.float32),
            l1b=0.05 * jax.random.normal(ks[5], (num_dw, C, P), jnp.float32),
            c2w=u(ks[6], (num_dw, 9, N, 1), cb),
            c2b=u(ks[7], (num_dw, N, 1, 1), cb),
            l2g=1.0 + 0.05 * jax.random.normal(ks[8], (num_dw, C, P), jnp.float32),
            l2b=0.05 * jax.random.normal(ks[9], (num_dw, C, P), jnp.float32),
            w1t=u(ks[10], (D, hidden), b1lin),         # Linear1 weight, transposed
            b1=u(ks[11], (1, hidden), 1.0 / D ** 0.5),
            w2t=u(ks[12], (hidden, out_channels), b2lin),
            b2=u(ks[13], (1, out_channels), 1.0 / hidden ** 0.5),
        )
        stage_params.append(sp)
    return {"stages": stage_params}


# ---------------------------- pure-JAX reference ------------------------------

def reference_forward(params, x, stage):
    p = params["stages"][stage]

    def ln(v, g, b):
        m = v.mean(axis=(-2, -1), keepdims=True)
        var = ((v - m) ** 2).mean(axis=(-2, -1), keepdims=True)
        return (v - m) / jnp.sqrt(var + LN_EPS) * g + b

    def dwconv(v, w_blk, b_blk):
        N = v.shape[1]
        w = jnp.transpose(w_blk[..., 0], (1, 0)).reshape(N, 1, 3, 3)
        y = jax.lax.conv_general_dilated(
            v, w, window_strides=(1, 1), padding=((1, 1), (1, 1)),
            dimension_numbers=("NCHW", "OIHW", "NCHW"),
            feature_group_count=N)
        return y + b_blk[None]

    score = ln(x, p["pre_g"], p["pre_b"])
    for blk in range(p["c1w"].shape[0]):
        y = dwconv(score, p["c1w"][blk], p["c1b"][blk])
        y = jax.nn.relu(ln(y, p["l1g"][blk], p["l1b"][blk]))
        y = dwconv(y, p["c2w"][blk], p["c2b"][blk])
        y = ln(y, p["l2g"][blk], p["l2b"][blk])
        score = jax.nn.relu(y + score)
    flat = score.reshape(score.shape[0], score.shape[1], -1)
    h = jax.nn.relu(flat @ p["w1t"] + p["b1"][0])
    o = jax.nn.relu(h @ p["w2t"] + p["b2"][0])
    return 1.0 / (1.0 + jnp.exp(-o))


# ----------------------------------- main -------------------------------------

if __name__ == "__main__":
    # Small shapes consistent with the module (scaled-down hyperparameters).
    # features_channels * num_points = 128 -> one fully dense lane dimension.
    B, NUM_PRIORS, FEAT_C, NUM_POINTS = 2, 8, 8, 16
    STAGES, OUT_CH, REDUCTION, NUM_DW = 2, 1, 4, 4

    key = jax.random.PRNGKey(0)
    k_par, k_x = jax.random.split(key)
    params = make_params(k_par, num_priors=NUM_PRIORS, features_channels=FEAT_C,
                         num_points=NUM_POINTS, out_channels=OUT_CH,
                         reduction=REDUCTION, stages=STAGES, num_dw=NUM_DW)
    prepped = prepare_router_params(params)       # one-time param re-layout
    x = jax.random.normal(k_x, (B, NUM_PRIORS, FEAT_C, NUM_POINTS), jnp.float32)

    stage = 1
    out = adaptive_router_forward(prepped, x, stage)
    out = jax.block_until_ready(out)

    ref = reference_forward(params, x, stage)
    assert out.shape == (B, NUM_PRIORS, OUT_CH)
    err = float(jnp.max(jnp.abs(out - ref)))
    if err > 1e-3:
        raise AssertionError(f"mismatch vs reference: max abs err {err}")
    print("KERNEL_OK")
</pallas_src>

<mosaic_0001>
module attributes {stable_mosaic.version = 11 : i64} {
  func.func @kernel(%arg0: i32, %arg1: memref<2x8x128xf32, #tpu.memory_space<vmem>>, %arg2: memref<1x128xf32, #tpu.memory_space<vmem>>, %arg3: memref<1x128xf32, #tpu.memory_space<vmem>>, %arg4: memref<4x9x8x128xf32, #tpu.memory_space<vmem>>, %arg5: memref<4x8x128xf32, #tpu.memory_space<vmem>>, %arg6: memref<4x128xf32, #tpu.memory_space<vmem>>, %arg7: memref<4x128xf32, #tpu.memory_space<vmem>>, %arg8: memref<4x9x8x128xf32, #tpu.memory_space<vmem>>, %arg9: memref<4x8x128xf32, #tpu.memory_space<vmem>>, %arg10: memref<4x128xf32, #tpu.memory_space<vmem>>, %arg11: memref<4x128xf32, #tpu.memory_space<vmem>>, %arg12: memref<128x32xf32, #tpu.memory_space<vmem>>, %arg13: memref<1x32xf32, #tpu.memory_space<vmem>>, %arg14: memref<1x32xf32, #tpu.memory_space<vmem>>, %arg15: memref<1x1xf32, #tpu.memory_space<vmem>>, %arg16: memref<2x8x128xf32, #tpu.memory_space<vmem>>) attributes {dimension_semantics = [#tpu.dimension_semantics<parallel>], iteration_bounds = array<i64: 1>, scalar_prefetch = 0 : i64, scratch_operands = 0 : i64, tpu.core_type = #tpu.core_type<tc>, window_params = [{transform_indices = @transform_0, window_bounds = array<i64: 2, 8, 128>}, {pipeline_mode = #tpu.pipeline_mode<synchronous>, transform_indices = @transform_1, window_bounds = array<i64: 1, 128>}, {pipeline_mode = #tpu.pipeline_mode<synchronous>, transform_indices = @transform_2, window_bounds = array<i64: 1, 128>}, {pipeline_mode = #tpu.pipeline_mode<synchronous>, transform_indices = @transform_3, window_bounds = array<i64: 4, 9, 8, 128>}, {pipeline_mode = #tpu.pipeline_mode<synchronous>, transform_indices = @transform_4, window_bounds = array<i64: 4, 8, 128>}, {pipeline_mode = #tpu.pipeline_mode<synchronous>, transform_indices = @transform_5, window_bounds = array<i64: 4, 128>}, {pipeline_mode = #tpu.pipeline_mode<synchronous>, transform_indices = @transform_6, window_bounds = array<i64: 4, 128>}, {pipeline_mode = #tpu.pipeline_mode<synchronous>, transform_indices = @transform_7, window_bounds = array<i64: 4, 9, 8, 128>}, {pipeline_mode = #tpu.pipeline_mode<synchronous>, transform_indices = @transform_8, window_bounds = array<i64: 4, 8, 128>}, {pipeline_mode = #tpu.pipeline_mode<synchronous>, transform_indices = @transform_9, window_bounds = array<i64: 4, 128>}, {pipeline_mode = #tpu.pipeline_mode<synchronous>, transform_indices = @transform_10, window_bounds = array<i64: 4, 128>}, {pipeline_mode = #tpu.pipeline_mode<synchronous>, transform_indices = @transform_11, window_bounds = array<i64: 128, 32>}, {pipeline_mode = #tpu.pipeline_mode<synchronous>, transform_indices = @transform_12, window_bounds = array<i64: 1, 32>}, {pipeline_mode = #tpu.pipeline_mode<synchronous>, transform_indices = @transform_13, window_bounds = array<i64: 1, 32>}, {pipeline_mode = #tpu.pipeline_mode<synchronous>, transform_indices = @transform_14, window_bounds = array<i64: 1, 1>}, {transform_indices = @transform_15, window_bounds = array<i64: 2, 8, 128>}]} {
    %c0 = arith.constant 0 : index
    %c0_0 = arith.constant 0 : index
    %c0_1 = arith.constant 0 : index
    %0 = vector.load %arg1[%c0, %c0_0, %c0_1] : memref<2x8x128xf32, #tpu.memory_space<vmem>>, vector<2x8x128xf32>
    %1 = vector.shape_cast %0 : vector<2x8x128xf32> to vector<16x128xf32>
    %c0_2 = arith.constant 0 : index
    %c0_3 = arith.constant 0 : index
    %2 = vector.load %arg2[%c0_2, %c0_3] : memref<1x128xf32, #tpu.memory_space<vmem>>, vector<1x128xf32>
    %c0_4 = arith.constant 0 : index
    %c0_5 = arith.constant 0 : index
    %3 = vector.load %arg3[%c0_4, %c0_5] : memref<1x128xf32, #tpu.memory_space<vmem>>, vector<1x128xf32>
    %cst = arith.constant dense<0.000000e+00> : vector<16xf32>
    %4 = vector.multi_reduction <add>, %1, %cst [1] : vector<16x128xf32> to vector<16xf32>
    %5 = vector.shape_cast %4 : vector<16xf32> to vector<16x1xf32>
    %6 = arith.mulf %1, %1 : vector<16x128xf32>
    %cst_6 = arith.constant dense<0.000000e+00> : vector<16xf32>
    %7 = vector.multi_reduction <add>, %6, %cst_6 [1] : vector<16x128xf32> to vector<16xf32>
    %8 = vector.shape_cast %7 : vector<16xf32> to vector<16x1xf32>
    %cst_7 = arith.constant 7.812500e-03 : f32
    %9 = vector.broadcast %cst_7 : f32 to vector<16x1xf32>
    %10 = arith.mulf %5, %9 : vector<16x1xf32>
    %cst_8 = arith.constant 7.812500e-03 : f32
    %11 = vector.broadcast %cst_8 : f32 to vector<16x1xf32>
    %12 = arith.mulf %8, %11 : vector<16x1xf32>
    %13 = arith.mulf %10, %10 : vector<16x1xf32>
    %14 = arith.subf %12, %13 : vector<16x1xf32>
    %15 = vector.broadcast %10 : vector<16x1xf32> to vector<16x128xf32>
    %16 = arith.subf %1, %15 : vector<16x128xf32>
    %cst_9 = arith.constant 9.99999974E-6 : f32
    %17 = vector.broadcast %cst_9 : f32 to vector<16x1xf32>
    %18 = arith.addf %14, %17 : vector<16x1xf32>
    %19 = math.rsqrt %18 : vector<16x1xf32>
    %20 = vector.broadcast %19 : vector<16x1xf32> to vector<16x128xf32>
    %21 = arith.mulf %16, %20 : vector<16x128xf32>
    %22 = vector.broadcast %2 : vector<1x128xf32> to vector<16x128xf32>
    %23 = arith.mulf %21, %22 : vector<16x128xf32>
    %24 = vector.broadcast %3 : vector<1x128xf32> to vector<16x128xf32>
    %25 = arith.addf %23, %24 : vector<16x128xf32>
    %c17_i32 = arith.constant 17 : i32
    %26 = tpu.dynamic_rotate %25 by %c17_i32 dim 1 : vector<16x128xf32>, i32 -> vector<16x128xf32>
    %27 = vector.shape_cast %26 : vector<16x128xf32> to vector<2x8x128xf32>
    %c0_10 = arith.constant 0 : index
    %c0_11 = arith.constant 0 : index
    %c0_12 = arith.constant 0 : index
    %c0_13 = arith.constant 0 : index
    %28 = vector.load %arg4[%c0_10, %c0_11, %c0_12, %c0_13] : memref<4x9x8x128xf32, #tpu.memory_space<vmem>>, vector<1x1x8x128xf32>
    %29 = vector.shape_cast %28 : vector<1x1x8x128xf32> to vector<8x128xf32>
    %30 = vector.shape_cast %29 : vector<8x128xf32> to vector<1x8x128xf32>
    %31 = vector.broadcast %30 : vector<1x8x128xf32> to vector<2x8x128xf32>
    %32 = arith.mulf %27, %31 : vector<2x8x128xf32>
    %c16_i32 = arith.constant 16 : i32
    %33 = tpu.dynamic_rotate %25 by %c16_i32 dim 1 : vector<16x128xf32>, i32 -> vector<16x128xf32>
    %34 = vector.shape_cast %33 : vector<16x128xf32> to vector<2x8x128xf32>
    %c0_14 = arith.constant 0 : index
    %c1 = arith.constant 1 : index
    %c0_15 = arith.constant 0 : index
    %c0_16 = arith.constant 0 : index
    %35 = vector.load %arg4[%c0_14, %c1, %c0_15, %c0_16] : memref<4x9x8x128xf32, #tpu.memory_space<vmem>>, vector<1x1x8x128xf32>
    %36 = vector.shape_cast %35 : vector<1x1x8x128xf32> to vector<8x128xf32>
    %37 = vector.shape_cast %36 : vector<8x128xf32> to vector<1x8x128xf32>
    %38 = vector.broadcast %37 : vector<1x8x128xf32> to vector<2x8x128xf32>
    %39 = arith.mulf %34, %38 : vector<2x8x128xf32>
    %c15_i32 = arith.constant 15 : i32
    %40 = tpu.dynamic_rotate %25 by %c15_i32 dim 1 : vector<16x128xf32>, i32 -> vector<16x128xf32>
    %41 = vector.shape_cast %40 : vector<16x128xf32> to vector<2x8x128xf32>
    %c0_17 = arith.constant 0 : index
    %c2 = arith.constant 2 : index
    %c0_18 = arith.constant 0 : index
    %c0_19 = arith.constant 0 : index
    %42 = vector.load %arg4[%c0_17, %c2, %c0_18, %c0_19] : memref<4x9x8x128xf32, #tpu.memory_space<vmem>>, vector<1x1x8x128xf32>
    %43 = vector.shape_cast %42 : vector<1x1x8x128xf32> to vector<8x128xf32>
    %44 = vector.shape_cast %43 : vector<8x128xf32> to vector<1x8x128xf32>
    %45 = vector.broadcast %44 : vector<1x8x128xf32> to vector<2x8x128xf32>
    %46 = arith.mulf %41, %45 : vector<2x8x128xf32>
    %c1_i32 = arith.constant 1 : i32
    %47 = tpu.dynamic_rotate %25 by %c1_i32 dim 1 : vector<16x128xf32>, i32 -> vector<16x128xf32>
    %48 = vector.shape_cast %47 : vector<16x128xf32> to vector<2x8x128xf32>
    %c0_20 = arith.constant 0 : index
    %c3 = arith.constant 3 : index
    %c0_21 = arith.constant 0 : index
    %c0_22 = arith.constant 0 : index
    %49 = vector.load %arg4[%c0_20, %c3, %c0_21, %c0_22] : memref<4x9x8x128xf32, #tpu.memory_space<vmem>>, vector<1x1x8x128xf32>
    %50 = vector.shape_cast %49 : vector<1x1x8x128xf32> to vector<8x128xf32>
    %51 = vector.shape_cast %50 : vector<8x128xf32> to vector<1x8x128xf32>
    %52 = vector.broadcast %51 : vector<1x8x128xf32> to vector<2x8x128xf32>
    %53 = arith.mulf %48, %52 : vector<2x8x128xf32>
    %54 = arith.addf %32, %53 : vector<2x8x128xf32>
    %55 = vector.shape_cast %25 : vector<16x128xf32> to vector<2x8x128xf32>
    %c0_23 = arith.constant 0 : index
    %c4 = arith.constant 4 : index
    %c0_24 = arith.constant 0 : index
    %c0_25 = arith.constant 0 : index
    %56 = vector.load %arg4[%c0_23, %c4, %c0_24, %c0_25] : memref<4x9x8x128xf32, #tpu.memory_space<vmem>>, vector<1x1x8x128xf32>
    %57 = vector.shape_cast %56 : vector<1x1x8x128xf32> to vector<8x128xf32>
    %58 = vector.shape_cast %57 : vector<8x128xf32> to vector<1x8x128xf32>
    %59 = vector.broadcast %58 : vector<1x8x128xf32> to vector<2x8x128xf32>
    %60 = arith.mulf %55, %59 : vector<2x8x128xf32>
    %61 = arith.addf %39, %60 : vector<2x8x128xf32>
    %c127_i32 = arith.constant 127 : i32
    %62 = tpu.dynamic_rotate %25 by %c127_i32 dim 1 : vector<16x128xf32>, i32 -> vector<16x128xf32>
    %63 = vector.shape_cast %62 : vector<16x128xf32> to vector<2x8x128xf32>
    %c0_26 = arith.constant 0 : index
    %c5 = arith.constant 5 : index
    %c0_27 = arith.constant 0 : index
    %c0_28 = arith.constant 0 : index
    %64 = vector.load %arg4[%c0_26, %c5, %c0_27, %c0_28] : memref<4x9x8x128xf32, #tpu.memory_space<vmem>>, vector<1x1x8x128xf32>
    %65 = vector.shape_cast %64 : vector<1x1x8x128xf32> to vector<8x128xf32>
    %66 = vector.shape_cast %65 : vector<8x128xf32> to vector<1x8x128xf32>
    %67 = vector.broadcast %66 : vector<1x8x128xf32> to vector<2x8x128xf32>
    %68 = arith.mulf %63, %67 : vector<2x8x128xf32>
    %69 = arith.addf %46, %68 : vector<2x8x128xf32>
    %c113_i32 = arith.constant 113 : i32
    %70 = tpu.dynamic_rotate %25 by %c113_i32 dim 1 : vector<16x128xf32>, i32 -> vector<16x128xf32>
    %71 = vector.shape_cast %70 : vector<16x128xf32> to vector<2x8x128xf32>
    %c0_29 = arith.constant 0 : index
    %c6 = arith.constant 6 : index
    %c0_30 = arith.constant 0 : index
    %c0_31 = arith.constant 0 : index
    %72 = vector.load %arg4[%c0_29, %c6, %c0_30, %c0_31] : memref<4x9x8x128xf32, #tpu.memory_space<vmem>>, vector<1x1x8x128xf32>
    %73 = vector.shape_cast %72 : vector<1x1x8x128xf32> to vector<8x128xf32>
    %74 = vector.shape_cast %73 : vector<8x128xf32> to vector<1x8x128xf32>
    %75 = vector.broadcast %74 : vector<1x8x128xf32> to vector<2x8x128xf32>
    %76 = arith.mulf %71, %75 : vector<2x8x128xf32>
    %77 = arith.addf %54, %76 : vector<2x8x128xf32>
    %c112_i32 = arith.constant 112 : i32
    %78 = tpu.dynamic_rotate %25 by %c112_i32 dim 1 : vector<16x128xf32>, i32 -> vector<16x128xf32>
    %79 = vector.shape_cast %78 : vector<16x128xf32> to vector<2x8x128xf32>
    %c0_32 = arith.constant 0 : index
    %c7 = arith.constant 7 : index
    %c0_33 = arith.constant 0 : index
    %c0_34 = arith.constant 0 : index
    %80 = vector.load %arg4[%c0_32, %c7, %c0_33, %c0_34] : memref<4x9x8x128xf32, #tpu.memory_space<vmem>>, vector<1x1x8x128xf32>
    %81 = vector.shape_cast %80 : vector<1x1x8x128xf32> to vector<8x128xf32>
    %82 = vector.shape_cast %81 : vector<8x128xf32> to vector<1x8x128xf32>
    %83 = vector.broadcast %82 : vector<1x8x128xf32> to vector<2x8x128xf32>
    %84 = arith.mulf %79, %83 : vector<2x8x128xf32>
    %85 = arith.addf %61, %84 : vector<2x8x128xf32>
    %c111_i32 = arith.constant 111 : i32
    %86 = tpu.dynamic_rotate %25 by %c111_i32 dim 1 : vector<16x128xf32>, i32 -> vector<16x128xf32>
    %87 = vector.shape_cast %86 : vector<16x128xf32> to vector<2x8x128xf32>
    %c0_35 = arith.constant 0 : index
    %c8 = arith.constant 8 : index
    %c0_36 = arith.constant 0 : index
    %c0_37 = arith.constant 0 : index
    %88 = vector.load %arg4[%c0_35, %c8, %c0_36, %c0_37] : memref<4x9x8x128xf32, #tpu.memory_space<vmem>>, vector<1x1x8x128xf32>
    %89 = vector.shape_cast %88 : vector<1x1x8x128xf32> to vector<8x128xf32>
    %90 = vector.shape_cast %89 : vector<8x128xf32> to vector<1x8x128xf32>
    %91 = vector.broadcast %90 : vector<1x8x128xf32> to vector<2x8x128xf32>
    %92 = arith.mulf %87, %91 : vector<2x8x128xf32>
    %93 = arith.addf %69, %92 : vector<2x8x128xf32>
    %94 = arith.addf %77, %85 : vector<2x8x128xf32>
    %95 = arith.addf %94, %93 : vector<2x8x128xf32>
    %c0_38 = arith.constant 0 : index
    %c0_39 = arith.constant 0 : index
    %c0_40 = arith.constant 0 : index
    %96 = vector.load %arg5[%c0_38, %c0_39, %c0_40] : memref<4x8x128xf32, #tpu.memory_space<vmem>>, vector<1x8x128xf32>
    %97 = vector.shape_cast %96 : vector<1x8x128xf32> to vector<8x128xf32>
    %98 = vector.shape_cast %97 : vector<8x128xf32> to vector<1x8x128xf32>
    %99 = vector.broadcast %98 : vector<1x8x128xf32> to vector<2x8x128xf32>
    %100 = arith.addf %95, %99 : vector<2x8x128xf32>
    %101 = vector.shape_cast %100 : vector<2x8x128xf32> to vector<16x128xf32>
    %c0_41 = arith.constant 0 : index
    %c0_42 = arith.constant 0 : index
    %102 = vector.load %arg6[%c0_41, %c0_42] : memref<4x128xf32, #tpu.memory_space<vmem>>, vector<1x128xf32>
    %c0_43 = arith.constant 0 : index
    %c0_44 = arith.constant 0 : index
    %103 = vector.load %arg7[%c0_43, %c0_44] : memref<4x128xf32, #tpu.memory_space<vmem>>, vector<1x128xf32>
    %cst_45 = arith.constant dense<0.000000e+00> : vector<16xf32>
    %104 = vector.multi_reduction <add>, %101, %cst_45 [1] : vector<16x128xf32> to vector<16xf32>
    %105 = vector.shape_cast %104 : vector<16xf32> to vector<16x1xf32>
    %106 = arith.mulf %101, %101 : vector<16x128xf32>
    %cst_46 = arith.constant dense<0.000000e+00> : vector<16xf32>
    %107 = vector.multi_reduction <add>, %106, %cst_46 [1] : vector<16x128xf32> to vector<16xf32>
    %108 = vector.shape_cast %107 : vector<16xf32> to vector<16x1xf32>
    %cst_47 = arith.constant 7.812500e-03 : f32
    %109 = vector.broadcast %cst_47 : f32 to vector<16x1xf32>
    %110 = arith.mulf %105, %109 : vector<16x1xf32>
    %cst_48 = arith.constant 7.812500e-03 : f32
    %111 = vector.broadcast %cst_48 : f32 to vector<16x1xf32>
    %112 = arith.mulf %108, %111 : vector<16x1xf32>
    %113 = arith.mulf %110, %110 : vector<16x1xf32>
    %114 = arith.subf %112, %113 : vector<16x1xf32>
    %115 = vector.broadcast %110 : vector<16x1xf32> to vector<16x128xf32>
    %116 = arith.subf %101, %115 : vector<16x128xf32>
    %cst_49 = arith.constant 9.99999974E-6 : f32
    %117 = vector.broadcast %cst_49 : f32 to vector<16x1xf32>
    %118 = arith.addf %114, %117 : vector<16x1xf32>
    %119 = math.rsqrt %118 : vector<16x1xf32>
    %120 = vector.broadcast %119 : vector<16x1xf32> to vector<16x128xf32>
    %121 = arith.mulf %116, %120 : vector<16x128xf32>
    %122 = vector.broadcast %102 : vector<1x128xf32> to vector<16x128xf32>
    %123 = arith.mulf %121, %122 : vector<16x128xf32>
    %124 = vector.broadcast %103 : vector<1x128xf32> to vector<16x128xf32>
    %125 = arith.addf %123, %124 : vector<16x128xf32>
    %cst_50 = arith.constant 0.000000e+00 : f32
    %126 = vector.broadcast %cst_50 : f32 to vector<16x128xf32>
    %127 = arith.maximumf %125, %126 : vector<16x128xf32>
    %c17_i32_51 = arith.constant 17 : i32
    %128 = tpu.dynamic_rotate %127 by %c17_i32_51 dim 1 : vector<16x128xf32>, i32 -> vector<16x128xf32>
    %129 = vector.shape_cast %128 : vector<16x128xf32> to vector<2x8x128xf32>
    %c0_52 = arith.constant 0 : index
    %c0_53 = arith.constant 0 : index
    %c0_54 = arith.constant 0 : index
    %c0_55 = arith.constant 0 : index
    %130 = vector.load %arg8[%c0_52, %c0_53, %c0_54, %c0_55] : memref<4x9x8x128xf32, #tpu.memory_space<vmem>>, vector<1x1x8x128xf32>
    %131 = vector.shape_cast %130 : vector<1x1x8x128xf32> to vector<8x128xf32>
    %132 = vector.shape_cast %131 : vector<8x128xf32> to vector<1x8x128xf32>
    %133 = vector.broadcast %132 : vector<1x8x128xf32> to vector<2x8x128xf32>
    %134 = arith.mulf %129, %133 : vector<2x8x128xf32>
    %c16_i32_56 = arith.constant 16 : i32
    %135 = tpu.dynamic_rotate %127 by %c16_i32_56 dim 1 : vector<16x128xf32>, i32 -> vector<16x128xf32>
    %136 = vector.shape_cast %135 : vector<16x128xf32> to vector<2x8x128xf32>
    %c0_57 = arith.constant 0 : index
    %c1_58 = arith.constant 1 : index
    %c0_59 = arith.constant 0 : index
    %c0_60 = arith.constant 0 : index
    %137 = vector.load %arg8[%c0_57, %c1_58, %c0_59, %c0_60] : memref<4x9x8x128xf32, #tpu.memory_space<vmem>>, vector<1x1x8x128xf32>
    %138 = vector.shape_cast %137 : vector<1x1x8x128xf32> to vector<8x128xf32>
    %139 = vector.shape_cast %138 : vector<8x128xf32> to vector<1x8x128xf32>
    %140 = vector.broadcast %139 : vector<1x8x128xf32> to vector<2x8x128xf32>
    %141 = arith.mulf %136, %140 : vector<2x8x128xf32>
    %c15_i32_61 = arith.constant 15 : i32
    %142 = tpu.dynamic_rotate %127 by %c15_i32_61 dim 1 : vector<16x128xf32>, i32 -> vector<16x128xf32>
    %143 = vector.shape_cast %142 : vector<16x128xf32> to vector<2x8x128xf32>
    %c0_62 = arith.constant 0 : index
    %c2_63 = arith.constant 2 : index
    %c0_64 = arith.constant 0 : index
    %c0_65 = arith.constant 0 : index
    %144 = vector.load %arg8[%c0_62, %c2_63, %c0_64, %c0_65] : memref<4x9x8x128xf32, #tpu.memory_space<vmem>>, vector<1x1x8x128xf32>
    %145 = vector.shape_cast %144 : vector<1x1x8x128xf32> to vector<8x128xf32>
    %146 = vector.shape_cast %145 : vector<8x128xf32> to vector<1x8x128xf32>
    %147 = vector.broadcast %146 : vector<1x8x128xf32> to vector<2x8x128xf32>
    %148 = arith.mulf %143, %147 : vector<2x8x128xf32>
    %c1_i32_66 = arith.constant 1 : i32
    %149 = tpu.dynamic_rotate %127 by %c1_i32_66 dim 1 : vector<16x128xf32>, i32 -> vector<16x128xf32>
    %150 = vector.shape_cast %149 : vector<16x128xf32> to vector<2x8x128xf32>
    %c0_67 = arith.constant 0 : index
    %c3_68 = arith.constant 3 : index
    %c0_69 = arith.constant 0 : index
    %c0_70 = arith.constant 0 : index
    %151 = vector.load %arg8[%c0_67, %c3_68, %c0_69, %c0_70] : memref<4x9x8x128xf32, #tpu.memory_space<vmem>>, vector<1x1x8x128xf32>
    %152 = vector.shape_cast %151 : vector<1x1x8x128xf32> to vector<8x128xf32>
    %153 = vector.shape_cast %152 : vector<8x128xf32> to vector<1x8x128xf32>
    %154 = vector.broadcast %153 : vector<1x8x128xf32> to vector<2x8x128xf32>
    %155 = arith.mulf %150, %154 : vector<2x8x128xf32>
    %156 = arith.addf %134, %155 : vector<2x8x128xf32>
    %157 = vector.shape_cast %127 : vector<16x128xf32> to vector<2x8x128xf32>
    %c0_71 = arith.constant 0 : index
    %c4_72 = arith.constant 4 : index
    %c0_73 = arith.constant 0 : index
    %c0_74 = arith.constant 0 : index
    %158 = vector.load %arg8[%c0_71, %c4_72, %c0_73, %c0_74] : memref<4x9x8x128xf32, #tpu.memory_space<vmem>>, vector<1x1x8x128xf32>
    %159 = vector.shape_cast %158 : vector<1x1x8x128xf32> to vector<8x128xf32>
    %160 = vector.shape_cast %159 : vector<8x128xf32> to vector<1x8x128xf32>
    %161 = vector.broadcast %160 : vector<1x8x128xf32> to vector<2x8x128xf32>
    %162 = arith.mulf %157, %161 : vector<2x8x128xf32>
    %163 = arith.addf %141, %162 : vector<2x8x128xf32>
    %c127_i32_75 = arith.constant 127 : i32
    %164 = tpu.dynamic_rotate %127 by %c127_i32_75 dim 1 : vector<16x128xf32>, i32 -> vector<16x128xf32>
    %165 = vector.shape_cast %164 : vector<16x128xf32> to vector<2x8x128xf32>
    %c0_76 = arith.constant 0 : index
    %c5_77 = arith.constant 5 : index
    %c0_78 = arith.constant 0 : index
    %c0_79 = arith.constant 0 : index
    %166 = vector.load %arg8[%c0_76, %c5_77, %c0_78, %c0_79] : memref<4x9x8x128xf32, #tpu.memory_space<vmem>>, vector<1x1x8x128xf32>
    %167 = vector.shape_cast %166 : vector<1x1x8x128xf32> to vector<8x128xf32>
    %168 = vector.shape_cast %167 : vector<8x128xf32> to vector<1x8x128xf32>
    %169 = vector.broadcast %168 : vector<1x8x128xf32> to vector<2x8x128xf32>
    %170 = arith.mulf %165, %169 : vector<2x8x128xf32>
    %171 = arith.addf %148, %170 : vector<2x8x128xf32>
    %c113_i32_80 = arith.constant 113 : i32
    %172 = tpu.dynamic_rotate %127 by %c113_i32_80 dim 1 : vector<16x128xf32>, i32 -> vector<16x128xf32>
    %173 = vector.shape_cast %172 : vector<16x128xf32> to vector<2x8x128xf32>
    %c0_81 = arith.constant 0 : index
    %c6_82 = arith.constant 6 : index
    %c0_83 = arith.constant 0 : index
    %c0_84 = arith.constant 0 : index
    %174 = vector.load %arg8[%c0_81, %c6_82, %c0_83, %c0_84] : memref<4x9x8x128xf32, #tpu.memory_space<vmem>>, vector<1x1x8x128xf32>
    %175 = vector.shape_cast %174 : vector<1x1x8x128xf32> to vector<8x128xf32>
    %176 = vector.shape_cast %175 : vector<8x128xf32> to vector<1x8x128xf32>
    %177 = vector.broadcast %176 : vector<1x8x128xf32> to vector<2x8x128xf32>
    %178 = arith.mulf %173, %177 : vector<2x8x128xf32>
    %179 = arith.addf %156, %178 : vector<2x8x128xf32>
    %c112_i32_85 = arith.constant 112 : i32
    %180 = tpu.dynamic_rotate %127 by %c112_i32_85 dim 1 : vector<16x128xf32>, i32 -> vector<16x128xf32>
    %181 = vector.shape_cast %180 : vector<16x128xf32> to vector<2x8x128xf32>
    %c0_86 = arith.constant 0 : index
    %c7_87 = arith.constant 7 : index
    %c0_88 = arith.constant 0 : index
    %c0_89 = arith.constant 0 : index
    %182 = vector.load %arg8[%c0_86, %c7_87, %c0_88, %c0_89] : memref<4x9x8x128xf32, #tpu.memory_space<vmem>>, vector<1x1x8x128xf32>
    %183 = vector.shape_cast %182 : vector<1x1x8x128xf32> to vector<8x128xf32>
    %184 = vector.shape_cast %183 : vector<8x128xf32> to vector<1x8x128xf32>
    %185 = vector.broadcast %184 : vector<1x8x128xf32> to vector<2x8x128xf32>
    %186 = arith.mulf %181, %185 : vector<2x8x128xf32>
    %187 = arith.addf %163, %186 : vector<2x8x128xf32>
    %c111_i32_90 = arith.constant 111 : i32
    %188 = tpu.dynamic_rotate %127 by %c111_i32_90 dim 1 : vector<16x128xf32>, i32 -> vector<16x128xf32>
    %189 = vector.shape_cast %188 : vector<16x128xf32> to vector<2x8x128xf32>
    %c0_91 = arith.constant 0 : index
    %c8_92 = arith.constant 8 : index
    %c0_93 = arith.constant 0 : index
    %c0_94 = arith.constant 0 : index
    %190 = vector.load %arg8[%c0_91, %c8_92, %c0_93, %c0_94] : memref<4x9x8x128xf32, #tpu.memory_space<vmem>>, vector<1x1x8x128xf32>
    %191 = vector.shape_cast %190 : vector<1x1x8x128xf32> to vector<8x128xf32>
    %192 = vector.shape_cast %191 : vector<8x128xf32> to vector<1x8x128xf32>
    %193 = vector.broadcast %192 : vector<1x8x128xf32> to vector<2x8x128xf32>
    %194 = arith.mulf %189, %193 : vector<2x8x128xf32>
    %195 = arith.addf %171, %194 : vector<2x8x128xf32>
    %196 = arith.addf %179, %187 : vector<2x8x128xf32>
    %197 = arith.addf %196, %195 : vector<2x8x128xf32>
    %c0_95 = arith.constant 0 : index
    %c0_96 = arith.constant 0 : index
    %c0_97 = arith.constant 0 : index
    %198 = vector.load %arg9[%c0_95, %c0_96, %c0_97] : memref<4x8x128xf32, #tpu.memory_space<vmem>>, vector<1x8x128xf32>
    %199 = vector.shape_cast %198 : vector<1x8x128xf32> to vector<8x128xf32>
    %200 = vector.shape_cast %199 : vector<8x128xf32> to vector<1x8x128xf32>
    %201 = vector.broadcast %200 : vector<1x8x128xf32> to vector<2x8x128xf32>
    %202 = arith.addf %197, %201 : vector<2x8x128xf32>
    %203 = vector.shape_cast %202 : vector<2x8x128xf32> to vector<16x128xf32>
    %c0_98 = arith.constant 0 : index
    %c0_99 = arith.constant 0 : index
    %204 = vector.load %arg10[%c0_98, %c0_99] : memref<4x128xf32, #tpu.memory_space<vmem>>, vector<1x128xf32>
    %c0_100 = arith.constant 0 : index
    %c0_101 = arith.constant 0 : index
    %205 = vector.load %arg11[%c0_100, %c0_101] : memref<4x128xf32, #tpu.memory_space<vmem>>, vector<1x128xf32>
    %cst_102 = arith.constant dense<0.000000e+00> : vector<16xf32>
    %206 = vector.multi_reduction <add>, %203, %cst_102 [1] : vector<16x128xf32> to vector<16xf32>
    %207 = vector.shape_cast %206 : vector<16xf32> to vector<16x1xf32>
    %208 = arith.mulf %203, %203 : vector<16x128xf32>
    %cst_103 = arith.constant dense<0.000000e+00> : vector<16xf32>
    %209 = vector.multi_reduction <add>, %208, %cst_103 [1] : vector<16x128xf32> to vector<16xf32>
    %210 = vector.shape_cast %209 : vector<16xf32> to vector<16x1xf32>
    %cst_104 = arith.constant 7.812500e-03 : f32
    %211 = vector.broadcast %cst_104 : f32 to vector<16x1xf32>
    %212 = arith.mulf %207, %211 : vector<16x1xf32>
    %cst_105 = arith.constant 7.812500e-03 : f32
    %213 = vector.broadcast %cst_105 : f32 to vector<16x1xf32>
    %214 = arith.mulf %210, %213 : vector<16x1xf32>
    %215 = arith.mulf %212, %212 : vector<16x1xf32>
    %216 = arith.subf %214, %215 : vector<16x1xf32>
    %217 = vector.broadcast %212 : vector<16x1xf32> to vector<16x128xf32>
    %218 = arith.subf %203, %217 : vector<16x128xf32>
    %cst_106 = arith.constant 9.99999974E-6 : f32
    %219 = vector.broadcast %cst_106 : f32 to vector<16x1xf32>
    %220 = arith.addf %216, %219 : vector<16x1xf32>
    %221 = math.rsqrt %220 : vector<16x1xf32>
    %222 = vector.broadcast %221 : vector<16x1xf32> to vector<16x128xf32>
    %223 = arith.mulf %218, %222 : vector<16x128xf32>
    %224 = vector.broadcast %204 : vector<1x128xf32> to vector<16x128xf32>
    %225 = arith.mulf %223, %224 : vector<16x128xf32>
    %226 = vector.broadcast %205 : vector<1x128xf32> to vector<16x128xf32>
    %227 = arith.addf %225, %226 : vector<16x128xf32>
    %228 = arith.addf %227, %25 : vector<16x128xf32>
    %cst_107 = arith.constant 0.000000e+00 : f32
    %229 = vector.broadcast %cst_107 : f32 to vector<16x128xf32>
    %230 = arith.maximumf %228, %229 : vector<16x128xf32>
    %c17_i32_108 = arith.constant 17 : i32
    %231 = tpu.dynamic_rotate %230 by %c17_i32_108 dim 1 : vector<16x128xf32>, i32 -> vector<16x128xf32>
    %232 = vector.shape_cast %231 : vector<16x128xf32> to vector<2x8x128xf32>
    %c1_109 = arith.constant 1 : index
    %c0_110 = arith.constant 0 : index
    %c0_111 = arith.constant 0 : index
    %c0_112 = arith.constant 0 : index
    %233 = vector.load %arg4[%c1_109, %c0_110, %c0_111, %c0_112] : memref<4x9x8x128xf32, #tpu.memory_space<vmem>>, vector<1x1x8x128xf32>
    %234 = vector.shape_cast %233 : vector<1x1x8x128xf32> to vector<8x128xf32>
    %235 = vector.shape_cast %234 : vector<8x128xf32> to vector<1x8x128xf32>
    %236 = vector.broadcast %235 : vector<1x8x128xf32> to vector<2x8x128xf32>
    %237 = arith.mulf %232, %236 : vector<2x8x128xf32>
    %c16_i32_113 = arith.constant 16 : i32
    %238 = tpu.dynamic_rotate %230 by %c16_i32_113 dim 1 : vector<16x128xf32>, i32 -> vector<16x128xf32>
    %239 = vector.shape_cast %238 : vector<16x128xf32> to vector<2x8x128xf32>
    %c1_114 = arith.constant 1 : index
    %c1_115 = arith.constant 1 : index
    %c0_116 = arith.constant 0 : index
    %c0_117 = arith.constant 0 : index
    %240 = vector.load %arg4[%c1_114, %c1_115, %c0_116, %c0_117] : memref<4x9x8x128xf32, #tpu.memory_space<vmem>>, vector<1x1x8x128xf32>
    %241 = vector.shape_cast %240 : vector<1x1x8x128xf32> to vector<8x128xf32>
    %242 = vector.shape_cast %241 : vector<8x128xf32> to vector<1x8x128xf32>
    %243 = vector.broadcast %242 : vector<1x8x128xf32> to vector<2x8x128xf32>
    %244 = arith.mulf %239, %243 : vector<2x8x128xf32>
    %c15_i32_118 = arith.constant 15 : i32
    %245 = tpu.dynamic_rotate %230 by %c15_i32_118 dim 1 : vector<16x128xf32>, i32 -> vector<16x128xf32>
    %246 = vector.shape_cast %245 : vector<16x128xf32> to vector<2x8x128xf32>
    %c1_119 = arith.constant 1 : index
    %c2_120 = arith.constant 2 : index
    %c0_121 = arith.constant 0 : index
    %c0_122 = arith.constant 0 : index
    %247 = vector.load %arg4[%c1_119, %c2_120, %c0_121, %c0_122] : memref<4x9x8x128xf32, #tpu.memory_space<vmem>>, vector<1x1x8x128xf32>
    %248 = vector.shape_cast %247 : vector<1x1x8x128xf32> to vector<8x128xf32>
    %249 = vector.shape_cast %248 : vector<8x128xf32> to vector<1x8x128xf32>
    %250 = vector.broadcast %249 : vector<1x8x128xf32> to vector<2x8x128xf32>
    %251 = arith.mulf %246, %250 : vector<2x8x128xf32>
    %c1_i32_123 = arith.constant 1 : i32
    %252 = tpu.dynamic_rotate %230 by %c1_i32_123 dim 1 : vector<16x128xf32>, i32 -> vector<16x128xf32>
    %253 = vector.shape_cast %252 : vector<16x128xf32> to vector<2x8x128xf32>
    %c1_124 = arith.constant 1 : index
    %c3_125 = arith.constant 3 : index
    %c0_126 = arith.constant 0 : index
    %c0_127 = arith.constant 0 : index
    %254 = vector.load %arg4[%c1_124, %c3_125, %c0_126, %c0_127] : memref<4x9x8x128xf32, #tpu.memory_space<vmem>>, vector<1x1x8x128xf32>
    %255 = vector.shape_cast %254 : vector<1x1x8x128xf32> to vector<8x128xf32>
    %256 = vector.shape_cast %255 : vector<8x128xf32> to vector<1x8x128xf32>
    %257 = vector.broadcast %256 : vector<1x8x128xf32> to vector<2x8x128xf32>
    %258 = arith.mulf %253, %257 : vector<2x8x128xf32>
    %259 = arith.addf %237, %258 : vector<2x8x128xf32>
    %260 = vector.shape_cast %230 : vector<16x128xf32> to vector<2x8x128xf32>
    %c1_128 = arith.constant 1 : index
    %c4_129 = arith.constant 4 : index
    %c0_130 = arith.constant 0 : index
    %c0_131 = arith.constant 0 : index
    %261 = vector.load %arg4[%c1_128, %c4_129, %c0_130, %c0_131] : memref<4x9x8x128xf32, #tpu.memory_space<vmem>>, vector<1x1x8x128xf32>
    %262 = vector.shape_cast %261 : vector<1x1x8x128xf32> to vector<8x128xf32>
    %263 = vector.shape_cast %262 : vector<8x128xf32> to vector<1x8x128xf32>
    %264 = vector.broadcast %263 : vector<1x8x128xf32> to vector<2x8x128xf32>
    %265 = arith.mulf %260, %264 : vector<2x8x128xf32>
    %266 = arith.addf %244, %265 : vector<2x8x128xf32>
    %c127_i32_132 = arith.constant 127 : i32
    %267 = tpu.dynamic_rotate %230 by %c127_i32_132 dim 1 : vector<16x128xf32>, i32 -> vector<16x128xf32>
    %268 = vector.shape_cast %267 : vector<16x128xf32> to vector<2x8x128xf32>
    %c1_133 = arith.constant 1 : index
    %c5_134 = arith.constant 5 : index
    %c0_135 = arith.constant 0 : index
    %c0_136 = arith.constant 0 : index
    %269 = vector.load %arg4[%c1_133, %c5_134, %c0_135, %c0_136] : memref<4x9x8x128xf32, #tpu.memory_space<vmem>>, vector<1x1x8x128xf32>
    %270 = vector.shape_cast %269 : vector<1x1x8x128xf32> to vector<8x128xf32>
    %271 = vector.shape_cast %270 : vector<8x128xf32> to vector<1x8x128xf32>
    %272 = vector.broadcast %271 : vector<1x8x128xf32> to vector<2x8x128xf32>
    %273 = arith.mulf %268, %272 : vector<2x8x128xf32>
    %274 = arith.addf %251, %273 : vector<2x8x128xf32>
    %c113_i32_137 = arith.constant 113 : i32
    %275 = tpu.dynamic_rotate %230 by %c113_i32_137 dim 1 : vector<16x128xf32>, i32 -> vector<16x128xf32>
    %276 = vector.shape_cast %275 : vector<16x128xf32> to vector<2x8x128xf32>
    %c1_138 = arith.constant 1 : index
    %c6_139 = arith.constant 6 : index
    %c0_140 = arith.constant 0 : index
    %c0_141 = arith.constant 0 : index
    %277 = vector.load %arg4[%c1_138, %c6_139, %c0_140, %c0_141] : memref<4x9x8x128xf32, #tpu.memory_space<vmem>>, vector<1x1x8x128xf32>
    %278 = vector.shape_cast %277 : vector<1x1x8x128xf32> to vector<8x128xf32>
    %279 = vector.shape_cast %278 : vector<8x128xf32> to vector<1x8x128xf32>
    %280 = vector.broadcast %279 : vector<1x8x128xf32> to vector<2x8x128xf32>
    %281 = arith.mulf %276, %280 : vector<2x8x128xf32>
    %282 = arith.addf %259, %281 : vector<2x8x128xf32>
    %c112_i32_142 = arith.constant 112 : i32
    %283 = tpu.dynamic_rotate %230 by %c112_i32_142 dim 1 : vector<16x128xf32>, i32 -> vector<16x128xf32>
    %284 = vector.shape_cast %283 : vector<16x128xf32> to vector<2x8x128xf32>
    %c1_143 = arith.constant 1 : index
    %c7_144 = arith.constant 7 : index
    %c0_145 = arith.constant 0 : index
    %c0_146 = arith.constant 0 : index
    %285 = vector.load %arg4[%c1_143, %c7_144, %c0_145, %c0_146] : memref<4x9x8x128xf32, #tpu.memory_space<vmem>>, vector<1x1x8x128xf32>
    %286 = vector.shape_cast %285 : vector<1x1x8x128xf32> to vector<8x128xf32>
    %287 = vector.shape_cast %286 : vector<8x128xf32> to vector<1x8x128xf32>
    %288 = vector.broadcast %287 : vector<1x8x128xf32> to vector<2x8x128xf32>
    %289 = arith.mulf %284, %288 : vector<2x8x128xf32>
    %290 = arith.addf %266, %289 : vector<2x8x128xf32>
    %c111_i32_147 = arith.constant 111 : i32
    %291 = tpu.dynamic_rotate %230 by %c111_i32_147 dim 1 : vector<16x128xf32>, i32 -> vector<16x128xf32>
    %292 = vector.shape_cast %291 : vector<16x128xf32> to vector<2x8x128xf32>
    %c1_148 = arith.constant 1 : index
    %c8_149 = arith.constant 8 : index
    %c0_150 = arith.constant 0 : index
    %c0_151 = arith.constant 0 : index
    %293 = vector.load %arg4[%c1_148, %c8_149, %c0_150, %c0_151] : memref<4x9x8x128xf32, #tpu.memory_space<vmem>>, vector<1x1x8x128xf32>
    %294 = vector.shape_cast %293 : vector<1x1x8x128xf32> to vector<8x128xf32>
    %295 = vector.shape_cast %294 : vector<8x128xf32> to vector<1x8x128xf32>
    %296 = vector.broadcast %295 : vector<1x8x128xf32> to vector<2x8x128xf32>
    %297 = arith.mulf %292, %296 : vector<2x8x128xf32>
    %298 = arith.addf %274, %297 : vector<2x8x128xf32>
    %299 = arith.addf %282, %290 : vector<2x8x128xf32>
    %300 = arith.addf %299, %298 : vector<2x8x128xf32>
    %c1_152 = arith.constant 1 : index
    %c0_153 = arith.constant 0 : index
    %c0_154 = arith.constant 0 : index
    %301 = vector.load %arg5[%c1_152, %c0_153, %c0_154] : memref<4x8x128xf32, #tpu.memory_space<vmem>>, vector<1x8x128xf32>
    %302 = vector.shape_cast %301 : vector<1x8x128xf32> to vector<8x128xf32>
    %303 = vector.shape_cast %302 : vector<8x128xf32> to vector<1x8x128xf32>
    %304 = vector.broadcast %303 : vector<1x8x128xf32> to vector<2x8x128xf32>
    %305 = arith.addf %300, %304 : vector<2x8x128xf32>
    %306 = vector.shape_cast %305 : vector<2x8x128xf32> to vector<16x128xf32>
    %c1_155 = arith.constant 1 : index
    %c0_156 = arith.constant 0 : index
    %307 = vector.load %arg6[%c1_155, %c0_156] : memref<4x128xf32, #tpu.memory_space<vmem>>, vector<1x128xf32>
    %c1_157 = arith.constant 1 : index
    %c0_158 = arith.constant 0 : index
    %308 = vector.load %arg7[%c1_157, %c0_158] : memref<4x128xf32, #tpu.memory_space<vmem>>, vector<1x128xf32>
    %cst_159 = arith.constant dense<0.000000e+00> : vector<16xf32>
    %309 = vector.multi_reduction <add>, %306, %cst_159 [1] : vector<16x128xf32> to vector<16xf32>
    %310 = vector.shape_cast %309 : vector<16xf32> to vector<16x1xf32>
    %311 = arith.mulf %306, %306 : vector<16x128xf32>
    %cst_160 = arith.constant dense<0.000000e+00> : vector<16xf32>
    %312 = vector.multi_reduction <add>, %311, %cst_160 [1] : vector<16x128xf32> to vector<16xf32>
    %313 = vector.shape_cast %312 : vector<16xf32> to vector<16x1xf32>
    %cst_161 = arith.constant 7.812500e-03 : f32
    %314 = vector.broadcast %cst_161 : f32 to vector<16x1xf32>
    %315 = arith.mulf %310, %314 : vector<16x1xf32>
    %cst_162 = arith.constant 7.812500e-03 : f32
    %316 = vector.broadcast %cst_162 : f32 to vector<16x1xf32>
    %317 = arith.mulf %313, %316 : vector<16x1xf32>
    %318 = arith.mulf %315, %315 : vector<16x1xf32>
    %319 = arith.subf %317, %318 : vector<16x1xf32>
    %320 = vector.broadcast %315 : vector<16x1xf32> to vector<16x128xf32>
    %321 = arith.subf %306, %320 : vector<16x128xf32>
    %cst_163 = arith.constant 9.99999974E-6 : f32
    %322 = vector.broadcast %cst_163 : f32 to vector<16x1xf32>
    %323 = arith.addf %319, %322 : vector<16x1xf32>
    %324 = math.rsqrt %323 : vector<16x1xf32>
    %325 = vector.broadcast %324 : vector<16x1xf32> to vector<16x128xf32>
    %326 = arith.mulf %321, %325 : vector<16x128xf32>
    %327 = vector.broadcast %307 : vector<1x128xf32> to vector<16x128xf32>
    %328 = arith.mulf %326, %327 : vector<16x128xf32>
    %329 = vector.broadcast %308 : vector<1x128xf32> to vector<16x128xf32>
    %330 = arith.addf %328, %329 : vector<16x128xf32>
    %cst_164 = arith.constant 0.000000e+00 : f32
    %331 = vector.broadcast %cst_164 : f32 to vector<16x128xf32>
    %332 = arith.maximumf %330, %331 : vector<16x128xf32>
    %c17_i32_165 = arith.constant 17 : i32
    %333 = tpu.dynamic_rotate %332 by %c17_i32_165 dim 1 : vector<16x128xf32>, i32 -> vector<16x128xf32>
    %334 = vector.shape_cast %333 : vector<16x128xf32> to vector<2x8x128xf32>
    %c1_166 = arith.constant 1 : index
    %c0_167 = arith.constant 0 : index
    %c0_168 = arith.constant 0 : index
    %c0_169 = arith.constant 0 : index
    %335 = vector.load %arg8[%c1_166, %c0_167, %c0_168, %c0_169] : memref<4x9x8x128xf32, #tpu.memory_space<vmem>>, vector<1x1x8x128xf32>
    %336 = vector.shape_cast %335 : vector<1x1x8x128xf32> to vector<8x128xf32>
    %337 = vector.shape_cast %336 : vector<8x128xf32> to vector<1x8x128xf32>
    %338 = vector.broadcast %337 : vector<1x8x128xf32> to vector<2x8x128xf32>
    %339 = arith.mulf %334, %338 : vector<2x8x128xf32>
    %c16_i32_170 = arith.constant 16 : i32
    %340 = tpu.dynamic_rotate %332 by %c16_i32_170 dim 1 : vector<16x128xf32>, i32 -> vector<16x128xf32>
    %341 = vector.shape_cast %340 : vector<16x128xf32> to vector<2x8x128xf32>
    %c1_171 = arith.constant 1 : index
    %c1_172 = arith.constant 1 : index
    %c0_173 = arith.constant 0 : index
    %c0_174 = arith.constant 0 : index
    %342 = vector.load %arg8[%c1_171, %c1_172, %c0_173, %c0_174] : memref<4x9x8x128xf32, #tpu.memory_space<vmem>>, vector<1x1x8x128xf32>
    %343 = vector.shape_cast %342 : vector<1x1x8x128xf32> to vector<8x128xf32>
    %344 = vector.shape_cast %343 : vector<8x128xf32> to vector<1x8x128xf32>
    %345 = vector.broadcast %344 : vector<1x8x128xf32> to vector<2x8x128xf32>
    %346 = arith.mulf %341, %345 : vector<2x8x128xf32>
    %c15_i32_175 = arith.constant 15 : i32
    %347 = tpu.dynamic_rotate %332 by %c15_i32_175 dim 1 : vector<16x128xf32>, i32 -> vector<16x128xf32>
    %348 = vector.shape_cast %347 : vector<16x128xf32> to vector<2x8x128xf32>
    %c1_176 = arith.constant 1 : index
    %c2_177 = arith.constant 2 : index
    %c0_178 = arith.constant 0 : index
    %c0_179 = arith.constant 0 : index
    %349 = vector.load %arg8[%c1_176, %c2_177, %c0_178, %c0_179] : memref<4x9x8x128xf32, #tpu.memory_space<vmem>>, vector<1x1x8x128xf32>
    %350 = vector.shape_cast %349 : vector<1x1x8x128xf32> to vector<8x128xf32>
    %351 = vector.shape_cast %350 : vector<8x128xf32> to vector<1x8x128xf32>
    %352 = vector.broadcast %351 : vector<1x8x128xf32> to vector<2x8x128xf32>
    %353 = arith.mulf %348, %352 : vector<2x8x128xf32>
    %c1_i32_180 = arith.constant 1 : i32
    %354 = tpu.dynamic_rotate %332 by %c1_i32_180 dim 1 : vector<16x128xf32>, i32 -> vector<16x128xf32>
    %355 = vector.shape_cast %354 : vector<16x128xf32> to vector<2x8x128xf32>
    %c1_181 = arith.constant 1 : index
    %c3_182 = arith.constant 3 : index
    %c0_183 = arith.constant 0 : index
    %c0_184 = arith.constant 0 : index
    %356 = vector.load %arg8[%c1_181, %c3_182, %c0_183, %c0_184] : memref<4x9x8x128xf32, #tpu.memory_space<vmem>>, vector<1x1x8x128xf32>
    %357 = vector.shape_cast %356 : vector<1x1x8x128xf32> to vector<8x128xf32>
    %358 = vector.shape_cast %357 : vector<8x128xf32> to vector<1x8x128xf32>
    %359 = vector.broadcast %358 : vector<1x8x128xf32> to vector<2x8x128xf32>
    %360 = arith.mulf %355, %359 : vector<2x8x128xf32>
    %361 = arith.addf %339, %360 : vector<2x8x128xf32>
    %362 = vector.shape_cast %332 : vector<16x128xf32> to vector<2x8x128xf32>
    %c1_185 = arith.constant 1 : index
    %c4_186 = arith.constant 4 : index
    %c0_187 = arith.constant 0 : index
    %c0_188 = arith.constant 0 : index
    %363 = vector.load %arg8[%c1_185, %c4_186, %c0_187, %c0_188] : memref<4x9x8x128xf32, #tpu.memory_space<vmem>>, vector<1x1x8x128xf32>
    %364 = vector.shape_cast %363 : vector<1x1x8x128xf32> to vector<8x128xf32>
    %365 = vector.shape_cast %364 : vector<8x128xf32> to vector<1x8x128xf32>
    %366 = vector.broadcast %365 : vector<1x8x128xf32> to vector<2x8x128xf32>
    %367 = arith.mulf %362, %366 : vector<2x8x128xf32>
    %368 = arith.addf %346, %367 : vector<2x8x128xf32>
    %c127_i32_189 = arith.constant 127 : i32
    %369 = tpu.dynamic_rotate %332 by %c127_i32_189 dim 1 : vector<16x128xf32>, i32 -> vector<16x128xf32>
    %370 = vector.shape_cast %369 : vector<16x128xf32> to vector<2x8x128xf32>
    %c1_190 = arith.constant 1 : index
    %c5_191 = arith.constant 5 : index
    %c0_192 = arith.constant 0 : index
    %c0_193 = arith.constant 0 : index
    %371 = vector.load %arg8[%c1_190, %c5_191, %c0_192, %c0_193] : memref<4x9x8x128xf32, #tpu.memory_space<vmem>>, vector<1x1x8x128xf32>
    %372 = vector.shape_cast %371 : vector<1x1x8x128xf32> to vector<8x128xf32>
    %373 = vector.shape_cast %372 : vector<8x128xf32> to vector<1x8x128xf32>
    %374 = vector.broadcast %373 : vector<1x8x128xf32> to vector<2x8x128xf32>
    %375 = arith.mulf %370, %374 : vector<2x8x128xf32>
    %376 = arith.addf %353, %375 : vector<2x8x128xf32>
    %c113_i32_194 = arith.constant 113 : i32
    %377 = tpu.dynamic_rotate %332 by %c113_i32_194 dim 1 : vector<16x128xf32>, i32 -> vector<16x128xf32>
    %378 = vector.shape_cast %377 : vector<16x128xf32> to vector<2x8x128xf32>
    %c1_195 = arith.constant 1 : index
    %c6_196 = arith.constant 6 : index
    %c0_197 = arith.constant 0 : index
    %c0_198 = arith.constant 0 : index
    %379 = vector.load %arg8[%c1_195, %c6_196, %c0_197, %c0_198] : memref<4x9x8x128xf32, #tpu.memory_space<vmem>>, vector<1x1x8x128xf32>
    %380 = vector.shape_cast %379 : vector<1x1x8x128xf32> to vector<8x128xf32>
    %381 = vector.shape_cast %380 : vector<8x128xf32> to vector<1x8x128xf32>
    %382 = vector.broadcast %381 : vector<1x8x128xf32> to vector<2x8x128xf32>
    %383 = arith.mulf %378, %382 : vector<2x8x128xf32>
    %384 = arith.addf %361, %383 : vector<2x8x128xf32>
    %c112_i32_199 = arith.constant 112 : i32
    %385 = tpu.dynamic_rotate %332 by %c112_i32_199 dim 1 : vector<16x128xf32>, i32 -> vector<16x128xf32>
    %386 = vector.shape_cast %385 : vector<16x128xf32> to vector<2x8x128xf32>
    %c1_200 = arith.constant 1 : index
    %c7_201 = arith.constant 7 : index
    %c0_202 = arith.constant 0 : index
    %c0_203 = arith.constant 0 : index
    %387 = vector.load %arg8[%c1_200, %c7_201, %c0_202, %c0_203] : memref<4x9x8x128xf32, #tpu.memory_space<vmem>>, vector<1x1x8x128xf32>
    %388 = vector.shape_cast %387 : vector<1x1x8x128xf32> to vector<8x128xf32>
    %389 = vector.shape_cast %388 : vector<8x128xf32> to vector<1x8x128xf32>
    %390 = vector.broadcast %389 : vector<1x8x128xf32> to vector<2x8x128xf32>
    %391 = arith.mulf %386, %390 : vector<2x8x128xf32>
    %392 = arith.addf %368, %391 : vector<2x8x128xf32>
    %c111_i32_204 = arith.constant 111 : i32
    %393 = tpu.dynamic_rotate %332 by %c111_i32_204 dim 1 : vector<16x128xf32>, i32 -> vector<16x128xf32>
    %394 = vector.shape_cast %393 : vector<16x128xf32> to vector<2x8x128xf32>
    %c1_205 = arith.constant 1 : index
    %c8_206 = arith.constant 8 : index
    %c0_207 = arith.constant 0 : index
    %c0_208 = arith.constant 0 : index
    %395 = vector.load %arg8[%c1_205, %c8_206, %c0_207, %c0_208] : memref<4x9x8x128xf32, #tpu.memory_space<vmem>>, vector<1x1x8x128xf32>
    %396 = vector.shape_cast %395 : vector<1x1x8x128xf32> to vector<8x128xf32>
    %397 = vector.shape_cast %396 : vector<8x128xf32> to vector<1x8x128xf32>
    %398 = vector.broadcast %397 : vector<1x8x128xf32> to vector<2x8x128xf32>
    %399 = arith.mulf %394, %398 : vector<2x8x128xf32>
    %400 = arith.addf %376, %399 : vector<2x8x128xf32>
    %401 = arith.addf %384, %392 : vector<2x8x128xf32>
    %402 = arith.addf %401, %400 : vector<2x8x128xf32>
    %c1_209 = arith.constant 1 : index
    %c0_210 = arith.constant 0 : index
    %c0_211 = arith.constant 0 : index
    %403 = vector.load %arg9[%c1_209, %c0_210, %c0_211] : memref<4x8x128xf32, #tpu.memory_space<vmem>>, vector<1x8x128xf32>
    %404 = vector.shape_cast %403 : vector<1x8x128xf32> to vector<8x128xf32>
    %405 = vector.shape_cast %404 : vector<8x128xf32> to vector<1x8x128xf32>
    %406 = vector.broadcast %405 : vector<1x8x128xf32> to vector<2x8x128xf32>
    %407 = arith.addf %402, %406 : vector<2x8x128xf32>
    %408 = vector.shape_cast %407 : vector<2x8x128xf32> to vector<16x128xf32>
    %c1_212 = arith.constant 1 : index
    %c0_213 = arith.constant 0 : index
    %409 = vector.load %arg10[%c1_212, %c0_213] : memref<4x128xf32, #tpu.memory_space<vmem>>, vector<1x128xf32>
    %c1_214 = arith.constant 1 : index
    %c0_215 = arith.constant 0 : index
    %410 = vector.load %arg11[%c1_214, %c0_215] : memref<4x128xf32, #tpu.memory_space<vmem>>, vector<1x128xf32>
    %cst_216 = arith.constant dense<0.000000e+00> : vector<16xf32>
    %411 = vector.multi_reduction <add>, %408, %cst_216 [1] : vector<16x128xf32> to vector<16xf32>
    %412 = vector.shape_cast %411 : vector<16xf32> to vector<16x1xf32>
    %413 = arith.mulf %408, %408 : vector<16x128xf32>
    %cst_217 = arith.constant dense<0.000000e+00> : vector<16xf32>
    %414 = vector.multi_reduction <add>, %413, %cst_217 [1] : vector<16x128xf32> to vector<16xf32>
    %415 = vector.shape_cast %414 : vector<16xf32> to vector<16x1xf32>
    %cst_218 = arith.constant 7.812500e-03 : f32
    %416 = vector.broadcast %cst_218 : f32 to vector<16x1xf32>
    %417 = arith.mulf %412, %416 : vector<16x1xf32>
    %cst_219 = arith.constant 7.812500e-03 : f32
    %418 = vector.broadcast %cst_219 : f32 to vector<16x1xf32>
    %419 = arith.mulf %415, %418 : vector<16x1xf32>
    %420 = arith.mulf %417, %417 : vector<16x1xf32>
    %421 = arith.subf %419, %420 : vector<16x1xf32>
    %422 = vector.broadcast %417 : vector<16x1xf32> to vector<16x128xf32>
    %423 = arith.subf %408, %422 : vector<16x128xf32>
    %cst_220 = arith.constant 9.99999974E-6 : f32
    %424 = vector.broadcast %cst_220 : f32 to vector<16x1xf32>
    %425 = arith.addf %421, %424 : vector<16x1xf32>
    %426 = math.rsqrt %425 : vector<16x1xf32>
    %427 = vector.broadcast %426 : vector<16x1xf32> to vector<16x128xf32>
    %428 = arith.mulf %423, %427 : vector<16x128xf32>
    %429 = vector.broadcast %409 : vector<1x128xf32> to vector<16x128xf32>
    %430 = arith.mulf %428, %429 : vector<16x128xf32>
    %431 = vector.broadcast %410 : vector<1x128xf32> to vector<16x128xf32>
    %432 = arith.addf %430, %431 : vector<16x128xf32>
    %433 = arith.addf %432, %230 : vector<16x128xf32>
    %cst_221 = arith.constant 0.000000e+00 : f32
    %434 = vector.broadcast %cst_221 : f32 to vector<16x128xf32>
    %435 = arith.maximumf %433, %434 : vector<16x128xf32>
    %c17_i32_222 = arith.constant 17 : i32
    %436 = tpu.dynamic_rotate %435 by %c17_i32_222 dim 1 : vector<16x128xf32>, i32 -> vector<16x128xf32>
    %437 = vector.shape_cast %436 : vector<16x128xf32> to vector<2x8x128xf32>
    %c2_223 = arith.constant 2 : index
    %c0_224 = arith.constant 0 : index
    %c0_225 = arith.constant 0 : index
    %c0_226 = arith.constant 0 : index
    %438 = vector.load %arg4[%c2_223, %c0_224, %c0_225, %c0_226] : memref<4x9x8x128xf32, #tpu.memory_space<vmem>>, vector<1x1x8x128xf32>
    %439 = vector.shape_cast %438 : vector<1x1x8x128xf32> to vector<8x128xf32>
    %440 = vector.shape_cast %439 : vector<8x128xf32> to vector<1x8x128xf32>
    %441 = vector.broadcast %440 : vector<1x8x128xf32> to vector<2x8x128xf32>
    %442 = arith.mulf %437, %441 : vector<2x8x128xf32>
    %c16_i32_227 = arith.constant 16 : i32
    %443 = tpu.dynamic_rotate %435 by %c16_i32_227 dim 1 : vector<16x128xf32>, i32 -> vector<16x128xf32>
    %444 = vector.shape_cast %443 : vector<16x128xf32> to vector<2x8x128xf32>
    %c2_228 = arith.constant 2 : index
    %c1_229 = arith.constant 1 : index
    %c0_230 = arith.constant 0 : index
    %c0_231 = arith.constant 0 : index
    %445 = vector.load %arg4[%c2_228, %c1_229, %c0_230, %c0_231] : memref<4x9x8x128xf32, #tpu.memory_space<vmem>>, vector<1x1x8x128xf32>
    %446 = vector.shape_cast %445 : vector<1x1x8x128xf32> to vector<8x128xf32>
    %447 = vector.shape_cast %446 : vector<8x128xf32> to vector<1x8x128xf32>
    %448 = vector.broadcast %447 : vector<1x8x128xf32> to vector<2x8x128xf32>
    %449 = arith.mulf %444, %448 : vector<2x8x128xf32>
    %c15_i32_232 = arith.constant 15 : i32
    %450 = tpu.dynamic_rotate %435 by %c15_i32_232 dim 1 : vector<16x128xf32>, i32 -> vector<16x128xf32>
    %451 = vector.shape_cast %450 : vector<16x128xf32> to vector<2x8x128xf32>
    %c2_233 = arith.constant 2 : index
    %c2_234 = arith.constant 2 : index
    %c0_235 = arith.constant 0 : index
    %c0_236 = arith.constant 0 : index
    %452 = vector.load %arg4[%c2_233, %c2_234, %c0_235, %c0_236] : memref<4x9x8x128xf32, #tpu.memory_space<vmem>>, vector<1x1x8x128xf32>
    %453 = vector.shape_cast %452 : vector<1x1x8x128xf32> to vector<8x128xf32>
    %454 = vector.shape_cast %453 : vector<8x128xf32> to vector<1x8x128xf32>
    %455 = vector.broadcast %454 : vector<1x8x128xf32> to vector<2x8x128xf32>
    %456 = arith.mulf %451, %455 : vector<2x8x128xf32>
    %c1_i32_237 = arith.constant 1 : i32
    %457 = tpu.dynamic_rotate %435 by %c1_i32_237 dim 1 : vector<16x128xf32>, i32 -> vector<16x128xf32>
    %458 = vector.shape_cast %457 : vector<16x128xf32> to vector<2x8x128xf32>
    %c2_238 = arith.constant 2 : index
    %c3_239 = arith.constant 3 : index
    %c0_240 = arith.constant 0 : index
    %c0_241 = arith.constant 0 : index
    %459 = vector.load %arg4[%c2_238, %c3_239, %c0_240, %c0_241] : memref<4x9x8x128xf32, #tpu.memory_space<vmem>>, vector<1x1x8x128xf32>
    %460 = vector.shape_cast %459 : vector<1x1x8x128xf32> to vector<8x128xf32>
    %461 = vector.shape_cast %460 : vector<8x128xf32> to vector<1x8x128xf32>
    %462 = vector.broadcast %461 : vector<1x8x128xf32> to vector<2x8x128xf32>
    %463 = arith.mulf %458, %462 : vector<2x8x128xf32>
    %464 = arith.addf %442, %463 : vector<2x8x128xf32>
    %465 = vector.shape_cast %435 : vector<16x128xf32> to vector<2x8x128xf32>
    %c2_242 = arith.constant 2 : index
    %c4_243 = arith.constant 4 : index
    %c0_244 = arith.constant 0 : index
    %c0_245 = arith.constant 0 : index
    %466 = vector.load %arg4[%c2_242, %c4_243, %c0_244, %c0_245] : memref<4x9x8x128xf32, #tpu.memory_space<vmem>>, vector<1x1x8x128xf32>
    %467 = vector.shape_cast %466 : vector<1x1x8x128xf32> to vector<8x128xf32>
    %468 = vector.shape_cast %467 : vector<8x128xf32> to vector<1x8x128xf32>
    %469 = vector.broadcast %468 : vector<1x8x128xf32> to vector<2x8x128xf32>
    %470 = arith.mulf %465, %469 : vector<2x8x128xf32>
    %471 = arith.addf %449, %470 : vector<2x8x128xf32>
    %c127_i32_246 = arith.constant 127 : i32
    %472 = tpu.dynamic_rotate %435 by %c127_i32_246 dim 1 : vector<16x128xf32>, i32 -> vector<16x128xf32>
    %473 = vector.shape_cast %472 : vector<16x128xf32> to vector<2x8x128xf32>
    %c2_247 = arith.constant 2 : index
    %c5_248 = arith.constant 5 : index
    %c0_249 = arith.constant 0 : index
    %c0_250 = arith.constant 0 : index
    %474 = vector.load %arg4[%c2_247, %c5_248, %c0_249, %c0_250] : memref<4x9x8x128xf32, #tpu.memory_space<vmem>>, vector<1x1x8x128xf32>
    %475 = vector.shape_cast %474 : vector<1x1x8x128xf32> to vector<8x128xf32>
    %476 = vector.shape_cast %475 : vector<8x128xf32> to vector<1x8x128xf32>
    %477 = vector.broadcast %476 : vector<1x8x128xf32> to vector<2x8x128xf32>
    %478 = arith.mulf %473, %477 : vector<2x8x128xf32>
    %479 = arith.addf %456, %478 : vector<2x8x128xf32>
    %c113_i32_251 = arith.constant 113 : i32
    %480 = tpu.dynamic_rotate %435 by %c113_i32_251 dim 1 : vector<16x128xf32>, i32 -> vector<16x128xf32>
    %481 = vector.shape_cast %480 : vector<16x128xf32> to vector<2x8x128xf32>
    %c2_252 = arith.constant 2 : index
    %c6_253 = arith.constant 6 : index
    %c0_254 = arith.constant 0 : index
    %c0_255 = arith.constant 0 : index
    %482 = vector.load %arg4[%c2_252, %c6_253, %c0_254, %c0_255] : memref<4x9x8x128xf32, #tpu.memory_space<vmem>>, vector<1x1x8x128xf32>
    %483 = vector.shape_cast %482 : vector<1x1x8x128xf32> to vector<8x128xf32>
    %484 = vector.shape_cast %483 : vector<8x128xf32> to vector<1x8x128xf32>
    %485 = vector.broadcast %484 : vector<1x8x128xf32> to vector<2x8x128xf32>
    %486 = arith.mulf %481, %485 : vector<2x8x128xf32>
    %487 = arith.addf %464, %486 : vector<2x8x128xf32>
    %c112_i32_256 = arith.constant 112 : i32
    %488 = tpu.dynamic_rotate %435 by %c112_i32_256 dim 1 : vector<16x128xf32>, i32 -> vector<16x128xf32>
    %489 = vector.shape_cast %488 : vector<16x128xf32> to vector<2x8x128xf32>
    %c2_257 = arith.constant 2 : index
    %c7_258 = arith.constant 7 : index
    %c0_259 = arith.constant 0 : index
    %c0_260 = arith.constant 0 : index
    %490 = vector.load %arg4[%c2_257, %c7_258, %c0_259, %c0_260] : memref<4x9x8x128xf32, #tpu.memory_space<vmem>>, vector<1x1x8x128xf32>
    %491 = vector.shape_cast %490 : vector<1x1x8x128xf32> to vector<8x128xf32>
    %492 = vector.shape_cast %491 : vector<8x128xf32> to vector<1x8x128xf32>
    %493 = vector.broadcast %492 : vector<1x8x128xf32> to vector<2x8x128xf32>
    %494 = arith.mulf %489, %493 : vector<2x8x128xf32>
    %495 = arith.addf %471, %494 : vector<2x8x128xf32>
    %c111_i32_261 = arith.constant 111 : i32
    %496 = tpu.dynamic_rotate %435 by %c111_i32_261 dim 1 : vector<16x128xf32>, i32 -> vector<16x128xf32>
    %497 = vector.shape_cast %496 : vector<16x128xf32> to vector<2x8x128xf32>
    %c2_262 = arith.constant 2 : index
    %c8_263 = arith.constant 8 : index
    %c0_264 = arith.constant 0 : index
    %c0_265 = arith.constant 0 : index
    %498 = vector.load %arg4[%c2_262, %c8_263, %c0_264, %c0_265] : memref<4x9x8x128xf32, #tpu.memory_space<vmem>>, vector<1x1x8x128xf32>
    %499 = vector.shape_cast %498 : vector<1x1x8x128xf32> to vector<8x128xf32>
    %500 = vector.shape_cast %499 : vector<8x128xf32> to vector<1x8x128xf32>
    %501 = vector.broadcast %500 : vector<1x8x128xf32> to vector<2x8x128xf32>
    %502 = arith.mulf %497, %501 : vector<2x8x128xf32>
    %503 = arith.addf %479, %502 : vector<2x8x128xf32>
    %504 = arith.addf %487, %495 : vector<2x8x128xf32>
    %505 = arith.addf %504, %503 : vector<2x8x128xf32>
    %c2_266 = arith.constant 2 : index
    %c0_267 = arith.constant 0 : index
    %c0_268 = arith.constant 0 : index
    %506 = vector.load %arg5[%c2_266, %c0_267, %c0_268] : memref<4x8x128xf32, #tpu.memory_space<vmem>>, vector<1x8x128xf32>
    %507 = vector.shape_cast %506 : vector<1x8x128xf32> to vector<8x128xf32>
    %508 = vector.shape_cast %507 : vector<8x128xf32> to vector<1x8x128xf32>
    %509 = vector.broadcast %508 : vector<1x8x128xf32> to vector<2x8x128xf32>
    %510 = arith.addf %505, %509 : vector<2x8x128xf32>
    %511 = vector.shape_cast %510 : vector<2x8x128xf32> to vector<16x128xf32>
    %c2_269 = arith.constant 2 : index
    %c0_270 = arith.constant 0 : index
    %512 = vector.load %arg6[%c2_269, %c0_270] : memref<4x128xf32, #tpu.memory_space<vmem>>, vector<1x128xf32>
    %c2_271 = arith.constant 2 : index
    %c0_272 = arith.constant 0 : index
    %513 = vector.load %arg7[%c2_271, %c0_272] : memref<4x128xf32, #tpu.memory_space<vmem>>, vector<1x128xf32>
    %cst_273 = arith.constant dense<0.000000e+00> : vector<16xf32>
    %514 = vector.multi_reduction <add>, %511, %cst_273 [1] : vector<16x128xf32> to vector<16xf32>
    %515 = vector.shape_cast %514 : vector<16xf32> to vector<16x1xf32>
    %516 = arith.mulf %511, %511 : vector<16x128xf32>
    %cst_274 = arith.constant dense<0.000000e+00> : vector<16xf32>
    %517 = vector.multi_reduction <add>, %516, %cst_274 [1] : vector<16x128xf32> to vector<16xf32>
    %518 = vector.shape_cast %517 : vector<16xf32> to vector<16x1xf32>
    %cst_275 = arith.constant 7.812500e-03 : f32
    %519 = vector.broadcast %cst_275 : f32 to vector<16x1xf32>
    %520 = arith.mulf %515, %519 : vector<16x1xf32>
    %cst_276 = arith.constant 7.812500e-03 : f32
    %521 = vector.broadcast %cst_276 : f32 to vector<16x1xf32>
    %522 = arith.mulf %518, %521 : vector<16x1xf32>
    %523 = arith.mulf %520, %520 : vector<16x1xf32>
    %524 = arith.subf %522, %523 : vector<16x1xf32>
    %525 = vector.broadcast %520 : vector<16x1xf32> to vector<16x128xf32>
    %526 = arith.subf %511, %525 : vector<16x128xf32>
    %cst_277 = arith.constant 9.99999974E-6 : f32
    %527 = vector.broadcast %cst_277 : f32 to vector<16x1xf32>
    %528 = arith.addf %524, %527 : vector<16x1xf32>
    %529 = math.rsqrt %528 : vector<16x1xf32>
    %530 = vector.broadcast %529 : vector<16x1xf32> to vector<16x128xf32>
    %531 = arith.mulf %526, %530 : vector<16x128xf32>
    %532 = vector.broadcast %512 : vector<1x128xf32> to vector<16x128xf32>
    %533 = arith.mulf %531, %532 : vector<16x128xf32>
    %534 = vector.broadcast %513 : vector<1x128xf32> to vector<16x128xf32>
    %535 = arith.addf %533, %534 : vector<16x128xf32>
    %cst_278 = arith.constant 0.000000e+00 : f32
    %536 = vector.broadcast %cst_278 : f32 to vector<16x128xf32>
    %537 = arith.maximumf %535, %536 : vector<16x128xf32>
    %c17_i32_279 = arith.constant 17 : i32
    %538 = tpu.dynamic_rotate %537 by %c17_i32_279 dim 1 : vector<16x128xf32>, i32 -> vector<16x128xf32>
    %539 = vector.shape_cast %538 : vector<16x128xf32> to vector<2x8x128xf32>
    %c2_280 = arith.constant 2 : index
    %c0_281 = arith.constant 0 : index
    %c0_282 = arith.constant 0 : index
    %c0_283 = arith.constant 0 : index
    %540 = vector.load %arg8[%c2_280, %c0_281, %c0_282, %c0_283] : memref<4x9x8x128xf32, #tpu.memory_space<vmem>>, vector<1x1x8x128xf32>
    %541 = vector.shape_cast %540 : vector<1x1x8x128xf32> to vector<8x128xf32>
    %542 = vector.shape_cast %541 : vector<8x128xf32> to vector<1x8x128xf32>
    %543 = vector.broadcast %542 : vector<1x8x128xf32> to vector<2x8x128xf32>
    %544 = arith.mulf %539, %543 : vector<2x8x128xf32>
    %c16_i32_284 = arith.constant 16 : i32
    %545 = tpu.dynamic_rotate %537 by %c16_i32_284 dim 1 : vector<16x128xf32>, i32 -> vector<16x128xf32>
    %546 = vector.shape_cast %545 : vector<16x128xf32> to vector<2x8x128xf32>
    %c2_285 = arith.constant 2 : index
    %c1_286 = arith.constant 1 : index
    %c0_287 = arith.constant 0 : index
    %c0_288 = arith.constant 0 : index
    %547 = vector.load %arg8[%c2_285, %c1_286, %c0_287, %c0_288] : memref<4x9x8x128xf32, #tpu.memory_space<vmem>>, vector<1x1x8x128xf32>
    %548 = vector.shape_cast %547 : vector<1x1x8x128xf32> to vector<8x128xf32>
    %549 = vector.shape_cast %548 : vector<8x128xf32> to vector<1x8x128xf32>
    %550 = vector.broadcast %549 : vector<1x8x128xf32> to vector<2x8x128xf32>
    %551 = arith.mulf %546, %550 : vector<2x8x128xf32>
    %c15_i32_289 = arith.constant 15 : i32
    %552 = tpu.dynamic_rotate %537 by %c15_i32_289 dim 1 : vector<16x128xf32>, i32 -> vector<16x128xf32>
    %553 = vector.shape_cast %552 : vector<16x128xf32> to vector<2x8x128xf32>
    %c2_290 = arith.constant 2 : index
    %c2_291 = arith.constant 2 : index
    %c0_292 = arith.constant 0 : index
    %c0_293 = arith.constant 0 : index
    %554 = vector.load %arg8[%c2_290, %c2_291, %c0_292, %c0_293] : memref<4x9x8x128xf32, #tpu.memory_space<vmem>>, vector<1x1x8x128xf32>
    %555 = vector.shape_cast %554 : vector<1x1x8x128xf32> to vector<8x128xf32>
    %556 = vector.shape_cast %555 : vector<8x128xf32> to vector<1x8x128xf32>
    %557 = vector.broadcast %556 : vector<1x8x128xf32> to vector<2x8x128xf32>
    %558 = arith.mulf %553, %557 : vector<2x8x128xf32>
    %c1_i32_294 = arith.constant 1 : i32
    %559 = tpu.dynamic_rotate %537 by %c1_i32_294 dim 1 : vector<16x128xf32>, i32 -> vector<16x128xf32>
    %560 = vector.shape_cast %559 : vector<16x128xf32> to vector<2x8x128xf32>
    %c2_295 = arith.constant 2 : index
    %c3_296 = arith.constant 3 : index
    %c0_297 = arith.constant 0 : index
    %c0_298 = arith.constant 0 : index
    %561 = vector.load %arg8[%c2_295, %c3_296, %c0_297, %c0_298] : memref<4x9x8x128xf32, #tpu.memory_space<vmem>>, vector<1x1x8x128xf32>
    %562 = vector.shape_cast %561 : vector<1x1x8x128xf32> to vector<8x128xf32>
    %563 = vector.shape_cast %562 : vector<8x128xf32> to vector<1x8x128xf32>
    %564 = vector.broadcast %563 : vector<1x8x128xf32> to vector<2x8x128xf32>
    %565 = arith.mulf %560, %564 : vector<2x8x128xf32>
    %566 = arith.addf %544, %565 : vector<2x8x128xf32>
    %567 = vector.shape_cast %537 : vector<16x128xf32> to vector<2x8x128xf32>
    %c2_299 = arith.constant 2 : index
    %c4_300 = arith.constant 4 : index
    %c0_301 = arith.constant 0 : index
    %c0_302 = arith.constant 0 : index
    %568 = vector.load %arg8[%c2_299, %c4_300, %c0_301, %c0_302] : memref<4x9x8x128xf32, #tpu.memory_space<vmem>>, vector<1x1x8x128xf32>
    %569 = vector.shape_cast %568 : vector<1x1x8x128xf32> to vector<8x128xf32>
    %570 = vector.shape_cast %569 : vector<8x128xf32> to vector<1x8x128xf32>
    %571 = vector.broadcast %570 : vector<1x8x128xf32> to vector<2x8x128xf32>
    %572 = arith.mulf %567, %571 : vector<2x8x128xf32>
    %573 = arith.addf %551, %572 : vector<2x8x128xf32>
    %c127_i32_303 = arith.constant 127 : i32
    %574 = tpu.dynamic_rotate %537 by %c127_i32_303 dim 1 : vector<16x128xf32>, i32 -> vector<16x128xf32>
    %575 = vector.shape_cast %574 : vector<16x128xf32> to vector<2x8x128xf32>
    %c2_304 = arith.constant 2 : index
    %c5_305 = arith.constant 5 : index
    %c0_306 = arith.constant 0 : index
    %c0_307 = arith.constant 0 : index
    %576 = vector.load %arg8[%c2_304, %c5_305, %c0_306, %c0_307] : memref<4x9x8x128xf32, #tpu.memory_space<vmem>>, vector<1x1x8x128xf32>
    %577 = vector.shape_cast %576 : vector<1x1x8x128xf32> to vector<8x128xf32>
    %578 = vector.shape_cast %577 : vector<8x128xf32> to vector<1x8x128xf32>
    %579 = vector.broadcast %578 : vector<1x8x128xf32> to vector<2x8x128xf32>
    %580 = arith.mulf %575, %579 : vector<2x8x128xf32>
    %581 = arith.addf %558, %580 : vector<2x8x128xf32>
    %c113_i32_308 = arith.constant 113 : i32
    %582 = tpu.dynamic_rotate %537 by %c113_i32_308 dim 1 : vector<16x128xf32>, i32 -> vector<16x128xf32>
    %583 = vector.shape_cast %582 : vector<16x128xf32> to vector<2x8x128xf32>
    %c2_309 = arith.constant 2 : index
    %c6_310 = arith.constant 6 : index
    %c0_311 = arith.constant 0 : index
    %c0_312 = arith.constant 0 : index
    %584 = vector.load %arg8[%c2_309, %c6_310, %c0_311, %c0_312] : memref<4x9x8x128xf32, #tpu.memory_space<vmem>>, vector<1x1x8x128xf32>
    %585 = vector.shape_cast %584 : vector<1x1x8x128xf32> to vector<8x128xf32>
    %586 = vector.shape_cast %585 : vector<8x128xf32> to vector<1x8x128xf32>
    %587 = vector.broadcast %586 : vector<1x8x128xf32> to vector<2x8x128xf32>
    %588 = arith.mulf %583, %587 : vector<2x8x128xf32>
    %589 = arith.addf %566, %588 : vector<2x8x128xf32>
    %c112_i32_313 = arith.constant 112 : i32
    %590 = tpu.dynamic_rotate %537 by %c112_i32_313 dim 1 : vector<16x128xf32>, i32 -> vector<16x128xf32>
    %591 = vector.shape_cast %590 : vector<16x128xf32> to vector<2x8x128xf32>
    %c2_314 = arith.constant 2 : index
    %c7_315 = arith.constant 7 : index
    %c0_316 = arith.constant 0 : index
    %c0_317 = arith.constant 0 : index
    %592 = vector.load %arg8[%c2_314, %c7_315, %c0_316, %c0_317] : memref<4x9x8x128xf32, #tpu.memory_space<vmem>>, vector<1x1x8x128xf32>
    %593 = vector.shape_cast %592 : vector<1x1x8x128xf32> to vector<8x128xf32>
    %594 = vector.shape_cast %593 : vector<8x128xf32> to vector<1x8x128xf32>
    %595 = vector.broadcast %594 : vector<1x8x128xf32> to vector<2x8x128xf32>
    %596 = arith.mulf %591, %595 : vector<2x8x128xf32>
    %597 = arith.addf %573, %596 : vector<2x8x128xf32>
    %c111_i32_318 = arith.constant 111 : i32
    %598 = tpu.dynamic_rotate %537 by %c111_i32_318 dim 1 : vector<16x128xf32>, i32 -> vector<16x128xf32>
    %599 = vector.shape_cast %598 : vector<16x128xf32> to vector<2x8x128xf32>
    %c2_319 = arith.constant 2 : index
    %c8_320 = arith.constant 8 : index
    %c0_321 = arith.constant 0 : index
    %c0_322 = arith.constant 0 : index
    %600 = vector.load %arg8[%c2_319, %c8_320, %c0_321, %c0_322] : memref<4x9x8x128xf32, #tpu.memory_space<vmem>>, vector<1x1x8x128xf32>
    %601 = vector.shape_cast %600 : vector<1x1x8x128xf32> to vector<8x128xf32>
    %602 = vector.shape_cast %601 : vector<8x128xf32> to vector<1x8x128xf32>
    %603 = vector.broadcast %602 : vector<1x8x128xf32> to vector<2x8x128xf32>
    %604 = arith.mulf %599, %603 : vector<2x8x128xf32>
    %605 = arith.addf %581, %604 : vector<2x8x128xf32>
    %606 = arith.addf %589, %597 : vector<2x8x128xf32>
    %607 = arith.addf %606, %605 : vector<2x8x128xf32>
    %c2_323 = arith.constant 2 : index
    %c0_324 = arith.constant 0 : index
    %c0_325 = arith.constant 0 : index
    %608 = vector.load %arg9[%c2_323, %c0_324, %c0_325] : memref<4x8x128xf32, #tpu.memory_space<vmem>>, vector<1x8x128xf32>
    %609 = vector.shape_cast %608 : vector<1x8x128xf32> to vector<8x128xf32>
    %610 = vector.shape_cast %609 : vector<8x128xf32> to vector<1x8x128xf32>
    %611 = vector.broadcast %610 : vector<1x8x128xf32> to vector<2x8x128xf32>
    %612 = arith.addf %607, %611 : vector<2x8x128xf32>
    %613 = vector.shape_cast %612 : vector<2x8x128xf32> to vector<16x128xf32>
    %c2_326 = arith.constant 2 : index
    %c0_327 = arith.constant 0 : index
    %614 = vector.load %arg10[%c2_326, %c0_327] : memref<4x128xf32, #tpu.memory_space<vmem>>, vector<1x128xf32>
    %c2_328 = arith.constant 2 : index
    %c0_329 = arith.constant 0 : index
    %615 = vector.load %arg11[%c2_328, %c0_329] : memref<4x128xf32, #tpu.memory_space<vmem>>, vector<1x128xf32>
    %cst_330 = arith.constant dense<0.000000e+00> : vector<16xf32>
    %616 = vector.multi_reduction <add>, %613, %cst_330 [1] : vector<16x128xf32> to vector<16xf32>
    %617 = vector.shape_cast %616 : vector<16xf32> to vector<16x1xf32>
    %618 = arith.mulf %613, %613 : vector<16x128xf32>
    %cst_331 = arith.constant dense<0.000000e+00> : vector<16xf32>
    %619 = vector.multi_reduction <add>, %618, %cst_331 [1] : vector<16x128xf32> to vector<16xf32>
    %620 = vector.shape_cast %619 : vector<16xf32> to vector<16x1xf32>
    %cst_332 = arith.constant 7.812500e-03 : f32
    %621 = vector.broadcast %cst_332 : f32 to vector<16x1xf32>
    %622 = arith.mulf %617, %621 : vector<16x1xf32>
    %cst_333 = arith.constant 7.812500e-03 : f32
    %623 = vector.broadcast %cst_333 : f32 to vector<16x1xf32>
    %624 = arith.mulf %620, %623 : vector<16x1xf32>
    %625 = arith.mulf %622, %622 : vector<16x1xf32>
    %626 = arith.subf %624, %625 : vector<16x1xf32>
    %627 = vector.broadcast %622 : vector<16x1xf32> to vector<16x128xf32>
    %628 = arith.subf %613, %627 : vector<16x128xf32>
    %cst_334 = arith.constant 9.99999974E-6 : f32
    %629 = vector.broadcast %cst_334 : f32 to vector<16x1xf32>
    %630 = arith.addf %626, %629 : vector<16x1xf32>
    %631 = math.rsqrt %630 : vector<16x1xf32>
    %632 = vector.broadcast %631 : vector<16x1xf32> to vector<16x128xf32>
    %633 = arith.mulf %628, %632 : vector<16x128xf32>
    %634 = vector.broadcast %614 : vector<1x128xf32> to vector<16x128xf32>
    %635 = arith.mulf %633, %634 : vector<16x128xf32>
    %636 = vector.broadcast %615 : vector<1x128xf32> to vector<16x128xf32>
    %637 = arith.addf %635, %636 : vector<16x128xf32>
    %638 = arith.addf %637, %435 : vector<16x128xf32>
    %cst_335 = arith.constant 0.000000e+00 : f32
    %639 = vector.broadcast %cst_335 : f32 to vector<16x128xf32>
    %640 = arith.maximumf %638, %639 : vector<16x128xf32>
    %c17_i32_336 = arith.constant 17 : i32
    %641 = tpu.dynamic_rotate %640 by %c17_i32_336 dim 1 : vector<16x128xf32>, i32 -> vector<16x128xf32>
    %642 = vector.shape_cast %641 : vector<16x128xf32> to vector<2x8x128xf32>
    %c3_337 = arith.constant 3 : index
    %c0_338 = arith.constant 0 : index
    %c0_339 = arith.constant 0 : index
    %c0_340 = arith.constant 0 : index
    %643 = vector.load %arg4[%c3_337, %c0_338, %c0_339, %c0_340] : memref<4x9x8x128xf32, #tpu.memory_space<vmem>>, vector<1x1x8x128xf32>
    %644 = vector.shape_cast %643 : vector<1x1x8x128xf32> to vector<8x128xf32>
    %645 = vector.shape_cast %644 : vector<8x128xf32> to vector<1x8x128xf32>
    %646 = vector.broadcast %645 : vector<1x8x128xf32> to vector<2x8x128xf32>
    %647 = arith.mulf %642, %646 : vector<2x8x128xf32>
    %c16_i32_341 = arith.constant 16 : i32
    %648 = tpu.dynamic_rotate %640 by %c16_i32_341 dim 1 : vector<16x128xf32>, i32 -> vector<16x128xf32>
    %649 = vector.shape_cast %648 : vector<16x128xf32> to vector<2x8x128xf32>
    %c3_342 = arith.constant 3 : index
    %c1_343 = arith.constant 1 : index
    %c0_344 = arith.constant 0 : index
    %c0_345 = arith.constant 0 : index
    %650 = vector.load %arg4[%c3_342, %c1_343, %c0_344, %c0_345] : memref<4x9x8x128xf32, #tpu.memory_space<vmem>>, vector<1x1x8x128xf32>
    %651 = vector.shape_cast %650 : vector<1x1x8x128xf32> to vector<8x128xf32>
    %652 = vector.shape_cast %651 : vector<8x128xf32> to vector<1x8x128xf32>
    %653 = vector.broadcast %652 : vector<1x8x128xf32> to vector<2x8x128xf32>
    %654 = arith.mulf %649, %653 : vector<2x8x128xf32>
    %c15_i32_346 = arith.constant 15 : i32
    %655 = tpu.dynamic_rotate %640 by %c15_i32_346 dim 1 : vector<16x128xf32>, i32 -> vector<16x128xf32>
    %656 = vector.shape_cast %655 : vector<16x128xf32> to vector<2x8x128xf32>
    %c3_347 = arith.constant 3 : index
    %c2_348 = arith.constant 2 : index
    %c0_349 = arith.constant 0 : index
    %c0_350 = arith.constant 0 : index
    %657 = vector.load %arg4[%c3_347, %c2_348, %c0_349, %c0_350] : memref<4x9x8x128xf32, #tpu.memory_space<vmem>>, vector<1x1x8x128xf32>
    %658 = vector.shape_cast %657 : vector<1x1x8x128xf32> to vector<8x128xf32>
    %659 = vector.shape_cast %658 : vector<8x128xf32> to vector<1x8x128xf32>
    %660 = vector.broadcast %659 : vector<1x8x128xf32> to vector<2x8x128xf32>
    %661 = arith.mulf %656, %660 : vector<2x8x128xf32>
    %c1_i32_351 = arith.constant 1 : i32
    %662 = tpu.dynamic_rotate %640 by %c1_i32_351 dim 1 : vector<16x128xf32>, i32 -> vector<16x128xf32>
    %663 = vector.shape_cast %662 : vector<16x128xf32> to vector<2x8x128xf32>
    %c3_352 = arith.constant 3 : index
    %c3_353 = arith.constant 3 : index
    %c0_354 = arith.constant 0 : index
    %c0_355 = arith.constant 0 : index
    %664 = vector.load %arg4[%c3_352, %c3_353, %c0_354, %c0_355] : memref<4x9x8x128xf32, #tpu.memory_space<vmem>>, vector<1x1x8x128xf32>
    %665 = vector.shape_cast %664 : vector<1x1x8x128xf32> to vector<8x128xf32>
    %666 = vector.shape_cast %665 : vector<8x128xf32> to vector<1x8x128xf32>
    %667 = vector.broadcast %666 : vector<1x8x128xf32> to vector<2x8x128xf32>
    %668 = arith.mulf %663, %667 : vector<2x8x128xf32>
    %669 = arith.addf %647, %668 : vector<2x8x128xf32>
    %670 = vector.shape_cast %640 : vector<16x128xf32> to vector<2x8x128xf32>
    %c3_356 = arith.constant 3 : index
    %c4_357 = arith.constant 4 : index
    %c0_358 = arith.constant 0 : index
    %c0_359 = arith.constant 0 : index
    %671 = vector.load %arg4[%c3_356, %c4_357, %c0_358, %c0_359] : memref<4x9x8x128xf32, #tpu.memory_space<vmem>>, vector<1x1x8x128xf32>
    %672 = vector.shape_cast %671 : vector<1x1x8x128xf32> to vector<8x128xf32>
    %673 = vector.shape_cast %672 : vector<8x128xf32> to vector<1x8x128xf32>
    %674 = vector.broadcast %673 : vector<1x8x128xf32> to vector<2x8x128xf32>
    %675 = arith.mulf %670, %674 : vector<2x8x128xf32>
    %676 = arith.addf %654, %675 : vector<2x8x128xf32>
    %c127_i32_360 = arith.constant 127 : i32
    %677 = tpu.dynamic_rotate %640 by %c127_i32_360 dim 1 : vector<16x128xf32>, i32 -> vector<16x128xf32>
    %678 = vector.shape_cast %677 : vector<16x128xf32> to vector<2x8x128xf32>
    %c3_361 = arith.constant 3 : index
    %c5_362 = arith.constant 5 : index
    %c0_363 = arith.constant 0 : index
    %c0_364 = arith.constant 0 : index
    %679 = vector.load %arg4[%c3_361, %c5_362, %c0_363, %c0_364] : memref<4x9x8x128xf32, #tpu.memory_space<vmem>>, vector<1x1x8x128xf32>
    %680 = vector.shape_cast %679 : vector<1x1x8x128xf32> to vector<8x128xf32>
    %681 = vector.shape_cast %680 : vector<8x128xf32> to vector<1x8x128xf32>
    %682 = vector.broadcast %681 : vector<1x8x128xf32> to vector<2x8x128xf32>
    %683 = arith.mulf %678, %682 : vector<2x8x128xf32>
    %684 = arith.addf %661, %683 : vector<2x8x128xf32>
    %c113_i32_365 = arith.constant 113 : i32
    %685 = tpu.dynamic_rotate %640 by %c113_i32_365 dim 1 : vector<16x128xf32>, i32 -> vector<16x128xf32>
    %686 = vector.shape_cast %685 : vector<16x128xf32> to vector<2x8x128xf32>
    %c3_366 = arith.constant 3 : index
    %c6_367 = arith.constant 6 : index
    %c0_368 = arith.constant 0 : index
    %c0_369 = arith.constant 0 : index
    %687 = vector.load %arg4[%c3_366, %c6_367, %c0_368, %c0_369] : memref<4x9x8x128xf32, #tpu.memory_space<vmem>>, vector<1x1x8x128xf32>
    %688 = vector.shape_cast %687 : vector<1x1x8x128xf32> to vector<8x128xf32>
    %689 = vector.shape_cast %688 : vector<8x128xf32> to vector<1x8x128xf32>
    %690 = vector.broadcast %689 : vector<1x8x128xf32> to vector<2x8x128xf32>
    %691 = arith.mulf %686, %690 : vector<2x8x128xf32>
    %692 = arith.addf %669, %691 : vector<2x8x128xf32>
    %c112_i32_370 = arith.constant 112 : i32
    %693 = tpu.dynamic_rotate %640 by %c112_i32_370 dim 1 : vector<16x128xf32>, i32 -> vector<16x128xf32>
    %694 = vector.shape_cast %693 : vector<16x128xf32> to vector<2x8x128xf32>
    %c3_371 = arith.constant 3 : index
    %c7_372 = arith.constant 7 : index
    %c0_373 = arith.constant 0 : index
    %c0_374 = arith.constant 0 : index
    %695 = vector.load %arg4[%c3_371, %c7_372, %c0_373, %c0_374] : memref<4x9x8x128xf32, #tpu.memory_space<vmem>>, vector<1x1x8x128xf32>
    %696 = vector.shape_cast %695 : vector<1x1x8x128xf32> to vector<8x128xf32>
    %697 = vector.shape_cast %696 : vector<8x128xf32> to vector<1x8x128xf32>
    %698 = vector.broadcast %697 : vector<1x8x128xf32> to vector<2x8x128xf32>
    %699 = arith.mulf %694, %698 : vector<2x8x128xf32>
    %700 = arith.addf %676, %699 : vector<2x8x128xf32>
    %c111_i32_375 = arith.constant 111 : i32
    %701 = tpu.dynamic_rotate %640 by %c111_i32_375 dim 1 : vector<16x128xf32>, i32 -> vector<16x128xf32>
    %702 = vector.shape_cast %701 : vector<16x128xf32> to vector<2x8x128xf32>
    %c3_376 = arith.constant 3 : index
    %c8_377 = arith.constant 8 : index
    %c0_378 = arith.constant 0 : index
    %c0_379 = arith.constant 0 : index
    %703 = vector.load %arg4[%c3_376, %c8_377, %c0_378, %c0_379] : memref<4x9x8x128xf32, #tpu.memory_space<vmem>>, vector<1x1x8x128xf32>
    %704 = vector.shape_cast %703 : vector<1x1x8x128xf32> to vector<8x128xf32>
    %705 = vector.shape_cast %704 : vector<8x128xf32> to vector<1x8x128xf32>
    %706 = vector.broadcast %705 : vector<1x8x128xf32> to vector<2x8x128xf32>
    %707 = arith.mulf %702, %706 : vector<2x8x128xf32>
    %708 = arith.addf %684, %707 : vector<2x8x128xf32>
    %709 = arith.addf %692, %700 : vector<2x8x128xf32>
    %710 = arith.addf %709, %708 : vector<2x8x128xf32>
    %c3_380 = arith.constant 3 : index
    %c0_381 = arith.constant 0 : index
    %c0_382 = arith.constant 0 : index
    %711 = vector.load %arg5[%c3_380, %c0_381, %c0_382] : memref<4x8x128xf32, #tpu.memory_space<vmem>>, vector<1x8x128xf32>
    %712 = vector.shape_cast %711 : vector<1x8x128xf32> to vector<8x128xf32>
    %713 = vector.shape_cast %712 : vector<8x128xf32> to vector<1x8x128xf32>
    %714 = vector.broadcast %713 : vector<1x8x128xf32> to vector<2x8x128xf32>
    %715 = arith.addf %710, %714 : vector<2x8x128xf32>
    %716 = vector.shape_cast %715 : vector<2x8x128xf32> to vector<16x128xf32>
    %c3_383 = arith.constant 3 : index
    %c0_384 = arith.constant 0 : index
    %717 = vector.load %arg6[%c3_383, %c0_384] : memref<4x128xf32, #tpu.memory_space<vmem>>, vector<1x128xf32>
    %c3_385 = arith.constant 3 : index
    %c0_386 = arith.constant 0 : index
    %718 = vector.load %arg7[%c3_385, %c0_386] : memref<4x128xf32, #tpu.memory_space<vmem>>, vector<1x128xf32>
    %cst_387 = arith.constant dense<0.000000e+00> : vector<16xf32>
    %719 = vector.multi_reduction <add>, %716, %cst_387 [1] : vector<16x128xf32> to vector<16xf32>
    %720 = vector.shape_cast %719 : vector<16xf32> to vector<16x1xf32>
    %721 = arith.mulf %716, %716 : vector<16x128xf32>
    %cst_388 = arith.constant dense<0.000000e+00> : vector<16xf32>
    %722 = vector.multi_reduction <add>, %721, %cst_388 [1] : vector<16x128xf32> to vector<16xf32>
    %723 = vector.shape_cast %722 : vector<16xf32> to vector<16x1xf32>
    %cst_389 = arith.constant 7.812500e-03 : f32
    %724 = vector.broadcast %cst_389 : f32 to vector<16x1xf32>
    %725 = arith.mulf %720, %724 : vector<16x1xf32>
    %cst_390 = arith.constant 7.812500e-03 : f32
    %726 = vector.broadcast %cst_390 : f32 to vector<16x1xf32>
    %727 = arith.mulf %723, %726 : vector<16x1xf32>
    %728 = arith.mulf %725, %725 : vector<16x1xf32>
    %729 = arith.subf %727, %728 : vector<16x1xf32>
    %730 = vector.broadcast %725 : vector<16x1xf32> to vector<16x128xf32>
    %731 = arith.subf %716, %730 : vector<16x128xf32>
    %cst_391 = arith.constant 9.99999974E-6 : f32
    %732 = vector.broadcast %cst_391 : f32 to vector<16x1xf32>
    %733 = arith.addf %729, %732 : vector<16x1xf32>
    %734 = math.rsqrt %733 : vector<16x1xf32>
    %735 = vector.broadcast %734 : vector<16x1xf32> to vector<16x128xf32>
    %736 = arith.mulf %731, %735 : vector<16x128xf32>
    %737 = vector.broadcast %717 : vector<1x128xf32> to vector<16x128xf32>
    %738 = arith.mulf %736, %737 : vector<16x128xf32>
    %739 = vector.broadcast %718 : vector<1x128xf32> to vector<16x128xf32>
    %740 = arith.addf %738, %739 : vector<16x128xf32>
    %cst_392 = arith.constant 0.000000e+00 : f32
    %741 = vector.broadcast %cst_392 : f32 to vector<16x128xf32>
    %742 = arith.maximumf %740, %741 : vector<16x128xf32>
    %c17_i32_393 = arith.constant 17 : i32
    %743 = tpu.dynamic_rotate %742 by %c17_i32_393 dim 1 : vector<16x128xf32>, i32 -> vector<16x128xf32>
    %744 = vector.shape_cast %743 : vector<16x128xf32> to vector<2x8x128xf32>
    %c3_394 = arith.constant 3 : index
    %c0_395 = arith.constant 0 : index
    %c0_396 = arith.constant 0 : index
    %c0_397 = arith.constant 0 : index
    %745 = vector.load %arg8[%c3_394, %c0_395, %c0_396, %c0_397] : memref<4x9x8x128xf32, #tpu.memory_space<vmem>>, vector<1x1x8x128xf32>
    %746 = vector.shape_cast %745 : vector<1x1x8x128xf32> to vector<8x128xf32>
    %747 = vector.shape_cast %746 : vector<8x128xf32> to vector<1x8x128xf32>
    %748 = vector.broadcast %747 : vector<1x8x128xf32> to vector<2x8x128xf32>
    %749 = arith.mulf %744, %748 : vector<2x8x128xf32>
    %c16_i32_398 = arith.constant 16 : i32
    %750 = tpu.dynamic_rotate %742 by %c16_i32_398 dim 1 : vector<16x128xf32>, i32 -> vector<16x128xf32>
    %751 = vector.shape_cast %750 : vector<16x128xf32> to vector<2x8x128xf32>
    %c3_399 = arith.constant 3 : index
    %c1_400 = arith.constant 1 : index
    %c0_401 = arith.constant 0 : index
    %c0_402 = arith.constant 0 : index
    %752 = vector.load %arg8[%c3_399, %c1_400, %c0_401, %c0_402] : memref<4x9x8x128xf32, #tpu.memory_space<vmem>>, vector<1x1x8x128xf32>
    %753 = vector.shape_cast %752 : vector<1x1x8x128xf32> to vector<8x128xf32>
    %754 = vector.shape_cast %753 : vector<8x128xf32> to vector<1x8x128xf32>
    %755 = vector.broadcast %754 : vector<1x8x128xf32> to vector<2x8x128xf32>
    %756 = arith.mulf %751, %755 : vector<2x8x128xf32>
    %c15_i32_403 = arith.constant 15 : i32
    %757 = tpu.dynamic_rotate %742 by %c15_i32_403 dim 1 : vector<16x128xf32>, i32 -> vector<16x128xf32>
    %758 = vector.shape_cast %757 : vector<16x128xf32> to vector<2x8x128xf32>
    %c3_404 = arith.constant 3 : index
    %c2_405 = arith.constant 2 : index
    %c0_406 = arith.constant 0 : index
    %c0_407 = arith.constant 0 : index
    %759 = vector.load %arg8[%c3_404, %c2_405, %c0_406, %c0_407] : memref<4x9x8x128xf32, #tpu.memory_space<vmem>>, vector<1x1x8x128xf32>
    %760 = vector.shape_cast %759 : vector<1x1x8x128xf32> to vector<8x128xf32>
    %761 = vector.shape_cast %760 : vector<8x128xf32> to vector<1x8x128xf32>
    %762 = vector.broadcast %761 : vector<1x8x128xf32> to vector<2x8x128xf32>
    %763 = arith.mulf %758, %762 : vector<2x8x128xf32>
    %c1_i32_408 = arith.constant 1 : i32
    %764 = tpu.dynamic_rotate %742 by %c1_i32_408 dim 1 : vector<16x128xf32>, i32 -> vector<16x128xf32>
    %765 = vector.shape_cast %764 : vector<16x128xf32> to vector<2x8x128xf32>
    %c3_409 = arith.constant 3 : index
    %c3_410 = arith.constant 3 : index
    %c0_411 = arith.constant 0 : index
    %c0_412 = arith.constant 0 : index
    %766 = vector.load %arg8[%c3_409, %c3_410, %c0_411, %c0_412] : memref<4x9x8x128xf32, #tpu.memory_space<vmem>>, vector<1x1x8x128xf32>
    %767 = vector.shape_cast %766 : vector<1x1x8x128xf32> to vector<8x128xf32>
    %768 = vector.shape_cast %767 : vector<8x128xf32> to vector<1x8x128xf32>
    %769 = vector.broadcast %768 : vector<1x8x128xf32> to vector<2x8x128xf32>
    %770 = arith.mulf %765, %769 : vector<2x8x128xf32>
    %771 = arith.addf %749, %770 : vector<2x8x128xf32>
    %772 = vector.shape_cast %742 : vector<16x128xf32> to vector<2x8x128xf32>
    %c3_413 = arith.constant 3 : index
    %c4_414 = arith.constant 4 : index
    %c0_415 = arith.constant 0 : index
    %c0_416 = arith.constant 0 : index
    %773 = vector.load %arg8[%c3_413, %c4_414, %c0_415, %c0_416] : memref<4x9x8x128xf32, #tpu.memory_space<vmem>>, vector<1x1x8x128xf32>
    %774 = vector.shape_cast %773 : vector<1x1x8x128xf32> to vector<8x128xf32>
    %775 = vector.shape_cast %774 : vector<8x128xf32> to vector<1x8x128xf32>
    %776 = vector.broadcast %775 : vector<1x8x128xf32> to vector<2x8x128xf32>
    %777 = arith.mulf %772, %776 : vector<2x8x128xf32>
    %778 = arith.addf %756, %777 : vector<2x8x128xf32>
    %c127_i32_417 = arith.constant 127 : i32
    %779 = tpu.dynamic_rotate %742 by %c127_i32_417 dim 1 : vector<16x128xf32>, i32 -> vector<16x128xf32>
    %780 = vector.shape_cast %779 : vector<16x128xf32> to vector<2x8x128xf32>
    %c3_418 = arith.constant 3 : index
    %c5_419 = arith.constant 5 : index
    %c0_420 = arith.constant 0 : index
    %c0_421 = arith.constant 0 : index
    %781 = vector.load %arg8[%c3_418, %c5_419, %c0_420, %c0_421] : memref<4x9x8x128xf32, #tpu.memory_space<vmem>>, vector<1x1x8x128xf32>
    %782 = vector.shape_cast %781 : vector<1x1x8x128xf32> to vector<8x128xf32>
    %783 = vector.shape_cast %782 : vector<8x128xf32> to vector<1x8x128xf32>
    %784 = vector.broadcast %783 : vector<1x8x128xf32> to vector<2x8x128xf32>
    %785 = arith.mulf %780, %784 : vector<2x8x128xf32>
    %786 = arith.addf %763, %785 : vector<2x8x128xf32>
    %c113_i32_422 = arith.constant 113 : i32
    %787 = tpu.dynamic_rotate %742 by %c113_i32_422 dim 1 : vector<16x128xf32>, i32 -> vector<16x128xf32>
    %788 = vector.shape_cast %787 : vector<16x128xf32> to vector<2x8x128xf32>
    %c3_423 = arith.constant 3 : index
    %c6_424 = arith.constant 6 : index
    %c0_425 = arith.constant 0 : index
    %c0_426 = arith.constant 0 : index
    %789 = vector.load %arg8[%c3_423, %c6_424, %c0_425, %c0_426] : memref<4x9x8x128xf32, #tpu.memory_space<vmem>>, vector<1x1x8x128xf32>
    %790 = vector.shape_cast %789 : vector<1x1x8x128xf32> to vector<8x128xf32>
    %791 = vector.shape_cast %790 : vector<8x128xf32> to vector<1x8x128xf32>
    %792 = vector.broadcast %791 : vector<1x8x128xf32> to vector<2x8x128xf32>
    %793 = arith.mulf %788, %792 : vector<2x8x128xf32>
    %794 = arith.addf %771, %793 : vector<2x8x128xf32>
    %c112_i32_427 = arith.constant 112 : i32
    %795 = tpu.dynamic_rotate %742 by %c112_i32_427 dim 1 : vector<16x128xf32>, i32 -> vector<16x128xf32>
    %796 = vector.shape_cast %795 : vector<16x128xf32> to vector<2x8x128xf32>
    %c3_428 = arith.constant 3 : index
    %c7_429 = arith.constant 7 : index
    %c0_430 = arith.constant 0 : index
    %c0_431 = arith.constant 0 : index
    %797 = vector.load %arg8[%c3_428, %c7_429, %c0_430, %c0_431] : memref<4x9x8x128xf32, #tpu.memory_space<vmem>>, vector<1x1x8x128xf32>
    %798 = vector.shape_cast %797 : vector<1x1x8x128xf32> to vector<8x128xf32>
    %799 = vector.shape_cast %798 : vector<8x128xf32> to vector<1x8x128xf32>
    %800 = vector.broadcast %799 : vector<1x8x128xf32> to vector<2x8x128xf32>
    %801 = arith.mulf %796, %800 : vector<2x8x128xf32>
    %802 = arith.addf %778, %801 : vector<2x8x128xf32>
    %c111_i32_432 = arith.constant 111 : i32
    %803 = tpu.dynamic_rotate %742 by %c111_i32_432 dim 1 : vector<16x128xf32>, i32 -> vector<16x128xf32>
    %804 = vector.shape_cast %803 : vector<16x128xf32> to vector<2x8x128xf32>
    %c3_433 = arith.constant 3 : index
    %c8_434 = arith.constant 8 : index
    %c0_435 = arith.constant 0 : index
    %c0_436 = arith.constant 0 : index
    %805 = vector.load %arg8[%c3_433, %c8_434, %c0_435, %c0_436] : memref<4x9x8x128xf32, #tpu.memory_space<vmem>>, vector<1x1x8x128xf32>
    %806 = vector.shape_cast %805 : vector<1x1x8x128xf32> to vector<8x128xf32>
    %807 = vector.shape_cast %806 : vector<8x128xf32> to vector<1x8x128xf32>
    %808 = vector.broadcast %807 : vector<1x8x128xf32> to vector<2x8x128xf32>
    %809 = arith.mulf %804, %808 : vector<2x8x128xf32>
    %810 = arith.addf %786, %809 : vector<2x8x128xf32>
    %811 = arith.addf %794, %802 : vector<2x8x128xf32>
    %812 = arith.addf %811, %810 : vector<2x8x128xf32>
    %c3_437 = arith.constant 3 : index
    %c0_438 = arith.constant 0 : index
    %c0_439 = arith.constant 0 : index
    %813 = vector.load %arg9[%c3_437, %c0_438, %c0_439] : memref<4x8x128xf32, #tpu.memory_space<vmem>>, vector<1x8x128xf32>
    %814 = vector.shape_cast %813 : vector<1x8x128xf32> to vector<8x128xf32>
    %815 = vector.shape_cast %814 : vector<8x128xf32> to vector<1x8x128xf32>
    %816 = vector.broadcast %815 : vector<1x8x128xf32> to vector<2x8x128xf32>
    %817 = arith.addf %812, %816 : vector<2x8x128xf32>
    %818 = vector.shape_cast %817 : vector<2x8x128xf32> to vector<16x128xf32>
    %c3_440 = arith.constant 3 : index
    %c0_441 = arith.constant 0 : index
    %819 = vector.load %arg10[%c3_440, %c0_441] : memref<4x128xf32, #tpu.memory_space<vmem>>, vector<1x128xf32>
    %c3_442 = arith.constant 3 : index
    %c0_443 = arith.constant 0 : index
    %820 = vector.load %arg11[%c3_442, %c0_443] : memref<4x128xf32, #tpu.memory_space<vmem>>, vector<1x128xf32>
    %cst_444 = arith.constant dense<0.000000e+00> : vector<16xf32>
    %821 = vector.multi_reduction <add>, %818, %cst_444 [1] : vector<16x128xf32> to vector<16xf32>
    %822 = vector.shape_cast %821 : vector<16xf32> to vector<16x1xf32>
    %823 = arith.mulf %818, %818 : vector<16x128xf32>
    %cst_445 = arith.constant dense<0.000000e+00> : vector<16xf32>
    %824 = vector.multi_reduction <add>, %823, %cst_445 [1] : vector<16x128xf32> to vector<16xf32>
    %825 = vector.shape_cast %824 : vector<16xf32> to vector<16x1xf32>
    %cst_446 = arith.constant 7.812500e-03 : f32
    %826 = vector.broadcast %cst_446 : f32 to vector<16x1xf32>
    %827 = arith.mulf %822, %826 : vector<16x1xf32>
    %cst_447 = arith.constant 7.812500e-03 : f32
    %828 = vector.broadcast %cst_447 : f32 to vector<16x1xf32>
    %829 = arith.mulf %825, %828 : vector<16x1xf32>
    %830 = arith.mulf %827, %827 : vector<16x1xf32>
    %831 = arith.subf %829, %830 : vector<16x1xf32>
    %832 = vector.broadcast %827 : vector<16x1xf32> to vector<16x128xf32>
    %833 = arith.subf %818, %832 : vector<16x128xf32>
    %cst_448 = arith.constant 9.99999974E-6 : f32
    %834 = vector.broadcast %cst_448 : f32 to vector<16x1xf32>
    %835 = arith.addf %831, %834 : vector<16x1xf32>
    %836 = math.rsqrt %835 : vector<16x1xf32>
    %837 = vector.broadcast %836 : vector<16x1xf32> to vector<16x128xf32>
    %838 = arith.mulf %833, %837 : vector<16x128xf32>
    %839 = vector.broadcast %819 : vector<1x128xf32> to vector<16x128xf32>
    %840 = arith.mulf %838, %839 : vector<16x128xf32>
    %841 = vector.broadcast %820 : vector<1x128xf32> to vector<16x128xf32>
    %842 = arith.addf %840, %841 : vector<16x128xf32>
    %843 = arith.addf %842, %640 : vector<16x128xf32>
    %cst_449 = arith.constant 0.000000e+00 : f32
    %844 = vector.broadcast %cst_449 : f32 to vector<16x128xf32>
    %845 = arith.maximumf %843, %844 : vector<16x128xf32>
    %c0_450 = arith.constant 0 : index
    %c0_451 = arith.constant 0 : index
    %846 = vector.load %arg12[%c0_450, %c0_451] : memref<128x32xf32, #tpu.memory_space<vmem>>, vector<128x32xf32>
    %cst_452 = arith.constant dense<0.000000e+00> : vector<16x32xf32>
    %847 = tpu.matmul %845, %846, %cst_452 {dimension_numbers = #tpu.dot_dimension_numbers<[1], [0], [0], [1], [0, 0, 1, 1], [], []>} : vector<16x128xf32>, vector<128x32xf32>, vector<16x32xf32> -> vector<16x32xf32>
    %c0_453 = arith.constant 0 : index
    %c0_454 = arith.constant 0 : index
    %848 = vector.load %arg13[%c0_453, %c0_454] : memref<1x32xf32, #tpu.memory_space<vmem>>, vector<1x32xf32>
    %849 = vector.broadcast %848 : vector<1x32xf32> to vector<16x32xf32>
    %850 = arith.addf %847, %849 : vector<16x32xf32>
    %cst_455 = arith.constant 0.000000e+00 : f32
    %851 = vector.broadcast %cst_455 : f32 to vector<16x32xf32>
    %852 = arith.maximumf %850, %851 : vector<16x32xf32>
    %c0_456 = arith.constant 0 : index
    %c0_457 = arith.constant 0 : index
    %853 = vector.load %arg14[%c0_456, %c0_457] : memref<1x32xf32, #tpu.memory_space<vmem>>, vector<1x32xf32>
    %854 = vector.broadcast %853 : vector<1x32xf32> to vector<16x32xf32>
    %855 = arith.mulf %852, %854 : vector<16x32xf32>
    %cst_458 = arith.constant dense<0.000000e+00> : vector<16xf32>
    %856 = vector.multi_reduction <add>, %855, %cst_458 [1] : vector<16x32xf32> to vector<16xf32>
    %857 = vector.shape_cast %856 : vector<16xf32> to vector<16x1xf32>
    %c0_459 = arith.constant 0 : index
    %c0_460 = arith.constant 0 : index
    %858 = vector.load %arg15[%c0_459, %c0_460] : memref<1x1xf32, #tpu.memory_space<vmem>>, vector<1x1xf32>
    %859 = vector.broadcast %858 : vector<1x1xf32> to vector<16x1xf32>
    %860 = arith.addf %857, %859 : vector<16x1xf32>
    %cst_461 = arith.constant 0.000000e+00 : f32
    %861 = vector.broadcast %cst_461 : f32 to vector<16x1xf32>
    %862 = arith.maximumf %860, %861 : vector<16x1xf32>
    %cst_462 = arith.constant 0.000000e+00 : f32
    %863 = vector.broadcast %cst_462 : f32 to vector<16x1xf32>
    %864 = arith.subf %863, %862 : vector<16x1xf32>
    %865 = math.exp %864 : vector<16x1xf32>
    %cst_463 = arith.constant 1.000000e+00 : f32
    %866 = vector.broadcast %cst_463 : f32 to vector<16x1xf32>
    %867 = arith.addf %866, %865 : vector<16x1xf32>
    %868 = tpu.reciprocal %867 : vector<16x1xf32> -> vector<16x1xf32>
    %869 = vector.shape_cast %868 : vector<16x1xf32> to vector<16x1xf32>
    %870 = vector.broadcast %869 : vector<16x1xf32> to vector<16x128xf32>
    %871 = vector.shape_cast %870 : vector<16x128xf32> to vector<2x8x128xf32>
    %c0_464 = arith.constant 0 : index
    %c0_465 = arith.constant 0 : index
    %c0_466 = arith.constant 0 : index
    %872 = vector.load %arg16[%c0_464, %c0_465, %c0_466] : memref<2x8x128xf32, #tpu.memory_space<vmem>>, vector<2x8x128xf32>
    tpu.vector_store %arg16[%c0_464, %c0_465, %c0_466], %871 {strides = array<i32>} : memref<2x8x128xf32, #tpu.memory_space<vmem>>, vector<2x8x128xf32>,
    return
  }
  func.func @transform_0(%arg0: i32) -> (i32, i32, i32) {
    %c0_i32 = arith.constant 0 : i32
    %c0_i32_0 = arith.constant 0 : i32
    %c0_i32_1 = arith.constant 0 : i32
    return %arg0, %c0_i32, %c0_i32_0 : i32, i32, i32
  }
  func.func @transform_1(%arg0: i32) -> (i32, i32) {
    %c0_i32 = arith.constant 0 : i32
    %c0_i32_0 = arith.constant 0 : i32
    %c0_i32_1 = arith.constant 0 : i32
    return %c0_i32, %c0_i32_0 : i32, i32
  }
  func.func @transform_2(%arg0: i32) -> (i32, i32) {
    %c0_i32 = arith.constant 0 : i32
    %c0_i32_0 = arith.constant 0 : i32
    %c0_i32_1 = arith.constant 0 : i32
    return %c0_i32, %c0_i32_0 : i32, i32
  }
  func.func @transform_3(%arg0: i32) -> (i32, i32, i32, i32) {
    %c0_i32 = arith.constant 0 : i32
    %c0_i32_0 = arith.constant 0 : i32
    %c0_i32_1 = arith.constant 0 : i32
    %c0_i32_2 = arith.constant 0 : i32
    %c0_i32_3 = arith.constant 0 : i32
    return %c0_i32, %c0_i32_0, %c0_i32_1, %c0_i32_2 : i32, i32, i32, i32
  }
  func.func @transform_4(%arg0: i32) -> (i32, i32, i32) {
    %c0_i32 = arith.constant 0 : i32
    %c0_i32_0 = arith.constant 0 : i32
    %c0_i32_1 = arith.constant 0 : i32
    %c0_i32_2 = arith.constant 0 : i32
    return %c0_i32, %c0_i32_0, %c0_i32_1 : i32, i32, i32
  }
  func.func @transform_5(%arg0: i32) -> (i32, i32) {
    %c0_i32 = arith.constant 0 : i32
    %c0_i32_0 = arith.constant 0 : i32
    %c0_i32_1 = arith.constant 0 : i32
    return %c0_i32, %c0_i32_0 : i32, i32
  }
  func.func @transform_6(%arg0: i32) -> (i32, i32) {
    %c0_i32 = arith.constant 0 : i32
    %c0_i32_0 = arith.constant 0 : i32
    %c0_i32_1 = arith.constant 0 : i32
    return %c0_i32, %c0_i32_0 : i32, i32
  }
  func.func @transform_7(%arg0: i32) -> (i32, i32, i32, i32) {
    %c0_i32 = arith.constant 0 : i32
    %c0_i32_0 = arith.constant 0 : i32
    %c0_i32_1 = arith.constant 0 : i32
    %c0_i32_2 = arith.constant 0 : i32
    %c0_i32_3 = arith.constant 0 : i32
    return %c0_i32, %c0_i32_0, %c0_i32_1, %c0_i32_2 : i32, i32, i32, i32
  }
  func.func @transform_8(%arg0: i32) -> (i32, i32, i32) {
    %c0_i32 = arith.constant 0 : i32
    %c0_i32_0 = arith.constant 0 : i32
    %c0_i32_1 = arith.constant 0 : i32
    %c0_i32_2 = arith.constant 0 : i32
    return %c0_i32, %c0_i32_0, %c0_i32_1 : i32, i32, i32
  }
  func.func @transform_9(%arg0: i32) -> (i32, i32) {
    %c0_i32 = arith.constant 0 : i32
    %c0_i32_0 = arith.constant 0 : i32
    %c0_i32_1 = arith.constant 0 : i32
    return %c0_i32, %c0_i32_0 : i32, i32
  }
  func.func @transform_10(%arg0: i32) -> (i32, i32) {
    %c0_i32 = arith.constant 0 : i32
    %c0_i32_0 = arith.constant 0 : i32
    %c0_i32_1 = arith.constant 0 : i32
    return %c0_i32, %c0_i32_0 : i32, i32
  }
  func.func @transform_11(%arg0: i32) -> (i32, i32) {
    %c0_i32 = arith.constant 0 : i32
    %c0_i32_0 = arith.constant 0 : i32
    %c0_i32_1 = arith.constant 0 : i32
    return %c0_i32, %c0_i32_0 : i32, i32
  }
  func.func @transform_12(%arg0: i32) -> (i32, i32) {
    %c0_i32 = arith.constant 0 : i32
    %c0_i32_0 = arith.constant 0 : i32
    %c0_i32_1 = arith.constant 0 : i32
    return %c0_i32, %c0_i32_0 : i32, i32
  }
  func.func @transform_13(%arg0: i32) -> (i32, i32) {
    %c0_i32 = arith.constant 0 : i32
    %c0_i32_0 = arith.constant 0 : i32
    %c0_i32_1 = arith.constant 0 : i32
    return %c0_i32, %c0_i32_0 : i32, i32
  }
  func.func @transform_14(%arg0: i32) -> (i32, i32) {
    %c0_i32 = arith.constant 0 : i32
    %c0_i32_0 = arith.constant 0 : i32
    %c0_i32_1 = arith.constant 0 : i32
    return %c0_i32, %c0_i32_0 : i32, i32
  }
  func.func @transform_15(%arg0: i32) -> (i32, i32, i32) {
    %c0_i32 = arith.constant 0 : i32
    %c0_i32_0 = arith.constant 0 : i32
    %c0_i32_1 = arith.constant 0 : i32
    return %arg0, %c0_i32, %c0_i32_0 : i32, i32, i32
  }
}

</mosaic_0001>

<llo_original>
// kernel: _router_forward.1
$region0: #{_router_forward.1}
  #allocation0 [shape = 'u32[]', space=smem, size = 0x4, offset = 0x4, fixed_abs, tag = 'smem constant byte address 0x4 - core index']
  #allocation1 [shape = 'u32[72,128]{1,0:T(1,128)}', space=vmem, size = 0x9000, scoped, tag = 'internal scratch']
  #allocation2 [shape = 'f32[1,1]{1,0:T(1,128)S(1)}', space=vmem, size = 0x200, scoped, tag = 'scoped memory for _router_forward.1']
  %s0 = inlined_call_operand.vmem [shape: f32[2,8,128], index: 0, kind: input, shape index: {}]
  %s1 = inlined_call_operand.vmem [shape: f32[1,128], index: 1, kind: input, shape index: {}]
  %s2 = inlined_call_operand.vmem [shape: f32[1,128], index: 2, kind: input, shape index: {}]
  %s3 = inlined_call_operand.hbm [shape: f32[4,9,8,128], index: 3, kind: input, shape index: {}]
  %s4 = inlined_call_operand.vmem [shape: f32[4,8,128], index: 4, kind: input, shape index: {}]
  %s5 = inlined_call_operand.vmem [shape: f32[4,128], index: 5, kind: input, shape index: {}]
  %s6 = inlined_call_operand.vmem [shape: f32[4,128], index: 6, kind: input, shape index: {}]
  %s7 = inlined_call_operand.hbm [shape: f32[4,9,8,128], index: 7, kind: input, shape index: {}]
  %s8 = inlined_call_operand.vmem [shape: f32[4,8,128], index: 8, kind: input, shape index: {}]
  %s9 = inlined_call_operand.vmem [shape: f32[4,128], index: 9, kind: input, shape index: {}]
  %s10 = inlined_call_operand.vmem [shape: f32[4,128], index: 10, kind: input, shape index: {}]
  %s11 = inlined_call_operand.vmem [shape: f32[128,32], index: 11, kind: input, shape index: {}]
  %s12 = inlined_call_operand.vmem [shape: f32[1,32], index: 12, kind: input, shape index: {}]
  %s13 = inlined_call_operand.vmem [shape: f32[1,32], index: 13, kind: input, shape index: {}]
  %s14 = inlined_call_operand.<no memory space> [shape: f32[1,1], index: 14, kind: input, shape index: {}]
  %s15 = inlined_call_operand.vmem [shape: f32[2,8,128], index: 15, kind: output, shape index: {}]
  %s16 = sld [smem:[#allocation0]]
  $region78: #{_router_forward.1} parent=0
    _
  %s18 = ssub.s32 1, %s16
  %s19 = scalar_select 0, %s18, %s16
  %v20 = vstv %s14
  %21 = vst [vmem:[#allocation2] sm:$0x1] %v20
  $region1: #{_router_forward.1} parent=0
    #allocation3 [shape = 'u8[147456]{0}', space=vmem, size = 0x24000, scoped, tag = 'input window, operand 3, single buffered']
    #allocation4 [shape = 's32[1]{0}', space=sflag, size = 0x4, scoped, tag = 'scoped memory for _router_forward.1']
    #allocation5 [shape = 'u8[147456]{0}', space=vmem, size = 0x24000, scoped, tag = 'input window, operand 7, single buffered']
    #allocation6 [shape = 's32[1]{0}', space=sflag, size = 0x4, scoped, tag = 'scoped memory for _router_forward.1']
    %22 = vsyncpa [#allocation4], 0
    %23 = vsyncpa [#allocation6], 0
    // Predicated region
    $region2: #{_router_forward.1} parent=1 // pred_check
      _
    $region3: #{_router_forward.1} parent=1 // pred_check_branch
      %25 = sbr.rel (0) target = $region5
    $region4: #{_router_forward.1} parent=1 // pred_region
      _
    $region5: #{_router_forward.1} parent=1 // pred_fallthru
      _
    // Predicated region
    $region6: #{_router_forward.1} parent=1 // pred_check
      _
    $region7: #{_router_forward.1} parent=1 // pred_check_branch
      %27 = sbr.rel (0) target = $region9
    $region8: #{_router_forward.1} parent=1 // pred_region
      _
    $region9: #{_router_forward.1} parent=1 // pred_fallthru
      _
    // Predicated region
    $region10: #{_router_forward.1} parent=1 // pred_check
      _
    $region11: #{_router_forward.1} parent=1 // pred_check_branch
      %29 = sbr.rel (0) target = $region13
    $region12: #{_router_forward.1} parent=1 // pred_region
      _
    $region13: #{_router_forward.1} parent=1 // pred_fallthru
      _
    // Predicated region
    $region14: #{_router_forward.1} parent=1 // pred_check
      _
    $region15: #{_router_forward.1} parent=1 // pred_check_branch
      %31 = sbr.rel (0) target = $region17
    $region16: #{_router_forward.1} parent=1 // pred_region
      %33 = vsyncadd [#allocation4], 0
      %s34 = sshll.u32 %s3, 4
      %s35 = int_to_ptr.hbm [resolvable:$true] %s34
      %s36 = sshll.u32 [#allocation3], 4
      %s37 = int_to_ptr.vmem [resolvable:$true] %s36
      %42 = dma.hbm_to_vmem [thread:$0]  %s35, 4608, %s37, [#allocation4], 128, 128, 8
    $region17: #{_router_forward.1} parent=1 // pred_fallthru
      _
    // Predicated region
    $region18: #{_router_forward.1} parent=1 // pred_check
      _
    $region19: #{_router_forward.1} parent=1 // pred_check_branch
      %44 = sbr.rel (0) target = $region21
    $region20: #{_router_forward.1} parent=1 // pred_region
      _
    $region21: #{_router_forward.1} parent=1 // pred_fallthru
      _
    // Predicated region
    $region22: #{_router_forward.1} parent=1 // pred_check
      _
    $region23: #{_router_forward.1} parent=1 // pred_check_branch
      %46 = sbr.rel (0) target = $region25
    $region24: #{_router_forward.1} parent=1 // pred_region
      _
    $region25: #{_router_forward.1} parent=1 // pred_fallthru
      _
    // Predicated region
    $region26: #{_router_forward.1} parent=1 // pred_check
      _
    $region27: #{_router_forward.1} parent=1 // pred_check_branch
      %48 = sbr.rel (0) target = $region29
    $region28: #{_router_forward.1} parent=1 // pred_region
      _
    $region29: #{_router_forward.1} parent=1 // pred_fallthru
      _
    // Predicated region
    $region30: #{_router_forward.1} parent=1 // pred_check
      _
    $region31: #{_router_forward.1} parent=1 // pred_check_branch
      %50 = sbr.rel (0) target = $region33
    $region32: #{_router_forward.1} parent=1 // pred_region
      %52 = vsyncadd [#allocation6], 0
      %s53 = sshll.u32 %s7, 4
      %s54 = int_to_ptr.hbm [resolvable:$true] %s53
      %s55 = sshll.u32 [#allocation5], 4
      %s56 = int_to_ptr.vmem [resolvable:$true] %s55
      %61 = dma.hbm_to_vmem [thread:$0]  %s54, 4608, %s56, [#allocation6], 128, 128, 8
    $region33: #{_router_forward.1} parent=1 // pred_fallthru
      _
    // Predicated region
    $region34: #{_router_forward.1} parent=1 // pred_check
      _
    $region35: #{_router_forward.1} parent=1 // pred_check_branch
      %63 = sbr.rel (0) target = $region37
    $region36: #{_router_forward.1} parent=1 // pred_region
      _
    $region37: #{_router_forward.1} parent=1 // pred_fallthru
      _
    // Predicated region
    $region38: #{_router_forward.1} parent=1 // pred_check
      _
    $region39: #{_router_forward.1} parent=1 // pred_check_branch
      %65 = sbr.rel (0) target = $region41
    $region40: #{_router_forward.1} parent=1 // pred_region
      _
    $region41: #{_router_forward.1} parent=1 // pred_fallthru
      _
    // Predicated region
    $region42: #{_router_forward.1} parent=1 // pred_check
      _
    $region43: #{_router_forward.1} parent=1 // pred_check_branch
      %67 = sbr.rel (0) target = $region45
    $region44: #{_router_forward.1} parent=1 // pred_region
      _
    $region45: #{_router_forward.1} parent=1 // pred_fallthru
      _
    // Predicated region
    $region46: #{_router_forward.1} parent=1 // pred_check
      _
    $region47: #{_router_forward.1} parent=1 // pred_check_branch
      %69 = sbr.rel (0) target = $region49
    $region48: #{_router_forward.1} parent=1 // pred_region
      _
    $region49: #{_router_forward.1} parent=1 // pred_fallthru
      _
    // Predicated region
    $region50: #{_router_forward.1} parent=1 // pred_check
      _
    $region51: #{_router_forward.1} parent=1 // pred_check_branch
      %71 = sbr.rel (0) target = $region53
    $region52: #{_router_forward.1} parent=1 // pred_region
      _
    $region53: #{_router_forward.1} parent=1 // pred_fallthru
      _
    // Predicated region
    $region54: #{_router_forward.1} parent=1 // pred_check
      _
    $region55: #{_router_forward.1} parent=1 // pred_check_branch
      %73 = sbr.rel (0) target = $region57
    $region56: #{_router_forward.1} parent=1 // pred_region
      _
    $region57: #{_router_forward.1} parent=1 // pred_fallthru
      _
    // Predicated region
    $region58: #{_router_forward.1} parent=1 // pred_check
      _
    $region59: #{_router_forward.1} parent=1 // pred_check_branch
      %75 = sbr.rel (0) target = $region61
    $region60: #{_router_forward.1} parent=1 // pred_region
      _
    $region61: #{_router_forward.1} parent=1 // pred_fallthru
      _
    // Predicated region
    $region62: #{_router_forward.1} parent=1 // pred_check
      _
    $region63: #{_router_forward.1} parent=1 // pred_check_branch
      %77 = sbr.rel (0) target = $region65
    $region64: #{_router_forward.1} parent=1 // pred_region
      %79 = dma.done [#allocation4], 4608
    $region65: #{_router_forward.1} parent=1 // pred_fallthru
      _
    // Predicated region
    $region66: #{_router_forward.1} parent=1 // pred_check
      _
    $region67: #{_router_forward.1} parent=1 // pred_check_branch
      %81 = sbr.rel (0) target = $region69
    $region68: #{_router_forward.1} parent=1 // pred_region
      %83 = dma.done [#allocation6], 4608
    $region69: #{_router_forward.1} parent=1 // pred_fallthru
      _
    %v84 = vld [vmem:[%s0] sm:$0xff]
    %v85 = vld [vmem:[%s0 + $0x8] sm:$0xff]
    %v86 = vld [vmem:[%s1] sm:$0x1]
    %v87 = vld [vmem:[%s2] sm:$0x1]
    %88 = vadd.xlane.f32.xlu0 %v84
    %v89 = vpop.xlane.xlu0 %88
    %90 = vadd.xlane.f32.xlu0 %v85
    %v91 = vpop.xlane.xlu0 %90
    %v92 = vmul.f32 %v84, %v84
    %v93 = vmul.f32 %v85, %v85
    %94 = vadd.xlane.f32.xlu0 %v92
    %v95 = vpop.xlane.xlu0 %94
    %96 = vadd.xlane.f32.xlu0 %v93
    %v97 = vpop.xlane.xlu0 %96
    %v98 = vmul.f32 %v89, 0.0078125
    %v99 = vmul.f32 %v91, 0.0078125
    %v100 = vmul.f32 %v95, 0.0078125
    %v101 = vmul.f32 %v97, 0.0078125
    %v102 = vmul.f32 %v98, %v98
    %v103 = vmul.f32 %v99, %v99
    %v104 = vsub.f32 %v100, %v102
    %v105 = vsub.f32 %v101, %v103
    %v106 = vsub.f32 %v84, %v98
    %v107 = vsub.f32 %v85, %v99
    %v108 = vadd.f32 %v104, 1e-05
    %v109 = vadd.f32 %v105, 1e-05
    %v110 = vrsqrt.pop %v108
    %v111 = vmul.f32 %v110, %v108
    %v112 = vmul.f32 %v111, %v110
    %v113 = vmul.f32 0.5, %v112
    %v114 = vsub.f32 1.5, %v113
    %v115 = vmul.f32 %v110, %v114
    %vm116 = vweird.f32 %v108
    %vm117 = vweird.f32 %v110
    %vm118 = vmor %vm116, %vm117
    %v119 = vsel %vm118, %v110, %v115
    %v120 = vrsqrt.pop %v109
    %v121 = vmul.f32 %v120, %v109
    %v122 = vmul.f32 %v121, %v120
    %v123 = vmul.f32 0.5, %v122
    %v124 = vsub.f32 1.5, %v123
    %v125 = vmul.f32 %v120, %v124
    %vm126 = vweird.f32 %v109
    %vm127 = vweird.f32 %v120
    %vm128 = vmor %vm126, %vm127
    %v129 = vsel %vm128, %v120, %v125
    %v130 = vmul.f32 %v106, %v119
    %v131 = vmul.f32 %v107, %v129
    %v133 = vperm.slane %v86, 0
    %v135 = vmul.f32 %v130, %v133
    %v136 = vmul.f32 %v131, %v133
    %v138 = vperm.slane %v87, 0
    %v140 = vadd.f32 %v135, %v138
    %v141 = vadd.f32 %v136, %v138
    %142 = vrot.lane.b32.xlu0 %v140, 17
    %v143 = vpop.permute.xlu0 %142
    %144 = vrot.lane.b32.xlu0 %v141, 17
    %v145 = vpop.permute.xlu0 %144
    %v146 = vld [vmem:[#allocation3] sm:$0xff]
    %v147 = vmul.f32 %v143, %v146
    %v148 = vmul.f32 %v145, %v146
    %149 = vrot.lane.b32.xlu0 %v140, 16
    %v150 = vpop.permute.xlu0 %149
    %151 = vrot.lane.b32.xlu0 %v141, 16
    %v152 = vpop.permute.xlu0 %151
    %s153 = scalar_lea.vmem [#allocation3], 8
    %v154 = vld [vmem:[%s153] sm:$0xff]
    %v155 = vmul.f32 %v150, %v154
    %v156 = vmul.f32 %v152, %v154
    %157 = vrot.lane.b32.xlu0 %v140, 15
    %v158 = vpop.permute.xlu0 %157
    %159 = vrot.lane.b32.xlu0 %v141, 15
    %v160 = vpop.permute.xlu0 %159
    %s161 = scalar_lea.vmem [#allocation3], 16
    %v162 = vld [vmem:[%s161] sm:$0xff]
    %v163 = vmul.f32 %v158, %v162
    %v164 = vmul.f32 %v160, %v162
    %165 = vrot.lane.b32.xlu0 %v140, 1
    %v166 = vpop.permute.xlu0 %165
    %167 = vrot.lane.b32.xlu0 %v141, 1
    %v168 = vpop.permute.xlu0 %167
    %s169 = scalar_lea.vmem [#allocation3], 24
    %v170 = vld [vmem:[%s169] sm:$0xff]
    %v171 = vmul.f32 %v166, %v170
    %v172 = vmul.f32 %v168, %v170
    %v173 = vadd.f32 %v147, %v171
    %v174 = vadd.f32 %v148, %v172
    %s175 = scalar_lea.vmem [#allocation3], 32
    %v176 = vld [vmem:[%s175] sm:$0xff]
    %v177 = vmul.f32 %v140, %v176
    %v178 = vmul.f32 %v141, %v176
    %v179 = vadd.f32 %v155, %v177
    %v180 = vadd.f32 %v156, %v178
    %181 = vrot.lane.b32.xlu0 %v140, 127
    %v182 = vpop.permute.xlu0 %181
    %183 = vrot.lane.b32.xlu0 %v141, 127
    %v184 = vpop.permute.xlu0 %183
    %s185 = scalar_lea.vmem [#allocation3], 40
    %v186 = vld [vmem:[%s185] sm:$0xff]
    %v187 = vmul.f32 %v182, %v186
    %v188 = vmul.f32 %v184, %v186
    %v189 = vadd.f32 %v163, %v187
    %v190 = vadd.f32 %v164, %v188
    %191 = vrot.lane.b32.xlu0 %v140, 113
    %v192 = vpop.permute.xlu0 %191
    %193 = vrot.lane.b32.xlu0 %v141, 113
    %v194 = vpop.permute.xlu0 %193
    %s195 = scalar_lea.vmem [#allocation3], 48
    %v196 = vld [vmem:[%s195] sm:$0xff]
    %v197 = vmul.f32 %v192, %v196
    %v198 = vmul.f32 %v194, %v196
    %v199 = vadd.f32 %v173, %v197
    %v200 = vadd.f32 %v174, %v198
    %201 = vrot.lane.b32.xlu0 %v140, 112
    %v202 = vpop.permute.xlu0 %201
    %203 = vrot.lane.b32.xlu0 %v141, 112
    %v204 = vpop.permute.xlu0 %203
    %s205 = scalar_lea.vmem [#allocation3], 56
    %v206 = vld [vmem:[%s205] sm:$0xff]
    %v207 = vmul.f32 %v202, %v206
    %v208 = vmul.f32 %v204, %v206
    %v209 = vadd.f32 %v179, %v207
    %v210 = vadd.f32 %v180, %v208
    %211 = vrot.lane.b32.xlu0 %v140, 111
    %v212 = vpop.permute.xlu0 %211
    %213 = vrot.lane.b32.xlu0 %v141, 111
    %v214 = vpop.permute.xlu0 %213
    %s215 = scalar_lea.vmem [#allocation3], 64
    %v216 = vld [vmem:[%s215] sm:$0xff]
    %v217 = vmul.f32 %v212, %v216
    %v218 = vmul.f32 %v214, %v216
    %v219 = vadd.f32 %v189, %v217
    %v220 = vadd.f32 %v190, %v218
    %v221 = vadd.f32 %v199, %v209
    %v222 = vadd.f32 %v200, %v210
    %v223 = vadd.f32 %v221, %v219
    %v224 = vadd.f32 %v222, %v220
    %v225 = vld [vmem:[%s4] sm:$0xff]
    %v226 = vadd.f32 %v223, %v225
    %v227 = vadd.f32 %v224, %v225
    %v228 = vld [vmem:[%s5] sm:$0x1]
    %v229 = vld [vmem:[%s6] sm:$0x1]
    %230 = vadd.xlane.f32.xlu0 %v226
    %v231 = vpop.xlane.xlu0 %230
    %232 = vadd.xlane.f32.xlu0 %v227
    %v233 = vpop.xlane.xlu0 %232
    %v234 = vmul.f32 %v226, %v226
    %v235 = vmul.f32 %v227, %v227
    %236 = vadd.xlane.f32.xlu0 %v234
    %v237 = vpop.xlane.xlu0 %236
    %238 = vadd.xlane.f32.xlu0 %v235
    %v239 = vpop.xlane.xlu0 %238
    %v240 = vmul.f32 %v231, 0.0078125
    %v241 = vmul.f32 %v233, 0.0078125
    %v242 = vmul.f32 %v237, 0.0078125
    %v243 = vmul.f32 %v239, 0.0078125
    %v244 = vmul.f32 %v240, %v240
    %v245 = vmul.f32 %v241, %v241
    %v246 = vsub.f32 %v242, %v244
    %v247 = vsub.f32 %v243, %v245
    %v248 = vsub.f32 %v226, %v240
    %v249 = vsub.f32 %v227, %v241
    %v250 = vadd.f32 %v246, 1e-05
    %v251 = vadd.f32 %v247, 1e-05
    %v252 = vrsqrt.pop %v250
    %v253 = vmul.f32 %v252, %v250
    %v254 = vmul.f32 %v253, %v252
    %v255 = vmul.f32 0.5, %v254
    %v256 = vsub.f32 1.5, %v255
    %v257 = vmul.f32 %v252, %v256
    %vm258 = vweird.f32 %v250
    %vm259 = vweird.f32 %v252
    %vm260 = vmor %vm258, %vm259
    %v261 = vsel %vm260, %v252, %v257
    %v262 = vrsqrt.pop %v251
    %v263 = vmul.f32 %v262, %v251
    %v264 = vmul.f32 %v263, %v262
    %v265 = vmul.f32 0.5, %v264
    %v266 = vsub.f32 1.5, %v265
    %v267 = vmul.f32 %v262, %v266
    %vm268 = vweird.f32 %v251
    %vm269 = vweird.f32 %v262
    %vm270 = vmor %vm268, %vm269
    %v271 = vsel %vm270, %v262, %v267
    %v272 = vmul.f32 %v248, %v261
    %v273 = vmul.f32 %v249, %v271
    %v274 = vperm.slane %v228, 0
    %v275 = vmul.f32 %v272, %v274
    %v276 = vmul.f32 %v273, %v274
    %v277 = vperm.slane %v229, 0
    %v278 = vadd.f32 %v275, %v277
    %v279 = vadd.f32 %v276, %v277
    %v280 = vmax.f32 %v278, 0.0
    %v281 = vmax.f32 %v279, 0.0
    %282 = vrot.lane.b32.xlu0 %v280, 17
    %v283 = vpop.permute.xlu0 %282
    %284 = vrot.lane.b32.xlu0 %v281, 17
    %v285 = vpop.permute.xlu0 %284
    %v286 = vld [vmem:[#allocation5] sm:$0xff]
    %v287 = vmul.f32 %v283, %v286
    %v288 = vmul.f32 %v285, %v286
    %289 = vrot.lane.b32.xlu0 %v280, 16
    %v290 = vpop.permute.xlu0 %289
    %291 = vrot.lane.b32.xlu0 %v281, 16
    %v292 = vpop.permute.xlu0 %291
    %s293 = scalar_lea.vmem [#allocation5], 8
    %v294 = vld [vmem:[%s293] sm:$0xff]
    %v295 = vmul.f32 %v290, %v294
    %v296 = vmul.f32 %v292, %v294
    %297 = vrot.lane.b32.xlu0 %v280, 15
    %v298 = vpop.permute.xlu0 %297
    %299 = vrot.lane.b32.xlu0 %v281, 15
    %v300 = vpop.permute.xlu0 %299
    %s301 = scalar_lea.vmem [#allocation5], 16
    %v302 = vld [vmem:[%s301] sm:$0xff]
    %v303 = vmul.f32 %v298, %v302
    %v304 = vmul.f32 %v300, %v302
    %305 = vrot.lane.b32.xlu0 %v280, 1
    %v306 = vpop.permute.xlu0 %305
    %307 = vrot.lane.b32.xlu0 %v281, 1
    %v308 = vpop.permute.xlu0 %307
    %s309 = scalar_lea.vmem [#allocation5], 24
    %v310 = vld [vmem:[%s309] sm:$0xff]
    %v311 = vmul.f32 %v306, %v310
    %v312 = vmul.f32 %v308, %v310
    %v313 = vadd.f32 %v287, %v311
    %v314 = vadd.f32 %v288, %v312
    %s315 = scalar_lea.vmem [#allocation5], 32
    %v316 = vld [vmem:[%s315] sm:$0xff]
    %v317 = vmul.f32 %v280, %v316
    %v318 = vmul.f32 %v281, %v316
    %v319 = vadd.f32 %v295, %v317
    %v320 = vadd.f32 %v296, %v318
    %321 = vrot.lane.b32.xlu0 %v280, 127
    %v322 = vpop.permute.xlu0 %321
    %323 = vrot.lane.b32.xlu0 %v281, 127
    %v324 = vpop.permute.xlu0 %323
    %s325 = scalar_lea.vmem [#allocation5], 40
    %v326 = vld [vmem:[%s325] sm:$0xff]
    %v327 = vmul.f32 %v322, %v326
    %v328 = vmul.f32 %v324, %v326
    %v329 = vadd.f32 %v303, %v327
    %v330 = vadd.f32 %v304, %v328
    %331 = vrot.lane.b32.xlu0 %v280, 113
    %v332 = vpop.permute.xlu0 %331
    %333 = vrot.lane.b32.xlu0 %v281, 113
    %v334 = vpop.permute.xlu0 %333
    %s335 = scalar_lea.vmem [#allocation5], 48
    %v336 = vld [vmem:[%s335] sm:$0xff]
    %v337 = vmul.f32 %v332, %v336
    %v338 = vmul.f32 %v334, %v336
    %v339 = vadd.f32 %v313, %v337
    %v340 = vadd.f32 %v314, %v338
    %341 = vrot.lane.b32.xlu0 %v280, 112
    %v342 = vpop.permute.xlu0 %341
    %343 = vrot.lane.b32.xlu0 %v281, 112
    %v344 = vpop.permute.xlu0 %343
    %s345 = scalar_lea.vmem [#allocation5], 56
    %v346 = vld [vmem:[%s345] sm:$0xff]
    %v347 = vmul.f32 %v342, %v346
    %v348 = vmul.f32 %v344, %v346
    %v349 = vadd.f32 %v319, %v347
    %v350 = vadd.f32 %v320, %v348
    %351 = vrot.lane.b32.xlu0 %v280, 111
    %v352 = vpop.permute.xlu0 %351
    %353 = vrot.lane.b32.xlu0 %v281, 111
    %v354 = vpop.permute.xlu0 %353
    %s355 = scalar_lea.vmem [#allocation5], 64
    %v356 = vld [vmem:[%s355] sm:$0xff]
    %v357 = vmul.f32 %v352, %v356
    %v358 = vmul.f32 %v354, %v356
    %v359 = vadd.f32 %v329, %v357
    %v360 = vadd.f32 %v330, %v358
    %v361 = vadd.f32 %v339, %v349
    %v362 = vadd.f32 %v340, %v350
    %v363 = vadd.f32 %v361, %v359
    %v364 = vadd.f32 %v362, %v360
    %v365 = vld [vmem:[%s8] sm:$0xff]
    %v366 = vadd.f32 %v363, %v365
    %v367 = vadd.f32 %v364, %v365
    %v368 = vld [vmem:[%s9] sm:$0x1]
    %v369 = vld [vmem:[%s10] sm:$0x1]
    %370 = vadd.xlane.f32.xlu0 %v366
    %v371 = vpop.xlane.xlu0 %370
    %372 = vadd.xlane.f32.xlu0 %v367
    %v373 = vpop.xlane.xlu0 %372
    %v374 = vmul.f32 %v366, %v366
    %v375 = vmul.f32 %v367, %v367
    %376 = vadd.xlane.f32.xlu0 %v374
    %v377 = vpop.xlane.xlu0 %376
    %378 = vadd.xlane.f32.xlu0 %v375
    %v379 = vpop.xlane.xlu0 %378
    %v380 = vmul.f32 %v371, 0.0078125
    %v381 = vmul.f32 %v373, 0.0078125
    %v382 = vmul.f32 %v377, 0.0078125
    %v383 = vmul.f32 %v379, 0.0078125
    %v384 = vmul.f32 %v380, %v380
    %v385 = vmul.f32 %v381, %v381
    %v386 = vsub.f32 %v382, %v384
    %v387 = vsub.f32 %v383, %v385
    %v388 = vsub.f32 %v366, %v380
    %v389 = vsub.f32 %v367, %v381
    %v390 = vadd.f32 %v386, 1e-05
    %v391 = vadd.f32 %v387, 1e-05
    %v392 = vrsqrt.pop %v390
    %v393 = vmul.f32 %v392, %v390
    %v394 = vmul.f32 %v393, %v392
    %v395 = vmul.f32 0.5, %v394
    %v396 = vsub.f32 1.5, %v395
    %v397 = vmul.f32 %v392, %v396
    %vm398 = vweird.f32 %v390
    %vm399 = vweird.f32 %v392
    %vm400 = vmor %vm398, %vm399
    %v401 = vsel %vm400, %v392, %v397
    %v402 = vrsqrt.pop %v391
    %v403 = vmul.f32 %v402, %v391
    %v404 = vmul.f32 %v403, %v402
    %v405 = vmul.f32 0.5, %v404
    %v406 = vsub.f32 1.5, %v405
    %v407 = vmul.f32 %v402, %v406
    %vm408 = vweird.f32 %v391
    %vm409 = vweird.f32 %v402
    %vm410 = vmor %vm408, %vm409
    %v411 = vsel %vm410, %v402, %v407
    %v412 = vmul.f32 %v388, %v401
    %v413 = vmul.f32 %v389, %v411
    %v414 = vperm.slane %v368, 0
    %v415 = vmul.f32 %v412, %v414
    %v416 = vmul.f32 %v413, %v414
    %v417 = vperm.slane %v369, 0
    %v418 = vadd.f32 %v415, %v417
    %v419 = vadd.f32 %v416, %v417
    %v420 = vadd.f32 %v418, %v140
    %v421 = vadd.f32 %v419, %v141
    %v422 = vmax.f32 %v420, 0.0
    %v423 = vmax.f32 %v421, 0.0
    %424 = vrot.lane.b32.xlu0 %v422, 17
    %v425 = vpop.permute.xlu0 %424
    %426 = vrot.lane.b32.xlu0 %v423, 17
    %v427 = vpop.permute.xlu0 %426
    %s428 = scalar_lea.vmem [#allocation3], 72
    %v429 = vld [vmem:[%s428] sm:$0xff]
    %v430 = vmul.f32 %v425, %v429
    %v431 = vmul.f32 %v427, %v429
    %432 = vrot.lane.b32.xlu0 %v422, 16
    %v433 = vpop.permute.xlu0 %432
    %434 = vrot.lane.b32.xlu0 %v423, 16
    %v435 = vpop.permute.xlu0 %434
    %s436 = scalar_lea.vmem [#allocation3], 80
    %v437 = vld [vmem:[%s436] sm:$0xff]
    %v438 = vmul.f32 %v433, %v437
    %v439 = vmul.f32 %v435, %v437
    %440 = vrot.lane.b32.xlu0 %v422, 15
    %v441 = vpop.permute.xlu0 %440
    %442 = vrot.lane.b32.xlu0 %v423, 15
    %v443 = vpop.permute.xlu0 %442
    %s444 = scalar_lea.vmem [#allocation3], 88
    %v445 = vld [vmem:[%s444] sm:$0xff]
    %v446 = vmul.f32 %v441, %v445
    %v447 = vmul.f32 %v443, %v445
    %448 = vrot.lane.b32.xlu0 %v422, 1
    %v449 = vpop.permute.xlu0 %448
    %450 = vrot.lane.b32.xlu0 %v423, 1
    %v451 = vpop.permute.xlu0 %450
    %s452 = scalar_lea.vmem [#allocation3], 96
    %v453 = vld [vmem:[%s452] sm:$0xff]
    %v454 = vmul.f32 %v449, %v453
    %v455 = vmul.f32 %v451, %v453
    %v456 = vadd.f32 %v430, %v454
    %v457 = vadd.f32 %v431, %v455
    %s458 = scalar_lea.vmem [#allocation3], 104
    %v459 = vld [vmem:[%s458] sm:$0xff]
    %v460 = vmul.f32 %v422, %v459
    %v461 = vmul.f32 %v423, %v459
    %v462 = vadd.f32 %v438, %v460
    %v463 = vadd.f32 %v439, %v461
    %464 = vrot.lane.b32.xlu0 %v422, 127
    %v465 = vpop.permute.xlu0 %464
    %466 = vrot.lane.b32.xlu0 %v423, 127
    %v467 = vpop.permute.xlu0 %466
    %s468 = scalar_lea.vmem [#allocation3], 112
    %v469 = vld [vmem:[%s468] sm:$0xff]
    %v470 = vmul.f32 %v465, %v469
    %v471 = vmul.f32 %v467, %v469
    %v472 = vadd.f32 %v446, %v470
    %v473 = vadd.f32 %v447, %v471
    %474 = vrot.lane.b32.xlu0 %v422, 113
    %v475 = vpop.permute.xlu0 %474
    %476 = vrot.lane.b32.xlu0 %v423, 113
    %v477 = vpop.permute.xlu0 %476
    %s478 = scalar_lea.vmem [#allocation3], 120
    %v479 = vld [vmem:[%s478] sm:$0xff]
    %v480 = vmul.f32 %v475, %v479
    %v481 = vmul.f32 %v477, %v479
    %v482 = vadd.f32 %v456, %v480
    %v483 = vadd.f32 %v457, %v481
    %484 = vrot.lane.b32.xlu0 %v422, 112
    %v485 = vpop.permute.xlu0 %484
    %486 = vrot.lane.b32.xlu0 %v423, 112
    %v487 = vpop.permute.xlu0 %486
    %s488 = scalar_lea.vmem [#allocation3], 128
    %v489 = vld [vmem:[%s488] sm:$0xff]
    %v490 = vmul.f32 %v485, %v489
    %v491 = vmul.f32 %v487, %v489
    %v492 = vadd.f32 %v462, %v490
    %v493 = vadd.f32 %v463, %v491
    %494 = vrot.lane.b32.xlu0 %v422, 111
    %v495 = vpop.permute.xlu0 %494
    %496 = vrot.lane.b32.xlu0 %v423, 111
    %v497 = vpop.permute.xlu0 %496
    %s498 = scalar_lea.vmem [#allocation3], 136
    %v499 = vld [vmem:[%s498] sm:$0xff]
    %v500 = vmul.f32 %v495, %v499
    %v501 = vmul.f32 %v497, %v499
    %v502 = vadd.f32 %v472, %v500
    %v503 = vadd.f32 %v473, %v501
    %v504 = vadd.f32 %v482, %v492
    %v505 = vadd.f32 %v483, %v493
    %v506 = vadd.f32 %v504, %v502
    %v507 = vadd.f32 %v505, %v503
    %s508 = scalar_lea.vmem %s4, 8
    %v509 = vld [vmem:[%s508] sm:$0xff]
    %v510 = vadd.f32 %v506, %v509
    %v511 = vadd.f32 %v507, %v509
    %v512 = vld [vmem:[%s5 + $0x1] sm:$0x1]
    %v513 = vld [vmem:[%s6 + $0x1] sm:$0x1]
    %514 = vadd.xlane.f32.xlu0 %v510
    %v515 = vpop.xlane.xlu0 %514
    %516 = vadd.xlane.f32.xlu0 %v511
    %v517 = vpop.xlane.xlu0 %516
    %v518 = vmul.f32 %v510, %v510
    %v519 = vmul.f32 %v511, %v511
    %520 = vadd.xlane.f32.xlu0 %v518
    %v521 = vpop.xlane.xlu0 %520
    %522 = vadd.xlane.f32.xlu0 %v519
    %v523 = vpop.xlane.xlu0 %522
    %v524 = vmul.f32 %v515, 0.0078125
    %v525 = vmul.f32 %v517, 0.0078125
    %v526 = vmul.f32 %v521, 0.0078125
    %v527 = vmul.f32 %v523, 0.0078125
    %v528 = vmul.f32 %v524, %v524
    %v529 = vmul.f32 %v525, %v525
    %v530 = vsub.f32 %v526, %v528
    %v531 = vsub.f32 %v527, %v529
    %v532 = vsub.f32 %v510, %v524
    %v533 = vsub.f32 %v511, %v525
    %v534 = vadd.f32 %v530, 1e-05
    %v535 = vadd.f32 %v531, 1e-05
    %v536 = vrsqrt.pop %v534
    %v537 = vmul.f32 %v536, %v534
    %v538 = vmul.f32 %v537, %v536
    %v539 = vmul.f32 0.5, %v538
    %v540 = vsub.f32 1.5, %v539
    %v541 = vmul.f32 %v536, %v540
    %vm542 = vweird.f32 %v534
    %vm543 = vweird.f32 %v536
    %vm544 = vmor %vm542, %vm543
    %v545 = vsel %vm544, %v536, %v541
    %v546 = vrsqrt.pop %v535
    %v547 = vmul.f32 %v546, %v535
    %v548 = vmul.f32 %v547, %v546
    %v549 = vmul.f32 0.5, %v548
    %v550 = vsub.f32 1.5, %v549
    %v551 = vmul.f32 %v546, %v550
    %vm552 = vweird.f32 %v535
    %vm553 = vweird.f32 %v546
    %vm554 = vmor %vm552, %vm553
    %v555 = vsel %vm554, %v546, %v551
    %v556 = vmul.f32 %v532, %v545
    %v557 = vmul.f32 %v533, %v555
    %v558 = vperm.slane %v512, 0
    %v559 = vmul.f32 %v556, %v558
    %v560 = vmul.f32 %v557, %v558
    %v561 = vperm.slane %v513, 0
    %v562 = vadd.f32 %v559, %v561
    %v563 = vadd.f32 %v560, %v561
    %v564 = vmax.f32 %v562, 0.0
    %v565 = vmax.f32 %v563, 0.0
    %566 = vrot.lane.b32.xlu0 %v564, 17
    %v567 = vpop.permute.xlu0 %566
    %568 = vrot.lane.b32.xlu0 %v565, 17
    %v569 = vpop.permute.xlu0 %568
    %s570 = scalar_lea.vmem [#allocation5], 72
    %v571 = vld [vmem:[%s570] sm:$0xff]
    %v572 = vmul.f32 %v567, %v571
    %v573 = vmul.f32 %v569, %v571
    %574 = vrot.lane.b32.xlu0 %v564, 16
    %v575 = vpop.permute.xlu0 %574
    %576 = vrot.lane.b32.xlu0 %v565, 16
    %v577 = vpop.permute.xlu0 %576
    %s578 = scalar_lea.vmem [#allocation5], 80
    %v579 = vld [vmem:[%s578] sm:$0xff]
    %v580 = vmul.f32 %v575, %v579
    %v581 = vmul.f32 %v577, %v579
    %582 = vrot.lane.b32.xlu0 %v564, 15
    %v583 = vpop.permute.xlu0 %582
    %584 = vrot.lane.b32.xlu0 %v565, 15
    %v585 = vpop.permute.xlu0 %584
    %s586 = scalar_lea.vmem [#allocation5], 88
    %v587 = vld [vmem:[%s586] sm:$0xff]
    %v588 = vmul.f32 %v583, %v587
    %v589 = vmul.f32 %v585, %v587
    %590 = vrot.lane.b32.xlu0 %v564, 1
    %v591 = vpop.permute.xlu0 %590
    %592 = vrot.lane.b32.xlu0 %v565, 1
    %v593 = vpop.permute.xlu0 %592
    %s594 = scalar_lea.vmem [#allocation5], 96
    %v595 = vld [vmem:[%s594] sm:$0xff]
    %v596 = vmul.f32 %v591, %v595
    %v597 = vmul.f32 %v593, %v595
    %v598 = vadd.f32 %v572, %v596
    %v599 = vadd.f32 %v573, %v597
    %s600 = scalar_lea.vmem [#allocation5], 104
    %v601 = vld [vmem:[%s600] sm:$0xff]
    %v602 = vmul.f32 %v564, %v601
    %v603 = vmul.f32 %v565, %v601
    %v604 = vadd.f32 %v580, %v602
    %v605 = vadd.f32 %v581, %v603
    %606 = vrot.lane.b32.xlu0 %v564, 127
    %v607 = vpop.permute.xlu0 %606
    %608 = vrot.lane.b32.xlu0 %v565, 127
    %v609 = vpop.permute.xlu0 %608
    %s610 = scalar_lea.vmem [#allocation5], 112
    %v611 = vld [vmem:[%s610] sm:$0xff]
    %v612 = vmul.f32 %v607, %v611
    %v613 = vmul.f32 %v609, %v611
    %v614 = vadd.f32 %v588, %v612
    %v615 = vadd.f32 %v589, %v613
    %616 = vrot.lane.b32.xlu0 %v564, 113
    %v617 = vpop.permute.xlu0 %616
    %618 = vrot.lane.b32.xlu0 %v565, 113
    %v619 = vpop.permute.xlu0 %618
    %s620 = scalar_lea.vmem [#allocation5], 120
    %v621 = vld [vmem:[%s620] sm:$0xff]
    %v622 = vmul.f32 %v617, %v621
    %v623 = vmul.f32 %v619, %v621
    %v624 = vadd.f32 %v598, %v622
    %v625 = vadd.f32 %v599, %v623
    %626 = vrot.lane.b32.xlu0 %v564, 112
    %v627 = vpop.permute.xlu0 %626
    %628 = vrot.lane.b32.xlu0 %v565, 112
    %v629 = vpop.permute.xlu0 %628
    %s630 = scalar_lea.vmem [#allocation5], 128
    %v631 = vld [vmem:[%s630] sm:$0xff]
    %v632 = vmul.f32 %v627, %v631
    %v633 = vmul.f32 %v629, %v631
    %v634 = vadd.f32 %v604, %v632
    %v635 = vadd.f32 %v605, %v633
    %636 = vrot.lane.b32.xlu0 %v564, 111
    %v637 = vpop.permute.xlu0 %636
    %638 = vrot.lane.b32.xlu0 %v565, 111
    %v639 = vpop.permute.xlu0 %638
    %s640 = scalar_lea.vmem [#allocation5], 136
    %v641 = vld [vmem:[%s640] sm:$0xff]
    %v642 = vmul.f32 %v637, %v641
    %v643 = vmul.f32 %v639, %v641
    %v644 = vadd.f32 %v614, %v642
    %v645 = vadd.f32 %v615, %v643
    %v646 = vadd.f32 %v624, %v634
    %v647 = vadd.f32 %v625, %v635
    %v648 = vadd.f32 %v646, %v644
    %v649 = vadd.f32 %v647, %v645
    %s650 = scalar_lea.vmem %s8, 8
    %v651 = vld [vmem:[%s650] sm:$0xff]
    %v652 = vadd.f32 %v648, %v651
    %v653 = vadd.f32 %v649, %v651
    %v654 = vld [vmem:[%s9 + $0x1] sm:$0x1]
    %v655 = vld [vmem:[%s10 + $0x1] sm:$0x1]
    %656 = vadd.xlane.f32.xlu0 %v652
    %v657 = vpop.xlane.xlu0 %656
    %658 = vadd.xlane.f32.xlu0 %v653
    %v659 = vpop.xlane.xlu0 %658
    %v660 = vmul.f32 %v652, %v652
    %v661 = vmul.f32 %v653, %v653
    %662 = vadd.xlane.f32.xlu0 %v660
    %v663 = vpop.xlane.xlu0 %662
    %664 = vadd.xlane.f32.xlu0 %v661
    %v665 = vpop.xlane.xlu0 %664
    %v666 = vmul.f32 %v657, 0.0078125
    %v667 = vmul.f32 %v659, 0.0078125
    %v668 = vmul.f32 %v663, 0.0078125
    %v669 = vmul.f32 %v665, 0.0078125
    %v670 = vmul.f32 %v666, %v666
    %v671 = vmul.f32 %v667, %v667
    %v672 = vsub.f32 %v668, %v670
    %v673 = vsub.f32 %v669, %v671
    %v674 = vsub.f32 %v652, %v666
    %v675 = vsub.f32 %v653, %v667
    %v676 = vadd.f32 %v672, 1e-05
    %v677 = vadd.f32 %v673, 1e-05
    %v678 = vrsqrt.pop %v676
    %v679 = vmul.f32 %v678, %v676
    %v680 = vmul.f32 %v679, %v678
    %v681 = vmul.f32 0.5, %v680
    %v682 = vsub.f32 1.5, %v681
    %v683 = vmul.f32 %v678, %v682
    %vm684 = vweird.f32 %v676
    %vm685 = vweird.f32 %v678
    %vm686 = vmor %vm684, %vm685
    %v687 = vsel %vm686, %v678, %v683
    %v688 = vrsqrt.pop %v677
    %v689 = vmul.f32 %v688, %v677
    %v690 = vmul.f32 %v689, %v688
    %v691 = vmul.f32 0.5, %v690
    %v692 = vsub.f32 1.5, %v691
    %v693 = vmul.f32 %v688, %v692
    %vm694 = vweird.f32 %v677
    %vm695 = vweird.f32 %v688
    %vm696 = vmor %vm694, %vm695
    %v697 = vsel %vm696, %v688, %v693
    %v698 = vmul.f32 %v674, %v687
    %v699 = vmul.f32 %v675, %v697
    %v700 = vperm.slane %v654, 0
    %v701 = vmul.f32 %v698, %v700
    %v702 = vmul.f32 %v699, %v700
    %v703 = vperm.slane %v655, 0
    %v704 = vadd.f32 %v701, %v703
    %v705 = vadd.f32 %v702, %v703
    %v706 = vadd.f32 %v704, %v422
    %v707 = vadd.f32 %v705, %v423
    %v708 = vmax.f32 %v706, 0.0
    %v709 = vmax.f32 %v707, 0.0
    %710 = vrot.lane.b32.xlu0 %v708, 17
    %v711 = vpop.permute.xlu0 %710
    %712 = vrot.lane.b32.xlu0 %v709, 17
    %v713 = vpop.permute.xlu0 %712
    %s714 = scalar_lea.vmem [#allocation3], 144
    %v715 = vld [vmem:[%s714] sm:$0xff]
    %v716 = vmul.f32 %v711, %v715
    %v717 = vmul.f32 %v713, %v715
    %718 = vrot.lane.b32.xlu0 %v708, 16
    %v719 = vpop.permute.xlu0 %718
    %720 = vrot.lane.b32.xlu0 %v709, 16
    %v721 = vpop.permute.xlu0 %720
    %s722 = scalar_lea.vmem [#allocation3], 152
    %v723 = vld [vmem:[%s722] sm:$0xff]
    %v724 = vmul.f32 %v719, %v723
    %v725 = vmul.f32 %v721, %v723
    %726 = vrot.lane.b32.xlu0 %v708, 15
    %v727 = vpop.permute.xlu0 %726
    %728 = vrot.lane.b32.xlu0 %v709, 15
    %v729 = vpop.permute.xlu0 %728
    %s730 = scalar_lea.vmem [#allocation3], 160
    %v731 = vld [vmem:[%s730] sm:$0xff]
    %v732 = vmul.f32 %v727, %v731
    %v733 = vmul.f32 %v729, %v731
    %734 = vrot.lane.b32.xlu0 %v708, 1
    %v735 = vpop.permute.xlu0 %734
    %736 = vrot.lane.b32.xlu0 %v709, 1
    %v737 = vpop.permute.xlu0 %736
    %s738 = scalar_lea.vmem [#allocation3], 168
    %v739 = vld [vmem:[%s738] sm:$0xff]
    %v740 = vmul.f32 %v735, %v739
    %v741 = vmul.f32 %v737, %v739
    %v742 = vadd.f32 %v716, %v740
    %v743 = vadd.f32 %v717, %v741
    %s744 = scalar_lea.vmem [#allocation3], 176
    %v745 = vld [vmem:[%s744] sm:$0xff]
    %v746 = vmul.f32 %v708, %v745
    %v747 = vmul.f32 %v709, %v745
    %v748 = vadd.f32 %v724, %v746
    %v749 = vadd.f32 %v725, %v747
    %750 = vrot.lane.b32.xlu0 %v708, 127
    %v751 = vpop.permute.xlu0 %750
    %752 = vrot.lane.b32.xlu0 %v709, 127
    %v753 = vpop.permute.xlu0 %752
    %s754 = scalar_lea.vmem [#allocation3], 184
    %v755 = vld [vmem:[%s754] sm:$0xff]
    %v756 = vmul.f32 %v751, %v755
    %v757 = vmul.f32 %v753, %v755
    %v758 = vadd.f32 %v732, %v756
    %v759 = vadd.f32 %v733, %v757
    %760 = vrot.lane.b32.xlu0 %v708, 113
    %v761 = vpop.permute.xlu0 %760
    %762 = vrot.lane.b32.xlu0 %v709, 113
    %v763 = vpop.permute.xlu0 %762
    %s764 = scalar_lea.vmem [#allocation3], 192
    %v765 = vld [vmem:[%s764] sm:$0xff]
    %v766 = vmul.f32 %v761, %v765
    %v767 = vmul.f32 %v763, %v765
    %v768 = vadd.f32 %v742, %v766
    %v769 = vadd.f32 %v743, %v767
    %770 = vrot.lane.b32.xlu0 %v708, 112
    %v771 = vpop.permute.xlu0 %770
    %772 = vrot.lane.b32.xlu0 %v709, 112
    %v773 = vpop.permute.xlu0 %772
    %s774 = scalar_lea.vmem [#allocation3], 200
    %v775 = vld [vmem:[%s774] sm:$0xff]
    %v776 = vmul.f32 %v771, %v775
    %v777 = vmul.f32 %v773, %v775
    %v778 = vadd.f32 %v748, %v776
    %v779 = vadd.f32 %v749, %v777
    %780 = vrot.lane.b32.xlu0 %v708, 111
    %v781 = vpop.permute.xlu0 %780
    %782 = vrot.lane.b32.xlu0 %v709, 111
    %v783 = vpop.permute.xlu0 %782
    %s784 = scalar_lea.vmem [#allocation3], 208
    %v785 = vld [vmem:[%s784] sm:$0xff]
    %v786 = vmul.f32 %v781, %v785
    %v787 = vmul.f32 %v783, %v785
    %v788 = vadd.f32 %v758, %v786
    %v789 = vadd.f32 %v759, %v787
    %v790 = vadd.f32 %v768, %v778
    %v791 = vadd.f32 %v769, %v779
    %v792 = vadd.f32 %v790, %v788
    %v793 = vadd.f32 %v791, %v789
    %s794 = scalar_lea.vmem %s4, 16
    %v795 = vld [vmem:[%s794] sm:$0xff]
    %v796 = vadd.f32 %v792, %v795
    %v797 = vadd.f32 %v793, %v795
    %v798 = vld [vmem:[%s5 + $0x2] sm:$0x1]
    %v799 = vld [vmem:[%s6 + $0x2] sm:$0x1]
    %800 = vadd.xlane.f32.xlu0 %v796
    %v801 = vpop.xlane.xlu0 %800
    %802 = vadd.xlane.f32.xlu0 %v797
    %v803 = vpop.xlane.xlu0 %802
    %v804 = vmul.f32 %v796, %v796
    %v805 = vmul.f32 %v797, %v797
    %806 = vadd.xlane.f32.xlu0 %v804
    %v807 = vpop.xlane.xlu0 %806
    %808 = vadd.xlane.f32.xlu0 %v805
    %v809 = vpop.xlane.xlu0 %808
    %v810 = vmul.f32 %v801, 0.0078125
    %v811 = vmul.f32 %v803, 0.0078125
    %v812 = vmul.f32 %v807, 0.0078125
    %v813 = vmul.f32 %v809, 0.0078125
    %v814 = vmul.f32 %v810, %v810
    %v815 = vmul.f32 %v811, %v811
    %v816 = vsub.f32 %v812, %v814
    %v817 = vsub.f32 %v813, %v815
    %v818 = vsub.f32 %v796, %v810
    %v819 = vsub.f32 %v797, %v811
    %v820 = vadd.f32 %v816, 1e-05
    %v821 = vadd.f32 %v817, 1e-05
    %v822 = vrsqrt.pop %v820
    %v823 = vmul.f32 %v822, %v820
    %v824 = vmul.f32 %v823, %v822
    %v825 = vmul.f32 0.5, %v824
    %v826 = vsub.f32 1.5, %v825
    %v827 = vmul.f32 %v822, %v826
    %vm828 = vweird.f32 %v820
    %vm829 = vweird.f32 %v822
    %vm830 = vmor %vm828, %vm829
    %v831 = vsel %vm830, %v822, %v827
    %v832 = vrsqrt.pop %v821
    %v833 = vmul.f32 %v832, %v821
    %v834 = vmul.f32 %v833, %v832
    %v835 = vmul.f32 0.5, %v834
    %v836 = vsub.f32 1.5, %v835
    %v837 = vmul.f32 %v832, %v836
    %vm838 = vweird.f32 %v821
    %vm839 = vweird.f32 %v832
    %vm840 = vmor %vm838, %vm839
    %v841 = vsel %vm840, %v832, %v837
    %v842 = vmul.f32 %v818, %v831
    %v843 = vmul.f32 %v819, %v841
    %v844 = vperm.slane %v798, 0
    %v845 = vmul.f32 %v842, %v844
    %v846 = vmul.f32 %v843, %v844
    %v847 = vperm.slane %v799, 0
    %v848 = vadd.f32 %v845, %v847
    %v849 = vadd.f32 %v846, %v847
    %v850 = vmax.f32 %v848, 0.0
    %v851 = vmax.f32 %v849, 0.0
    %852 = vrot.lane.b32.xlu0 %v850, 17
    %v853 = vpop.permute.xlu0 %852
    %854 = vrot.lane.b32.xlu0 %v851, 17
    %v855 = vpop.permute.xlu0 %854
    %s856 = scalar_lea.vmem [#allocation5], 144
    %v857 = vld [vmem:[%s856] sm:$0xff]
    %v858 = vmul.f32 %v853, %v857
    %v859 = vmul.f32 %v855, %v857
    %860 = vrot.lane.b32.xlu0 %v850, 16
    %v861 = vpop.permute.xlu0 %860
    %862 = vrot.lane.b32.xlu0 %v851, 16
    %v863 = vpop.permute.xlu0 %862
    %s864 = scalar_lea.vmem [#allocation5], 152
    %v865 = vld [vmem:[%s864] sm:$0xff]
    %v866 = vmul.f32 %v861, %v865
    %v867 = vmul.f32 %v863, %v865
    %868 = vrot.lane.b32.xlu0 %v850, 15
    %v869 = vpop.permute.xlu0 %868
    %870 = vrot.lane.b32.xlu0 %v851, 15
    %v871 = vpop.permute.xlu0 %870
    %s872 = scalar_lea.vmem [#allocation5], 160
    %v873 = vld [vmem:[%s872] sm:$0xff]
    %v874 = vmul.f32 %v869, %v873
    %v875 = vmul.f32 %v871, %v873
    %876 = vrot.lane.b32.xlu0 %v850, 1
    %v877 = vpop.permute.xlu0 %876
    %878 = vrot.lane.b32.xlu0 %v851, 1
    %v879 = vpop.permute.xlu0 %878
    %s880 = scalar_lea.vmem [#allocation5], 168
    %v881 = vld [vmem:[%s880] sm:$0xff]
    %v882 = vmul.f32 %v877, %v881
    %v883 = vmul.f32 %v879, %v881
    %v884 = vadd.f32 %v858, %v882
    %v885 = vadd.f32 %v859, %v883
    %s886 = scalar_lea.vmem [#allocation5], 176
    %v887 = vld [vmem:[%s886] sm:$0xff]
    %v888 = vmul.f32 %v850, %v887
    %v889 = vmul.f32 %v851, %v887
    %v890 = vadd.f32 %v866, %v888
    %v891 = vadd.f32 %v867, %v889
    %892 = vrot.lane.b32.xlu0 %v850, 127
    %v893 = vpop.permute.xlu0 %892
    %894 = vrot.lane.b32.xlu0 %v851, 127
    %v895 = vpop.permute.xlu0 %894
    %s896 = scalar_lea.vmem [#allocation5], 184
    %v897 = vld [vmem:[%s896] sm:$0xff]
    %v898 = vmul.f32 %v893, %v897
    %v899 = vmul.f32 %v895, %v897
    %v900 = vadd.f32 %v874, %v898
    %v901 = vadd.f32 %v875, %v899
    %902 = vrot.lane.b32.xlu0 %v850, 113
    %v903 = vpop.permute.xlu0 %902
    %904 = vrot.lane.b32.xlu0 %v851, 113
    %v905 = vpop.permute.xlu0 %904
    %s906 = scalar_lea.vmem [#allocation5], 192
    %v907 = vld [vmem:[%s906] sm:$0xff]
    %v908 = vmul.f32 %v903, %v907
    %v909 = vmul.f32 %v905, %v907
    %v910 = vadd.f32 %v884, %v908
    %v911 = vadd.f32 %v885, %v909
    %912 = vrot.lane.b32.xlu0 %v850, 112
    %v913 = vpop.permute.xlu0 %912
    %914 = vrot.lane.b32.xlu0 %v851, 112
    %v915 = vpop.permute.xlu0 %914
    %s916 = scalar_lea.vmem [#allocation5], 200
    %v917 = vld [vmem:[%s916] sm:$0xff]
    %v918 = vmul.f32 %v913, %v917
    %v919 = vmul.f32 %v915, %v917
    %v920 = vadd.f32 %v890, %v918
    %v921 = vadd.f32 %v891, %v919
    %922 = vrot.lane.b32.xlu0 %v850, 111
    %v923 = vpop.permute.xlu0 %922
    %924 = vrot.lane.b32.xlu0 %v851, 111
    %v925 = vpop.permute.xlu0 %924
    %s926 = scalar_lea.vmem [#allocation5], 208
    %v927 = vld [vmem:[%s926] sm:$0xff]
    %v928 = vmul.f32 %v923, %v927
    %v929 = vmul.f32 %v925, %v927
    %v930 = vadd.f32 %v900, %v928
    %v931 = vadd.f32 %v901, %v929
    %v932 = vadd.f32 %v910, %v920
    %v933 = vadd.f32 %v911, %v921
    %v934 = vadd.f32 %v932, %v930
    %v935 = vadd.f32 %v933, %v931
    %s936 = scalar_lea.vmem %s8, 16
    %v937 = vld [vmem:[%s936] sm:$0xff]
    %v938 = vadd.f32 %v934, %v937
    %v939 = vadd.f32 %v935, %v937
    %v940 = vld [vmem:[%s9 + $0x2] sm:$0x1]
    %v941 = vld [vmem:[%s10 + $0x2] sm:$0x1]
    %942 = vadd.xlane.f32.xlu0 %v938
    %v943 = vpop.xlane.xlu0 %942
    %944 = vadd.xlane.f32.xlu0 %v939
    %v945 = vpop.xlane.xlu0 %944
    %v946 = vmul.f32 %v938, %v938
    %v947 = vmul.f32 %v939, %v939
    %948 = vadd.xlane.f32.xlu0 %v946
    %v949 = vpop.xlane.xlu0 %948
    %950 = vadd.xlane.f32.xlu0 %v947
    %v951 = vpop.xlane.xlu0 %950
    %v952 = vmul.f32 %v943, 0.0078125
    %v953 = vmul.f32 %v945, 0.0078125
    %v954 = vmul.f32 %v949, 0.0078125
    %v955 = vmul.f32 %v951, 0.0078125
    %v956 = vmul.f32 %v952, %v952
    %v957 = vmul.f32 %v953, %v953
    %v958 = vsub.f32 %v954, %v956
    %v959 = vsub.f32 %v955, %v957
    %v960 = vsub.f32 %v938, %v952
    %v961 = vsub.f32 %v939, %v953
    %v962 = vadd.f32 %v958, 1e-05
    %v963 = vadd.f32 %v959, 1e-05
    %v964 = vrsqrt.pop %v962
    %v965 = vmul.f32 %v964, %v962
    %v966 = vmul.f32 %v965, %v964
    %v967 = vmul.f32 0.5, %v966
    %v968 = vsub.f32 1.5, %v967
    %v969 = vmul.f32 %v964, %v968
    %vm970 = vweird.f32 %v962
    %vm971 = vweird.f32 %v964
    %vm972 = vmor %vm970, %vm971
    %v973 = vsel %vm972, %v964, %v969
    %v974 = vrsqrt.pop %v963
    %v975 = vmul.f32 %v974, %v963
    %v976 = vmul.f32 %v975, %v974
    %v977 = vmul.f32 0.5, %v976
    %v978 = vsub.f32 1.5, %v977
    %v979 = vmul.f32 %v974, %v978
    %vm980 = vweird.f32 %v963
    %vm981 = vweird.f32 %v974
    %vm982 = vmor %vm980, %vm981
    %v983 = vsel %vm982, %v974, %v979
    %v984 = vmul.f32 %v960, %v973
    %v985 = vmul.f32 %v961, %v983
    %v986 = vperm.slane %v940, 0
    %v987 = vmul.f32 %v984, %v986
    %v988 = vmul.f32 %v985, %v986
    %v989 = vperm.slane %v941, 0
    %v990 = vadd.f32 %v987, %v989
    %v991 = vadd.f32 %v988, %v989
    %v992 = vadd.f32 %v990, %v708
    %v993 = vadd.f32 %v991, %v709
    %v994 = vmax.f32 %v992, 0.0
    %v995 = vmax.f32 %v993, 0.0
    %996 = vrot.lane.b32.xlu0 %v994, 17
    %v997 = vpop.permute.xlu0 %996
    %998 = vrot.lane.b32.xlu0 %v995, 17
    %v999 = vpop.permute.xlu0 %998
    %s1000 = scalar_lea.vmem [#allocation3], 216
    %v1001 = vld [vmem:[%s1000] sm:$0xff]
    %v1002 = vmul.f32 %v997, %v1001
    %v1003 = vmul.f32 %v999, %v1001
    %1004 = vrot.lane.b32.xlu0 %v994, 16
    %v1005 = vpop.permute.xlu0 %1004
    %1006 = vrot.lane.b32.xlu0 %v995, 16
    %v1007 = vpop.permute.xlu0 %1006
    %s1008 = scalar_lea.vmem [#allocation3], 224
    %v1009 = vld [vmem:[%s1008] sm:$0xff]
    %v1010 = vmul.f32 %v1005, %v1009
    %v1011 = vmul.f32 %v1007, %v1009
    %1012 = vrot.lane.b32.xlu0 %v994, 15
    %v1013 = vpop.permute.xlu0 %1012
    %1014 = vrot.lane.b32.xlu0 %v995, 15
    %v1015 = vpop.permute.xlu0 %1014
    %s1016 = scalar_lea.vmem [#allocation3], 232
    %v1017 = vld [vmem:[%s1016] sm:$0xff]
    %v1018 = vmul.f32 %v1013, %v1017
    %v1019 = vmul.f32 %v1015, %v1017
    %1020 = vrot.lane.b32.xlu0 %v994, 1
    %v1021 = vpop.permute.xlu0 %1020
    %1022 = vrot.lane.b32.xlu0 %v995, 1
    %v1023 = vpop.permute.xlu0 %1022
    %s1024 = scalar_lea.vmem [#allocation3], 240
    %v1025 = vld [vmem:[%s1024] sm:$0xff]
    %v1026 = vmul.f32 %v1021, %v1025
    %v1027 = vmul.f32 %v1023, %v1025
    %v1028 = vadd.f32 %v1002, %v1026
    %v1029 = vadd.f32 %v1003, %v1027
    %s1030 = scalar_lea.vmem [#allocation3], 248
    %v1031 = vld [vmem:[%s1030] sm:$0xff]
    %v1032 = vmul.f32 %v994, %v1031
    %v1033 = vmul.f32 %v995, %v1031
    %v1034 = vadd.f32 %v1010, %v1032
    %v1035 = vadd.f32 %v1011, %v1033
    %1036 = vrot.lane.b32.xlu0 %v994, 127
    %v1037 = vpop.permute.xlu0 %1036
    %1038 = vrot.lane.b32.xlu0 %v995, 127
    %v1039 = vpop.permute.xlu0 %1038
    %s1040 = scalar_lea.vmem [#allocation3], 256
    %v1041 = vld [vmem:[%s1040] sm:$0xff]
    %v1042 = vmul.f32 %v1037, %v1041
    %v1043 = vmul.f32 %v1039, %v1041
    %v1044 = vadd.f32 %v1018, %v1042
    %v1045 = vadd.f32 %v1019, %v1043
    %1046 = vrot.lane.b32.xlu0 %v994, 113
    %v1047 = vpop.permute.xlu0 %1046
    %1048 = vrot.lane.b32.xlu0 %v995, 113
    %v1049 = vpop.permute.xlu0 %1048
    %s1050 = scalar_lea.vmem [#allocation3], 264
    %v1051 = vld [vmem:[%s1050] sm:$0xff]
    %v1052 = vmul.f32 %v1047, %v1051
    %v1053 = vmul.f32 %v1049, %v1051
    %v1054 = vadd.f32 %v1028, %v1052
    %v1055 = vadd.f32 %v1029, %v1053
    %1056 = vrot.lane.b32.xlu0 %v994, 112
    %v1057 = vpop.permute.xlu0 %1056
    %1058 = vrot.lane.b32.xlu0 %v995, 112
    %v1059 = vpop.permute.xlu0 %1058
    %s1060 = scalar_lea.vmem [#allocation3], 272
    %v1061 = vld [vmem:[%s1060] sm:$0xff]
    %v1062 = vmul.f32 %v1057, %v1061
    %v1063 = vmul.f32 %v1059, %v1061
    %v1064 = vadd.f32 %v1034, %v1062
    %v1065 = vadd.f32 %v1035, %v1063
    %1066 = vrot.lane.b32.xlu0 %v994, 111
    %v1067 = vpop.permute.xlu0 %1066
    %1068 = vrot.lane.b32.xlu0 %v995, 111
    %v1069 = vpop.permute.xlu0 %1068
    %s1070 = scalar_lea.vmem [#allocation3], 280
    %v1071 = vld [vmem:[%s1070] sm:$0xff]
    %v1072 = vmul.f32 %v1067, %v1071
    %v1073 = vmul.f32 %v1069, %v1071
    %v1074 = vadd.f32 %v1044, %v1072
    %v1075 = vadd.f32 %v1045, %v1073
    %v1076 = vadd.f32 %v1054, %v1064
    %v1077 = vadd.f32 %v1055, %v1065
    %v1078 = vadd.f32 %v1076, %v1074
    %v1079 = vadd.f32 %v1077, %v1075
    %s1080 = scalar_lea.vmem %s4, 24
    %v1081 = vld [vmem:[%s1080] sm:$0xff]
    %v1082 = vadd.f32 %v1078, %v1081
    %v1083 = vadd.f32 %v1079, %v1081
    %v1084 = vld [vmem:[%s5 + $0x3] sm:$0x1]
    %v1085 = vld [vmem:[%s6 + $0x3] sm:$0x1]
    %1086 = vadd.xlane.f32.xlu0 %v1082
    %v1087 = vpop.xlane.xlu0 %1086
    %1088 = vadd.xlane.f32.xlu0 %v1083
    %v1089 = vpop.xlane.xlu0 %1088
    %v1090 = vmul.f32 %v1082, %v1082
    %v1091 = vmul.f32 %v1083, %v1083
    %1092 = vadd.xlane.f32.xlu0 %v1090
    %v1093 = vpop.xlane.xlu0 %1092
    %1094 = vadd.xlane.f32.xlu0 %v1091
    %v1095 = vpop.xlane.xlu0 %1094
    %v1096 = vmul.f32 %v1087, 0.0078125
    %v1097 = vmul.f32 %v1089, 0.0078125
    %v1098 = vmul.f32 %v1093, 0.0078125
    %v1099 = vmul.f32 %v1095, 0.0078125
    %v1100 = vmul.f32 %v1096, %v1096
    %v1101 = vmul.f32 %v1097, %v1097
    %v1102 = vsub.f32 %v1098, %v1100
    %v1103 = vsub.f32 %v1099, %v1101
    %v1104 = vsub.f32 %v1082, %v1096
    %v1105 = vsub.f32 %v1083, %v1097
    %v1106 = vadd.f32 %v1102, 1e-05
    %v1107 = vadd.f32 %v1103, 1e-05
    %v1108 = vrsqrt.pop %v1106
    %v1109 = vmul.f32 %v1108, %v1106
    %v1110 = vmul.f32 %v1109, %v1108
    %v1111 = vmul.f32 0.5, %v1110
    %v1112 = vsub.f32 1.5, %v1111
    %v1113 = vmul.f32 %v1108, %v1112
    %vm1114 = vweird.f32 %v1106
    %vm1115 = vweird.f32 %v1108
    %vm1116 = vmor %vm1114, %vm1115
    %v1117 = vsel %vm1116, %v1108, %v1113
    %v1118 = vrsqrt.pop %v1107
    %v1119 = vmul.f32 %v1118, %v1107
    %v1120 = vmul.f32 %v1119, %v1118
    %v1121 = vmul.f32 0.5, %v1120
    %v1122 = vsub.f32 1.5, %v1121
    %v1123 = vmul.f32 %v1118, %v1122
    %vm1124 = vweird.f32 %v1107
    %vm1125 = vweird.f32 %v1118
    %vm1126 = vmor %vm1124, %vm1125
    %v1127 = vsel %vm1126, %v1118, %v1123
    %v1128 = vmul.f32 %v1104, %v1117
    %v1129 = vmul.f32 %v1105, %v1127
    %v1130 = vperm.slane %v1084, 0
    %v1131 = vmul.f32 %v1128, %v1130
    %v1132 = vmul.f32 %v1129, %v1130
    %v1133 = vperm.slane %v1085, 0
    %v1134 = vadd.f32 %v1131, %v1133
    %v1135 = vadd.f32 %v1132, %v1133
    %v1136 = vmax.f32 %v1134, 0.0
    %v1137 = vmax.f32 %v1135, 0.0
    %1138 = vrot.lane.b32.xlu0 %v1136, 17
    %v1139 = vpop.permute.xlu0 %1138
    %1140 = vrot.lane.b32.xlu0 %v1137, 17
    %v1141 = vpop.permute.xlu0 %1140
    %s1142 = scalar_lea.vmem [#allocation5], 216
    %v1143 = vld [vmem:[%s1142] sm:$0xff]
    %v1144 = vmul.f32 %v1139, %v1143
    %v1145 = vmul.f32 %v1141, %v1143
    %1146 = vrot.lane.b32.xlu0 %v1136, 16
    %v1147 = vpop.permute.xlu0 %1146
    %1148 = vrot.lane.b32.xlu0 %v1137, 16
    %v1149 = vpop.permute.xlu0 %1148
    %s1150 = scalar_lea.vmem [#allocation5], 224
    %v1151 = vld [vmem:[%s1150] sm:$0xff]
    %v1152 = vmul.f32 %v1147, %v1151
    %v1153 = vmul.f32 %v1149, %v1151
    %1154 = vrot.lane.b32.xlu0 %v1136, 15
    %v1155 = vpop.permute.xlu0 %1154
    %1156 = vrot.lane.b32.xlu0 %v1137, 15
    %v1157 = vpop.permute.xlu0 %1156
    %s1158 = scalar_lea.vmem [#allocation5], 232
    %v1159 = vld [vmem:[%s1158] sm:$0xff]
    %v1160 = vmul.f32 %v1155, %v1159
    %v1161 = vmul.f32 %v1157, %v1159
    %1162 = vrot.lane.b32.xlu0 %v1136, 1
    %v1163 = vpop.permute.xlu0 %1162
    %1164 = vrot.lane.b32.xlu0 %v1137, 1
    %v1165 = vpop.permute.xlu0 %1164
    %s1166 = scalar_lea.vmem [#allocation5], 240
    %v1167 = vld [vmem:[%s1166] sm:$0xff]
    %v1168 = vmul.f32 %v1163, %v1167
    %v1169 = vmul.f32 %v1165, %v1167
    %v1170 = vadd.f32 %v1144, %v1168
    %v1171 = vadd.f32 %v1145, %v1169
    %s1172 = scalar_lea.vmem [#allocation5], 248
    %v1173 = vld [vmem:[%s1172] sm:$0xff]
    %v1174 = vmul.f32 %v1136, %v1173
    %v1175 = vmul.f32 %v1137, %v1173
    %v1176 = vadd.f32 %v1152, %v1174
    %v1177 = vadd.f32 %v1153, %v1175
    %1178 = vrot.lane.b32.xlu0 %v1136, 127
    %v1179 = vpop.permute.xlu0 %1178
    %1180 = vrot.lane.b32.xlu0 %v1137, 127
    %v1181 = vpop.permute.xlu0 %1180
    %s1182 = scalar_lea.vmem [#allocation5], 256
    %v1183 = vld [vmem:[%s1182] sm:$0xff]
    %v1184 = vmul.f32 %v1179, %v1183
    %v1185 = vmul.f32 %v1181, %v1183
    %v1186 = vadd.f32 %v1160, %v1184
    %v1187 = vadd.f32 %v1161, %v1185
    %1188 = vrot.lane.b32.xlu0 %v1136, 113
    %v1189 = vpop.permute.xlu0 %1188
    %1190 = vrot.lane.b32.xlu0 %v1137, 113
    %v1191 = vpop.permute.xlu0 %1190
    %s1192 = scalar_lea.vmem [#allocation5], 264
    %v1193 = vld [vmem:[%s1192] sm:$0xff]
    %v1194 = vmul.f32 %v1189, %v1193
    %v1195 = vmul.f32 %v1191, %v1193
    %v1196 = vadd.f32 %v1170, %v1194
    %v1197 = vadd.f32 %v1171, %v1195
    %1198 = vrot.lane.b32.xlu0 %v1136, 112
    %v1199 = vpop.permute.xlu0 %1198
    %1200 = vrot.lane.b32.xlu0 %v1137, 112
    %v1201 = vpop.permute.xlu0 %1200
    %s1202 = scalar_lea.vmem [#allocation5], 272
    %v1203 = vld [vmem:[%s1202] sm:$0xff]
    %v1204 = vmul.f32 %v1199, %v1203
    %v1205 = vmul.f32 %v1201, %v1203
    %v1206 = vadd.f32 %v1176, %v1204
    %v1207 = vadd.f32 %v1177, %v1205
    %1208 = vrot.lane.b32.xlu0 %v1136, 111
    %v1209 = vpop.permute.xlu0 %1208
    %1210 = vrot.lane.b32.xlu0 %v1137, 111
    %v1211 = vpop.permute.xlu0 %1210
    %s1212 = scalar_lea.vmem [#allocation5], 280
    %v1213 = vld [vmem:[%s1212] sm:$0xff]
    %v1214 = vmul.f32 %v1209, %v1213
    %v1215 = vmul.f32 %v1211, %v1213
    %v1216 = vadd.f32 %v1186, %v1214
    %v1217 = vadd.f32 %v1187, %v1215
    %v1218 = vadd.f32 %v1196, %v1206
    %v1219 = vadd.f32 %v1197, %v1207
    %v1220 = vadd.f32 %v1218, %v1216
    %v1221 = vadd.f32 %v1219, %v1217
    %s1222 = scalar_lea.vmem %s8, 24
    %v1223 = vld [vmem:[%s1222] sm:$0xff]
    %v1224 = vadd.f32 %v1220, %v1223
    %v1225 = vadd.f32 %v1221, %v1223
    %v1226 = vld [vmem:[%s9 + $0x3] sm:$0x1]
    %v1227 = vld [vmem:[%s10 + $0x3] sm:$0x1]
    %1228 = vadd.xlane.f32.xlu0 %v1224
    %v1229 = vpop.xlane.xlu0 %1228
    %1230 = vadd.xlane.f32.xlu0 %v1225
    %v1231 = vpop.xlane.xlu0 %1230
    %v1232 = vmul.f32 %v1224, %v1224
    %v1233 = vmul.f32 %v1225, %v1225
    %1234 = vadd.xlane.f32.xlu0 %v1232
    %v1235 = vpop.xlane.xlu0 %1234
    %1236 = vadd.xlane.f32.xlu0 %v1233
    %v1237 = vpop.xlane.xlu0 %1236
    %v1238 = vmul.f32 %v1229, 0.0078125
    %v1239 = vmul.f32 %v1231, 0.0078125
    %v1240 = vmul.f32 %v1235, 0.0078125
    %v1241 = vmul.f32 %v1237, 0.0078125
    %v1242 = vmul.f32 %v1238, %v1238
    %v1243 = vmul.f32 %v1239, %v1239
    %v1244 = vsub.f32 %v1240, %v1242
    %v1245 = vsub.f32 %v1241, %v1243
    %v1246 = vsub.f32 %v1224, %v1238
    %v1247 = vsub.f32 %v1225, %v1239
    %v1248 = vadd.f32 %v1244, 1e-05
    %v1249 = vadd.f32 %v1245, 1e-05
    %v1250 = vrsqrt.pop %v1248
    %v1251 = vmul.f32 %v1250, %v1248
    %v1252 = vmul.f32 %v1251, %v1250
    %v1253 = vmul.f32 0.5, %v1252
    %v1254 = vsub.f32 1.5, %v1253
    %v1255 = vmul.f32 %v1250, %v1254
    %vm1256 = vweird.f32 %v1248
    %vm1257 = vweird.f32 %v1250
    %vm1258 = vmor %vm1256, %vm1257
    %v1259 = vsel %vm1258, %v1250, %v1255
    %v1260 = vrsqrt.pop %v1249
    %v1261 = vmul.f32 %v1260, %v1249
    %v1262 = vmul.f32 %v1261, %v1260
    %v1263 = vmul.f32 0.5, %v1262
    %v1264 = vsub.f32 1.5, %v1263
    %v1265 = vmul.f32 %v1260, %v1264
    %vm1266 = vweird.f32 %v1249
    %vm1267 = vweird.f32 %v1260
    %vm1268 = vmor %vm1266, %vm1267
    %v1269 = vsel %vm1268, %v1260, %v1265
    %v1270 = vmul.f32 %v1246, %v1259
    %v1271 = vmul.f32 %v1247, %v1269
    %v1272 = vperm.slane %v1226, 0
    %v1273 = vmul.f32 %v1270, %v1272
    %v1274 = vmul.f32 %v1271, %v1272
    %v1275 = vperm.slane %v1227, 0
    %v1276 = vadd.f32 %v1273, %v1275
    %v1277 = vadd.f32 %v1274, %v1275
    %v1278 = vadd.f32 %v1276, %v994
    %v1279 = vadd.f32 %v1277, %v995
    %v1280 = vmax.f32 %v1278, 0.0
    %v1281 = vmax.f32 %v1279, 0.0
    %v1282 = vld [vmem:[%s11] sm:$0xff]
    %v1283 = vld [vmem:[%s11 + $0x8] sm:$0xff]
    %v1284 = vld [vmem:[%s11 + $0x10] sm:$0xff]
    %v1285 = vld [vmem:[%s11 + $0x18] sm:$0xff]
    %v1286 = vld [vmem:[%s11 + $0x20] sm:$0xff]
    %v1287 = vld [vmem:[%s11 + $0x28] sm:$0xff]
    %v1288 = vld [vmem:[%s11 + $0x30] sm:$0xff]
    %v1289 = vld [vmem:[%s11 + $0x38] sm:$0xff]
    %v1290 = vld [vmem:[%s11 + $0x40] sm:$0xff]
    %v1291 = vld [vmem:[%s11 + $0x48] sm:$0xff]
    %v1292 = vld [vmem:[%s11 + $0x50] sm:$0xff]
    %v1293 = vld [vmem:[%s11 + $0x58] sm:$0xff]
    %v1294 = vld [vmem:[%s11 + $0x60] sm:$0xff]
    %v1295 = vld [vmem:[%s11 + $0x68] sm:$0xff]
    %v1296 = vld [vmem:[%s11 + $0x70] sm:$0xff]
    %v1297 = vld [vmem:[%s11 + $0x78] sm:$0xff]
    %v1298 = vld [vmem:[%s12] sm:$0x1]
    %v1300 = vperm.slane %v1298, 0
    %1302 = vmatpush.msra.mxu0 %v1297
    %1303 = vmatpush.msra.mxu0 %v1296
    %1304 = vmatpush.msra.mxu0 %v1295
    %1305 = vmatpush.msra.mxu0 %v1294
    %1306 = vmatpush.msra.mxu0 %v1293
    %1307 = vmatpush.msra.mxu0 %v1292
    %1308 = vmatpush.msra.mxu0 %v1291
    %1309 = vmatpush.msra.mxu0 %v1290
    %1310 = vmatpush.msra.mxu0 %v1289
    %1311 = vmatpush.msra.mxu0 %v1288
    %1312 = vmatpush.msra.mxu0 %v1287
    %1313 = vmatpush.msra.mxu0 %v1286
    %1314 = vmatpush.msra.mxu0 %v1285
    %1315 = vmatpush.msra.mxu0 %v1284
    %1316 = vmatpush.msra.mxu0 %v1283
    %1317 = vmatpush.msra.mxu0 %v1282
    %1318 = vmatmul.f32.gmra.mxu0 %v1280
    %v1319 = vpop.f32.mrf.mxu0
    %v1320 = vadd.f32 %v1300, %v1319
    %1321 = vmatmul.f32.gmra.mxu0 %v1281
    %v1322 = vpop.f32.mrf.mxu0
    %v1323 = vadd.f32 %v1300, %v1322
    %1324 = vdwg.mxu0
    %v1325 = vmax.f32 %v1320, 0.0
    %v1326 = vmax.f32 %v1323, 0.0
    %v1327 = vld [vmem:[%s13] sm:$0x1]
    %v1329 = vperm.slane %v1327, 0
    %v1331 = vmul.f32 %v1325, %v1329
    %v1332 = vmul.f32 %v1326, %v1329
    %vm1333 = vcmask 261120
    %v1334 = vsel %vm1333, %v1331, 0.0
    %1335 = vadd.xlane.f32.xlu0 %v1334
    %v1336 = vpop.xlane.xlu0 %1335
    %v1337 = vsel %vm1333, %v1332, 0.0
    %1338 = vadd.xlane.f32.xlu0 %v1337
    %v1339 = vpop.xlane.xlu0 %1338
    %v1340 = vld [vmem:[#allocation2] sm:$0x1]
    %v1342 = vperm.slane %v1340, 0
    %v1344 = vadd.f32 %v1336, %v1342
    %v1345 = vadd.f32 %v1339, %v1342
    %v1346 = vmax.f32 %v1344, 0.0
    %v1347 = vmax.f32 %v1345, 0.0
    %v1348 = vsub.f32 0.0, %v1346
    %v1349 = vsub.f32 0.0, %v1347
    %v1350 = vmul.f32 %v1348, 1.442695
    %v1351 = vpow.pop %v1350
    %v1352 = vmul.f32 %v1349, 1.442695
    %v1353 = vpow.pop %v1352
    %v1354 = vadd.f32 %v1351, 1.0
    %v1355 = vadd.f32 %v1353, 1.0
    %v1356 = vrcp.pop %v1354
    %v1357 = vmul.f32 %v1354, %v1356
    %v1358 = vsub.f32 1.0, %v1357
    %v1359 = vmul.f32 %v1356, %v1358
    %v1360 = vadd.f32 %v1356, %v1359
    %vm1361 = vweird.f32 %v1354
    %vm1362 = vweird.f32 %v1356
    %vm1363 = vmor %vm1361, %vm1362
    %v1364 = vsel %vm1363, %v1356, %v1360
    %v1365 = vand.u32 2147483647, %v1354
    %vm1366 = vcmp.eq.f32.partialorder %v1365, 8.507059e+37
    %v1367 = vand.u32 %v1354, 2147483648
    %v1368 = vor.u32 1.1754944e-38, %v1367
    %v1369 = vsel %vm1366, %v1368, %v1364
    %v1370 = vrcp.pop %v1355
    %v1371 = vmul.f32 %v1355, %v1370
    %v1372 = vsub.f32 1.0, %v1371
    %v1373 = vmul.f32 %v1370, %v1372
    %v1374 = vadd.f32 %v1370, %v1373
    %vm1375 = vweird.f32 %v1355
    %vm1376 = vweird.f32 %v1370
    %vm1377 = vmor %vm1375, %vm1376
    %v1378 = vsel %vm1377, %v1370, %v1374
    %v1379 = vand.u32 2147483647, %v1355
    %vm1380 = vcmp.eq.f32.partialorder %v1379, 8.507059e+37
    %v1381 = vand.u32 %v1355, 2147483648
    %v1382 = vor.u32 1.1754944e-38, %v1381
    %v1383 = vsel %vm1380, %v1382, %v1378
    %1385 = vset.pattern.permute.xlu0 0
    %1386 = vperm.xlu0 %1385, %v1369
    %v1387 = vpop.permute.xlu0 %1386
    %1390 = vset.pattern.permute.xlu0 0
    %1391 = vperm.xlu0 %1390, %v1383
    %v1392 = vpop.permute.xlu0 %1391
    %1394 = vst [vmem:[%s15] sm:$0xff] %v1387
    %1395 = vst [vmem:[%s15 + $0x8] sm:$0xff] %v1392
    // Predicated region
    $region70: #{_router_forward.1} parent=1 // pred_check
      _
    $region71: #{_router_forward.1} parent=1 // pred_check_branch
      %1397 = sbr.rel (0) target = $region73
    $region72: #{_router_forward.1} parent=1 // pred_region
      _
    $region73: #{_router_forward.1} parent=1 // pred_fallthru
      _
    // Predicated region
    $region74: #{_router_forward.1} parent=1 // pred_check
      _
    $region75: #{_router_forward.1} parent=1 // pred_check_branch
      %1399 = sbr.rel (0) target = $region77
    $region76: #{_router_forward.1} parent=1 // pred_region
      _
    $region77: #{_router_forward.1} parent=1 // pred_fallthru
      _
    %1400 = vsyncpa [#allocation4], 1
    %1401 = vsyncpa [#allocation6], 1

</llo_original>
